<compile_context>
chip_gen: v6e
topology: v6e:2x2x1
jax: 0.10.0
libtpu: 0.0.40
codegen_flags: <defaults>
</compile_context>

<pallas_src>
import math

import jax
import jax.numpy as jnp
from jax import lax
from jax.experimental import pallas as pl
from jax.experimental.pallas import tpu as pltpu


_VMEM_LIMIT_BYTES = 48 * 1024 * 1024  # <= physical VMEM on v5e/v6e (128 MiB) and v7x (64 MiB)


def _round_up(x, m):
    return ((x + m - 1) // m) * m


def _sigmoid(x):
    # sigmoid(x) = 0.5*(tanh(x/2)+1): single EUP op per element instead of exp+reciprocal.
    return 0.5 * (jnp.tanh(0.5 * x) + 1.0)


def _pad_gate_cols(mat_t, h, hp):
    """(rows, 4H) with PyTorch gate order i,f,g,o -> (rows, 4*Hp); each gate block starts
    on a 128-aligned column, zero-padded."""
    rows = mat_t.shape[0]
    m4 = mat_t.reshape(rows, 4, h)
    m4 = jnp.pad(m4, ((0, 0), (0, 0), (0, hp - h)))
    return m4.reshape(rows, 4 * hp)


def _pack_lstm_params(w_ih, w_hh, b_ih, b_hh, hp):
    """PyTorch LSTM params -> transposed, gate-padded layouts for the kernels."""
    h = w_hh.shape[1]
    wih_p = _pad_gate_cols(jnp.transpose(w_ih), h, hp)                 # (in_dim, 4*Hp)
    whh_p = _pad_gate_cols(jnp.transpose(w_hh), h, hp)                 # (H, 4*Hp)
    whh_p = jnp.pad(whh_p, ((0, hp - h), (0, 0)))                      # (Hp, 4*Hp)
    bias_p = _pad_gate_cols((b_ih + b_hh).reshape(1, 4 * h), h, hp)    # (1, 4*Hp)
    return wih_p, whh_p, bias_p


# ------------------------------ Encoder ------------------------------

def _make_encoder_kernel(tc, n_full_chunks, tail_steps, hp, compute_dtype):
    unroll_full = math.gcd(tc, 8)
    unroll_tail = math.gcd(max(tail_steps, 1), 8)

    def kernel(gx_ref, whh_ref, h_out_ref, c_out_ref, h_scr, c_scr):
        chunk = pl.program_id(0)

        @pl.when(chunk == 0)
        def _init():
            h_scr[...] = jnp.zeros_like(h_scr)
            c_scr[...] = jnp.zeros_like(c_scr)

        def step(t, carry):
            # Only the unavoidable serial work: h_{t-1} @ W_hh^T + precomputed G_x[t].
            gates = gx_ref[t].astype(jnp.float32) + jnp.dot(
                h_scr[...].astype(compute_dtype), whh_ref[...],
                preferred_element_type=jnp.float32)
            # 128-lane-aligned gate slices (gate order i, f, g, o).
            i_g = _sigmoid(gates[:, 0 * hp:1 * hp])
            f_g = _sigmoid(gates[:, 1 * hp:2 * hp])
            g_g = jnp.tanh(gates[:, 2 * hp:3 * hp])
            o_g = _sigmoid(gates[:, 3 * hp:4 * hp])
            c_new = f_g * c_scr[...] + i_g * g_g
            c_scr[...] = c_new
            h_scr[...] = o_g * jnp.tanh(c_new)
            return carry

        if tail_steps == 0:
            lax.fori_loop(0, tc, step, 0, unroll=unroll_full)
        else:
            # Full chunks run unmasked; only the final (partial) chunk runs the short
            # tail loop -> no per-step validity selects in the steady state.
            @pl.when(chunk < n_full_chunks)
            def _full():
                lax.fori_loop(0, tc, step, 0, unroll=unroll_full)

            @pl.when(chunk >= n_full_chunks)
            def _tail():
                lax.fori_loop(0, tail_steps, step, 0, unroll=unroll_tail)

        # Output blocks are resident across the grid (constant index_map); written once.
        @pl.when(chunk == pl.num_programs(0) - 1)
        def _finalize():
            h_out_ref[...] = h_scr[...]
            c_out_ref[...] = c_scr[...]

    return kernel


def encoder_forward_padded(xs, w_ih, w_hh, b_ih, b_hh, *, time_chunk=None,
                           compute_dtype=jnp.bfloat16):
    """Encoder LSTM. Returns (h, c), each (Bp, Hp) f32 with Bp = round_up(B, 8),
    Hp = round_up(H, 128); rows [B:] / columns [H:] are padding (columns stay zero)."""
    t_total, b, i_dim = xs.shape
    h_dim = w_hh.shape[1]
    hp = _round_up(h_dim, 128)
    bp = _round_up(b, 8)
    g4 = 4 * hp
    cdt = jnp.dtype(compute_dtype)

    wih_p, whh_p, bias_p = _pack_lstm_params(w_ih, w_hh, b_ih, b_hh, hp)
    whh_c = whh_p.astype(cdt)

    xs_p = jnp.pad(xs, ((0, 0), (0, bp - b), (0, 0)))
    # Hoisted input projection with the bias folded in (one big MXU matmul in XLA),
    # streamed to the kernel in the compute dtype (bf16 halves HBM->VMEM traffic).
    gx = jnp.dot(xs_p.reshape(t_total * bp, i_dim).astype(cdt), wih_p.astype(cdt),
                 preferred_element_type=jnp.float32) + bias_p
    gx = gx.reshape(t_total, bp, g4).astype(cdt)

    if time_chunk is None:
        # Size the streamed gx chunk against a per-buffer VMEM budget (double-buffered),
        # rounded to a multiple of 8 so the unrolled loop divides evenly.
        bytes_per_step = bp * g4 * cdt.itemsize
        time_chunk = max(8, min(256, ((8 * 1024 * 1024) // max(bytes_per_step, 1)) // 8 * 8))
    tc = int(min(t_total, time_chunk))
    n_chunks = pl.cdiv(t_total, tc)
    t_pad = n_chunks * tc
    if t_pad != t_total:
        gx = jnp.pad(gx, ((0, t_pad - t_total), (0, 0), (0, 0)))
    n_full = t_total // tc
    tail = t_total % tc

    grid_spec = pltpu.PrefetchScalarGridSpec(
        num_scalar_prefetch=0,
        grid=(n_chunks,),
        in_specs=[
            pl.BlockSpec((tc, bp, g4), lambda c: (c, 0, 0)),   # streamed G_x chunk
            # TODO(synk): single-buffer this grid-invariant block (pl.Buffered(1))
            # for production v7x VMEM budgets.
            pl.BlockSpec((hp, g4), lambda c: (0, 0)),          # W_hh^T (resident)
        ],
        out_specs=[
            pl.BlockSpec((bp, hp), lambda c: (0, 0)),          # h (lane/sublane dense)
            pl.BlockSpec((bp, hp), lambda c: (0, 0)),          # c
        ],
        scratch_shapes=[
            pltpu.VMEM((bp, hp), jnp.float32),                 # h carry (f32)
            pltpu.VMEM((bp, hp), jnp.float32),                 # c carry (f32)
        ],
    )

    h_pad, c_pad = pl.pallas_call(
        _make_encoder_kernel(tc, n_full, tail, hp, cdt),
        out_shape=(jax.ShapeDtypeStruct((bp, hp), jnp.float32),
                   jax.ShapeDtypeStruct((bp, hp), jnp.float32)),
        grid_spec=grid_spec,
        compiler_params=pltpu.CompilerParams(
            dimension_semantics=("arbitrary",),                # serial over time chunks
            vmem_limit_bytes=_VMEM_LIMIT_BYTES),
    )(gx, whh_c)
    return h_pad, c_pad


# ------------------------------ Decoder ------------------------------

def _pack_decoder_params(w_ih_d, w_hh_d, b_ih_d, b_hh_d, w_fc, b_fc, yp, hp,
                         compute_dtype):
    h = w_hh_d.shape[1]
    y_dim = w_ih_d.shape[1]
    wih_p, whh_p, bias_p = _pack_lstm_params(w_ih_d, w_hh_d, b_ih_d, b_hh_d, hp)
    wih_p = jnp.pad(wih_p, ((0, yp - y_dim), (0, 0)))                         # (Yp, 4*Hp)
    w_yh = jnp.concatenate([wih_p, whh_p], axis=0).astype(compute_dtype)      # (Yp+Hp, 4*Hp)
    wfc_p = jnp.pad(jnp.transpose(w_fc),
                    ((0, hp - h), (0, yp - y_dim))).astype(compute_dtype)     # (Hp, Yp)
    bfc_p = jnp.pad(b_fc.reshape(1, y_dim), ((0, 0), (0, yp - y_dim)))        # (1, Yp) f32
    return w_yh, bias_p, wfc_p, bfc_p


def _make_decoder_kernel(tc, yp, hp, compute_dtype):
    g4 = 4 * hp
    unroll = math.gcd(tc, 8)

    def kernel(tf_ref, ys_ref, h0_ref, c0_ref, wyh_ref, b_ref, wfc_ref, bfc_ref,
               out_ref, c_scr, yh_scr, hist_scr, pred_scr):
        chunk = pl.program_id(0)
        bp = yh_scr.shape[0]

        @pl.when(chunk == 0)
        def _init():
            c_scr[...] = c0_ref[...]
            yh_scr[:, yp:] = h0_ref[...]
            # The y half of yh_scr is written by the first step's teacher select and
            # pred_scr is always written (under the tf gate) before it is read.

        # Hoisted broadcasts (JAX does not CSE broadcast_in_dim inside the loop).
        bias = jnp.broadcast_to(b_ref[...], (bp, g4))
        bfc_b = jnp.broadcast_to(bfc_ref[...], (bp, yp))

        def step(s, carry):
            gs = chunk * tc + s                           # global decode-step index
            teacher = tf_ref[gs] == 1
            y_in = jnp.where(teacher, ys_ref[s], pred_scr[...])
            yh_scr[:, :yp] = y_in
            # Single fused matmul on the [y | h] slab (one MXU push per step).
            gates = jnp.dot(yh_scr[...].astype(compute_dtype), wyh_ref[...],
                            preferred_element_type=jnp.float32) + bias
            i_g = _sigmoid(gates[:, 0 * hp:1 * hp])
            f_g = _sigmoid(gates[:, 1 * hp:2 * hp])
            g_g = jnp.tanh(gates[:, 2 * hp:3 * hp])
            o_g = _sigmoid(gates[:, 3 * hp:4 * hp])
            c_new = f_g * c_scr[...] + i_g * g_g
            h_new = o_g * jnp.tanh(c_new)
            c_scr[...] = c_new
            yh_scr[:, yp:] = h_new
            hist_scr[s] = h_new

            # The per-step readout is only needed as the next autoregressive input when
            # the NEXT step is not teacher forced; outputs come from the batched FC below.
            @pl.when(tf_ref[gs + 1] == 0)
            def _need_pred():
                pred_scr[...] = jnp.dot(h_new.astype(compute_dtype), wfc_ref[...],
                                        preferred_element_type=jnp.float32) + bfc_b
            return carry

        lax.fori_loop(0, tc, step, 0, unroll=unroll)

        # Batched FC readout: one (Tc*Bp, Hp) x (Hp, Yp) MXU matmul per chunk, written as
        # a lane-dense (Tc*Bp, Yp) slab (unmasked stores).
        hs = hist_scr[...].reshape(tc * bp, hp).astype(compute_dtype)
        preds = jnp.dot(hs, wfc_ref[...], preferred_element_type=jnp.float32)
        out_ref[...] = preds + bfc_ref[...]

    return kernel


def decoder_forward(ys, h0_pad, c0_pad, w_ih_d, w_hh_d, b_ih_d, b_hh_d, w_fc, b_fc,
                    tf_flags, *, time_chunk=64, compute_dtype=jnp.bfloat16):
    """Autoregressive decoder loop (fused LSTM step + chunk-batched Linear readout)."""
    t_dec, b, y_dim = ys.shape
    n_steps = t_dec - 1
    if n_steps <= 0:
        return jnp.zeros((t_dec, b, y_dim), jnp.float32)
    bp, hp = h0_pad.shape
    yp = _round_up(y_dim, 128)
    g4 = 4 * hp
    cdt = jnp.dtype(compute_dtype)

    w_yh, bias_p, wfc_p, bfc_p = _pack_decoder_params(
        w_ih_d, w_hh_d, b_ih_d, b_hh_d, w_fc, b_fc, yp, hp, cdt)

    tc = int(min(n_steps, time_chunk))
    n_chunks = pl.cdiv(n_steps, tc)
    t_pad = n_chunks * tc

    # Teacher-input stream: decode step s consumes ys[s] when teacher forced
    # (batch padded to Bp sublanes, lanes padded to Yp).
    ys_k = jnp.zeros((t_pad, bp, yp), jnp.float32)
    ys_k = ys_k.at[:n_steps, :b, :y_dim].set(ys[:n_steps].astype(jnp.float32))

    # Per-step teacher flags. Index 0 forced to 1 (first input is always ys[0]); padded
    # tail and the sentinel at index t_pad stay 1 so the gated per-step FC is skipped.
    tf_k = jnp.ones((t_pad + 1,), jnp.int32)
    tf_k = tf_k.at[1:n_steps].set(tf_flags[1:n_steps].astype(jnp.int32))

    grid_spec = pltpu.PrefetchScalarGridSpec(
        num_scalar_prefetch=1,                             # teacher-forcing flags -> SMEM
        grid=(n_chunks,),
        in_specs=[
            pl.BlockSpec((tc, bp, yp), lambda c, tf: (c, 0, 0)),      # ys chunk
            pl.BlockSpec((bp, hp), lambda c, tf: (0, 0)),             # h0
            pl.BlockSpec((bp, hp), lambda c, tf: (0, 0)),             # c0
            # TODO(synk): single-buffer the grid-invariant weight blocks below
            # (pl.Buffered(1)) for production v7x VMEM budgets.
            pl.BlockSpec((yp + hp, g4), lambda c, tf: (0, 0)),        # stacked [W_ih; W_hh]^T
            pl.BlockSpec((1, g4), lambda c, tf: (0, 0)),              # LSTM bias
            pl.BlockSpec((hp, yp), lambda c, tf: (0, 0)),             # fc weight^T
            pl.BlockSpec((1, yp), lambda c, tf: (0, 0)),              # fc bias
        ],
        out_specs=pl.BlockSpec((tc * bp, yp), lambda c, tf: (c, 0)),
        scratch_shapes=[
            pltpu.VMEM((bp, hp), jnp.float32),           # c carry
            pltpu.VMEM((bp, yp + hp), jnp.float32),      # fused [y | h] input slab
            pltpu.VMEM((tc, bp, hp), jnp.float32),       # per-chunk h history
            pltpu.VMEM((bp, yp), jnp.float32),           # last prediction (AR feedback)
        ],
    )

    slab = pl.pallas_call(
        _make_decoder_kernel(tc, yp, hp, cdt),
        out_shape=jax.ShapeDtypeStruct((t_pad * bp, yp), jnp.float32),
        grid_spec=grid_spec,
        compiler_params=pltpu.CompilerParams(
            dimension_semantics=("arbitrary",),           # serial over time chunks
            vmem_limit_bytes=_VMEM_LIMIT_BYTES),
    )(tf_k, ys_k, h0_pad, c0_pad, w_yh, bias_p, wfc_p, bfc_p)

    preds = slab.reshape(t_pad, bp, yp)[:n_steps, :b, :y_dim]
    # outputs[0] is never written by the PyTorch loop -> stays zero.
    return jnp.concatenate([jnp.zeros((1, b, y_dim), jnp.float32), preds], axis=0)


def seq2seq_forward(xs, ys, enc_params, dec_params, tf_flags, *,
                    compute_dtype=jnp.bfloat16, enc_time_chunk=None, dec_time_chunk=64):
    """Full Seq2Seq.forward: returns outputs of shape (ys_len, B, y_size)."""
    h_pad, c_pad = encoder_forward_padded(xs, *enc_params, time_chunk=enc_time_chunk,
                                          compute_dtype=compute_dtype)
    return decoder_forward(ys, h_pad, c_pad, *dec_params, tf_flags=tf_flags,
                           time_chunk=dec_time_chunk, compute_dtype=compute_dtype)


# ------------------------------ Pure-JAX references ------------------------------

def _reference_encoder(xs, w_ih, w_hh, b_ih, b_hh):
    t_total, b, _ = xs.shape
    h_dim = w_hh.shape[1]
    h = jnp.zeros((b, h_dim), jnp.float32)
    c = jnp.zeros((b, h_dim), jnp.float32)
    for t in range(t_total):
        gates = xs[t] @ w_ih.T + h @ w_hh.T + b_ih + b_hh
        i = jax.nn.sigmoid(gates[:, 0 * h_dim:1 * h_dim])
        f = jax.nn.sigmoid(gates[:, 1 * h_dim:2 * h_dim])
        g = jnp.tanh(gates[:, 2 * h_dim:3 * h_dim])
        o = jax.nn.sigmoid(gates[:, 3 * h_dim:4 * h_dim])
        c = f * c + i * g
        h = o * jnp.tanh(c)
    return h, c


def _reference_seq2seq(xs, ys, enc_params, dec_params, tf_flags):
    h, c = _reference_encoder(xs, *enc_params)
    w_ih_d, w_hh_d, b_ih_d, b_hh_d, w_fc, b_fc = dec_params
    t_dec, b, y_dim = ys.shape
    h_dim = w_hh_d.shape[1]
    outs = [jnp.zeros((b, y_dim), jnp.float32)]
    y = ys[0]
    for t in range(1, t_dec):
        gates = y @ w_ih_d.T + h @ w_hh_d.T + b_ih_d + b_hh_d
        i = jax.nn.sigmoid(gates[:, 0 * h_dim:1 * h_dim])
        f = jax.nn.sigmoid(gates[:, 1 * h_dim:2 * h_dim])
        g = jnp.tanh(gates[:, 2 * h_dim:3 * h_dim])
        o = jax.nn.sigmoid(gates[:, 3 * h_dim:4 * h_dim])
        c = f * c + i * g
        h = o * jnp.tanh(c)
        pred = h @ w_fc.T + b_fc
        outs.append(pred)
        y = jnp.where(tf_flags[t] == 1, ys[t], pred)
    return jnp.stack(outs, axis=0)


if __name__ == "__main__":
    T_ENC, T_DEC, B = 8, 8, 2
    INPUT_DIM, Y_SIZE, HIDDEN_DIM = 16, 16, 32

    key = jax.random.PRNGKey(0)
    keys = jax.random.split(key, 12)

    xs = jax.random.normal(keys[0], (T_ENC, B, INPUT_DIM), dtype=jnp.float32)
    ys = jax.random.normal(keys[1], (T_DEC, B, Y_SIZE), dtype=jnp.float32)

    bound = 1.0 / (HIDDEN_DIM ** 0.5)

    def u(k, shape):
        return jax.random.uniform(k, shape, minval=-bound, maxval=bound, dtype=jnp.float32)

    enc_params = (u(keys[2], (4 * HIDDEN_DIM, INPUT_DIM)),
                  u(keys[3], (4 * HIDDEN_DIM, HIDDEN_DIM)),
                  u(keys[4], (4 * HIDDEN_DIM,)),
                  u(keys[5], (4 * HIDDEN_DIM,)))
    dec_params = (u(keys[6], (4 * HIDDEN_DIM, Y_SIZE)),
                  u(keys[7], (4 * HIDDEN_DIM, HIDDEN_DIM)),
                  u(keys[8], (4 * HIDDEN_DIM,)),
                  u(keys[9], (4 * HIDDEN_DIM,)),
                  u(keys[10], (Y_SIZE, HIDDEN_DIM)),
                  u(keys[11], (Y_SIZE,)))

    # TODO(synk): PyTorch draws these on the host via random.random(); precomputed here
    # with teacher_forcing_ratio = 0.5 so the kernel and the reference see the same draws.
    tf_flags = (jax.random.uniform(jax.random.PRNGKey(1), (T_DEC,)) < 0.5).astype(jnp.int32)

    h_ref, c_ref = _reference_encoder(xs, *enc_params)
    out_expected = _reference_seq2seq(xs, ys, enc_params, dec_params, tf_flags)

    # (compute_dtype, enc_time_chunk, dec_time_chunk, tolerance)
    configs = (
        (jnp.float32, None, 64, 1e-3),   # exact path, default chunking
        (jnp.float32, 5, 3, 1e-3),       # exercise multi-chunk grids + encoder tail path
        (jnp.bfloat16, None, 64, 1e-1),  # production compute dtype (bf16 MXU), loose check
    )
    for cdt, enc_tc, dec_tc, tol in configs:
        outputs = seq2seq_forward(xs, ys, enc_params, dec_params, tf_flags,
                                  compute_dtype=cdt, enc_time_chunk=enc_tc,
                                  dec_time_chunk=dec_tc)
        h_pad, c_pad = encoder_forward_padded(xs, *enc_params, time_chunk=enc_tc,
                                              compute_dtype=cdt)
        outputs, h_pad, c_pad = jax.block_until_ready((outputs, h_pad, c_pad))
        hidden = h_pad[:B, :HIDDEN_DIM]
        cell = c_pad[:B, :HIDDEN_DIM]

        assert outputs.shape == (T_DEC, B, Y_SIZE)
        assert jnp.all(outputs[0] == 0.0), "outputs[0] must stay zero"
        assert jnp.allclose(hidden, h_ref, atol=tol, rtol=tol), f"encoder hidden mismatch {cdt}"
        assert jnp.allclose(cell, c_ref, atol=tol, rtol=tol), f"encoder cell mismatch {cdt}"
        assert jnp.allclose(outputs, out_expected, atol=tol, rtol=tol), \
            f"seq2seq outputs mismatch {cdt}"

    print("KERNEL_OK")
</pallas_src>

<mosaic_0001>
module attributes {stable_mosaic.version = 11 : i64} {
  func.func @kernel(%arg0: i32, %arg1: memref<8x8x512xf32, #tpu.memory_space<vmem>>, %arg2: memref<128x512xf32, #tpu.memory_space<vmem>>, %arg3: memref<8x128xf32, #tpu.memory_space<vmem>>, %arg4: memref<8x128xf32, #tpu.memory_space<vmem>>, %arg5: memref<8x128xf32, #tpu.memory_space<vmem>>, %arg6: memref<8x128xf32, #tpu.memory_space<vmem>>) attributes {dimension_semantics = [#tpu.dimension_semantics<arbitrary>], iteration_bounds = array<i64: 1>, scalar_prefetch = 0 : i64, scratch_operands = 2 : i64, tpu.core_type = #tpu.core_type<tc>, window_params = [{transform_indices = @transform_0, window_bounds = array<i64: 8, 8, 512>}, {pipeline_mode = #tpu.pipeline_mode<synchronous>, transform_indices = @transform_1, window_bounds = array<i64: 128, 512>}, {pipeline_mode = #tpu.pipeline_mode<synchronous>, transform_indices = @transform_2, window_bounds = array<i64: 8, 128>}, {pipeline_mode = #tpu.pipeline_mode<synchronous>, transform_indices = @transform_3, window_bounds = array<i64: 8, 128>}]} {
    %c0_i32 = arith.constant 0 : i32
    %0 = arith.cmpi eq, %arg0, %c0_i32 : i32
    %1 = arith.extui %0 : i1 to i32
    %c0_i32_0 = arith.constant 0 : i32
    %2 = arith.cmpi ne, %1, %c0_i32_0 : i32
    scf.if %2 {
      %cst_178 = arith.constant 0.000000e+00 : f32
      %334 = vector.broadcast %cst_178 : f32 to vector<8x128xf32>
      %c0_179 = arith.constant 0 : index
      %c0_180 = arith.constant 0 : index
      %335 = vector.load %arg5[%c0_179, %c0_180] : memref<8x128xf32, #tpu.memory_space<vmem>>, vector<8x128xf32>
      tpu.vector_store %arg5[%c0_179, %c0_180], %334 {strides = array<i32>} : memref<8x128xf32, #tpu.memory_space<vmem>>, vector<8x128xf32>,
      %cst_181 = arith.constant 0.000000e+00 : f32
      %336 = vector.broadcast %cst_181 : f32 to vector<8x128xf32>
      %c0_182 = arith.constant 0 : index
      %c0_183 = arith.constant 0 : index
      %337 = vector.load %arg6[%c0_182, %c0_183] : memref<8x128xf32, #tpu.memory_space<vmem>>, vector<8x128xf32>
      tpu.vector_store %arg6[%c0_182, %c0_183], %336 {strides = array<i32>} : memref<8x128xf32, #tpu.memory_space<vmem>>, vector<8x128xf32>,
    } else {
    }
    %c0_i32_1 = arith.constant 0 : i32
    %3 = arith.index_cast %c0_i32_1 : i32 to index
    %c0 = arith.constant 0 : index
    %c0_2 = arith.constant 0 : index
    %4 = vector.load %arg1[%3, %c0, %c0_2] : memref<8x8x512xf32, #tpu.memory_space<vmem>>, vector<1x8x512xf32>
    %5 = vector.shape_cast %4 : vector<1x8x512xf32> to vector<8x512xf32>
    %c0_3 = arith.constant 0 : index
    %c0_4 = arith.constant 0 : index
    %6 = vector.load %arg5[%c0_3, %c0_4] : memref<8x128xf32, #tpu.memory_space<vmem>>, vector<8x128xf32>
    %c0_5 = arith.constant 0 : index
    %c0_6 = arith.constant 0 : index
    %7 = vector.load %arg2[%c0_5, %c0_6] : memref<128x512xf32, #tpu.memory_space<vmem>>, vector<128x512xf32>
    %cst = arith.constant dense<0.000000e+00> : vector<8x512xf32>
    %8 = tpu.matmul %6, %7, %cst {dimension_numbers = #tpu.dot_dimension_numbers<[1], [0], [0], [1], [0, 0, 1, 1], [], []>} : vector<8x128xf32>, vector<128x512xf32>, vector<8x512xf32> -> vector<8x512xf32>
    %9 = arith.addf %5, %8 : vector<8x512xf32>
    %10 = vector.extract_strided_slice %9 {offsets = [0, 0], sizes = [8, 128], strides = [1, 1]} : vector<8x512xf32> to vector<8x128xf32>
    %cst_7 = arith.constant 5.000000e-01 : f32
    %11 = vector.broadcast %cst_7 : f32 to vector<8x128xf32>
    %12 = arith.mulf %11, %10 : vector<8x128xf32>
    %13 = math.tanh %12 : vector<8x128xf32>
    %cst_8 = arith.constant 1.000000e+00 : f32
    %14 = vector.broadcast %cst_8 : f32 to vector<8x128xf32>
    %15 = arith.addf %13, %14 : vector<8x128xf32>
    %cst_9 = arith.constant 5.000000e-01 : f32
    %16 = vector.broadcast %cst_9 : f32 to vector<8x128xf32>
    %17 = arith.mulf %16, %15 : vector<8x128xf32>
    %18 = vector.extract_strided_slice %9 {offsets = [0, 128], sizes = [8, 128], strides = [1, 1]} : vector<8x512xf32> to vector<8x128xf32>
    %cst_10 = arith.constant 5.000000e-01 : f32
    %19 = vector.broadcast %cst_10 : f32 to vector<8x128xf32>
    %20 = arith.mulf %19, %18 : vector<8x128xf32>
    %21 = math.tanh %20 : vector<8x128xf32>
    %cst_11 = arith.constant 1.000000e+00 : f32
    %22 = vector.broadcast %cst_11 : f32 to vector<8x128xf32>
    %23 = arith.addf %21, %22 : vector<8x128xf32>
    %cst_12 = arith.constant 5.000000e-01 : f32
    %24 = vector.broadcast %cst_12 : f32 to vector<8x128xf32>
    %25 = arith.mulf %24, %23 : vector<8x128xf32>
    %26 = vector.extract_strided_slice %9 {offsets = [0, 256], sizes = [8, 128], strides = [1, 1]} : vector<8x512xf32> to vector<8x128xf32>
    %27 = math.tanh %26 : vector<8x128xf32>
    %28 = vector.extract_strided_slice %9 {offsets = [0, 384], sizes = [8, 128], strides = [1, 1]} : vector<8x512xf32> to vector<8x128xf32>
    %cst_13 = arith.constant 5.000000e-01 : f32
    %29 = vector.broadcast %cst_13 : f32 to vector<8x128xf32>
    %30 = arith.mulf %29, %28 : vector<8x128xf32>
    %31 = math.tanh %30 : vector<8x128xf32>
    %cst_14 = arith.constant 1.000000e+00 : f32
    %32 = vector.broadcast %cst_14 : f32 to vector<8x128xf32>
    %33 = arith.addf %31, %32 : vector<8x128xf32>
    %cst_15 = arith.constant 5.000000e-01 : f32
    %34 = vector.broadcast %cst_15 : f32 to vector<8x128xf32>
    %35 = arith.mulf %34, %33 : vector<8x128xf32>
    %c0_16 = arith.constant 0 : index
    %c0_17 = arith.constant 0 : index
    %36 = vector.load %arg6[%c0_16, %c0_17] : memref<8x128xf32, #tpu.memory_space<vmem>>, vector<8x128xf32>
    %37 = arith.mulf %25, %36 : vector<8x128xf32>
    %38 = arith.mulf %17, %27 : vector<8x128xf32>
    %39 = arith.addf %37, %38 : vector<8x128xf32>
    %c0_18 = arith.constant 0 : index
    %c0_19 = arith.constant 0 : index
    %40 = vector.load %arg6[%c0_18, %c0_19] : memref<8x128xf32, #tpu.memory_space<vmem>>, vector<8x128xf32>
    tpu.vector_store %arg6[%c0_18, %c0_19], %39 {strides = array<i32>} : memref<8x128xf32, #tpu.memory_space<vmem>>, vector<8x128xf32>,
    %41 = math.tanh %39 : vector<8x128xf32>
    %42 = arith.mulf %35, %41 : vector<8x128xf32>
    %c0_20 = arith.constant 0 : index
    %c0_21 = arith.constant 0 : index
    %43 = vector.load %arg5[%c0_20, %c0_21] : memref<8x128xf32, #tpu.memory_space<vmem>>, vector<8x128xf32>
    tpu.vector_store %arg5[%c0_20, %c0_21], %42 {strides = array<i32>} : memref<8x128xf32, #tpu.memory_space<vmem>>, vector<8x128xf32>,
    %c1_i32 = arith.constant 1 : i32
    %44 = arith.index_cast %c1_i32 : i32 to index
    %c0_22 = arith.constant 0 : index
    %c0_23 = arith.constant 0 : index
    %45 = vector.load %arg1[%44, %c0_22, %c0_23] : memref<8x8x512xf32, #tpu.memory_space<vmem>>, vector<1x8x512xf32>
    %46 = vector.shape_cast %45 : vector<1x8x512xf32> to vector<8x512xf32>
    %c0_24 = arith.constant 0 : index
    %c0_25 = arith.constant 0 : index
    %47 = vector.load %arg5[%c0_24, %c0_25] : memref<8x128xf32, #tpu.memory_space<vmem>>, vector<8x128xf32>
    %c0_26 = arith.constant 0 : index
    %c0_27 = arith.constant 0 : index
    %48 = vector.load %arg2[%c0_26, %c0_27] : memref<128x512xf32, #tpu.memory_space<vmem>>, vector<128x512xf32>
    %cst_28 = arith.constant dense<0.000000e+00> : vector<8x512xf32>
    %49 = tpu.matmul %47, %48, %cst_28 {dimension_numbers = #tpu.dot_dimension_numbers<[1], [0], [0], [1], [0, 0, 1, 1], [], []>} : vector<8x128xf32>, vector<128x512xf32>, vector<8x512xf32> -> vector<8x512xf32>
    %50 = arith.addf %46, %49 : vector<8x512xf32>
    %51 = vector.extract_strided_slice %50 {offsets = [0, 0], sizes = [8, 128], strides = [1, 1]} : vector<8x512xf32> to vector<8x128xf32>
    %cst_29 = arith.constant 5.000000e-01 : f32
    %52 = vector.broadcast %cst_29 : f32 to vector<8x128xf32>
    %53 = arith.mulf %52, %51 : vector<8x128xf32>
    %54 = math.tanh %53 : vector<8x128xf32>
    %cst_30 = arith.constant 1.000000e+00 : f32
    %55 = vector.broadcast %cst_30 : f32 to vector<8x128xf32>
    %56 = arith.addf %54, %55 : vector<8x128xf32>
    %cst_31 = arith.constant 5.000000e-01 : f32
    %57 = vector.broadcast %cst_31 : f32 to vector<8x128xf32>
    %58 = arith.mulf %57, %56 : vector<8x128xf32>
    %59 = vector.extract_strided_slice %50 {offsets = [0, 128], sizes = [8, 128], strides = [1, 1]} : vector<8x512xf32> to vector<8x128xf32>
    %cst_32 = arith.constant 5.000000e-01 : f32
    %60 = vector.broadcast %cst_32 : f32 to vector<8x128xf32>
    %61 = arith.mulf %60, %59 : vector<8x128xf32>
    %62 = math.tanh %61 : vector<8x128xf32>
    %cst_33 = arith.constant 1.000000e+00 : f32
    %63 = vector.broadcast %cst_33 : f32 to vector<8x128xf32>
    %64 = arith.addf %62, %63 : vector<8x128xf32>
    %cst_34 = arith.constant 5.000000e-01 : f32
    %65 = vector.broadcast %cst_34 : f32 to vector<8x128xf32>
    %66 = arith.mulf %65, %64 : vector<8x128xf32>
    %67 = vector.extract_strided_slice %50 {offsets = [0, 256], sizes = [8, 128], strides = [1, 1]} : vector<8x512xf32> to vector<8x128xf32>
    %68 = math.tanh %67 : vector<8x128xf32>
    %69 = vector.extract_strided_slice %50 {offsets = [0, 384], sizes = [8, 128], strides = [1, 1]} : vector<8x512xf32> to vector<8x128xf32>
    %cst_35 = arith.constant 5.000000e-01 : f32
    %70 = vector.broadcast %cst_35 : f32 to vector<8x128xf32>
    %71 = arith.mulf %70, %69 : vector<8x128xf32>
    %72 = math.tanh %71 : vector<8x128xf32>
    %cst_36 = arith.constant 1.000000e+00 : f32
    %73 = vector.broadcast %cst_36 : f32 to vector<8x128xf32>
    %74 = arith.addf %72, %73 : vector<8x128xf32>
    %cst_37 = arith.constant 5.000000e-01 : f32
    %75 = vector.broadcast %cst_37 : f32 to vector<8x128xf32>
    %76 = arith.mulf %75, %74 : vector<8x128xf32>
    %c0_38 = arith.constant 0 : index
    %c0_39 = arith.constant 0 : index
    %77 = vector.load %arg6[%c0_38, %c0_39] : memref<8x128xf32, #tpu.memory_space<vmem>>, vector<8x128xf32>
    %78 = arith.mulf %66, %77 : vector<8x128xf32>
    %79 = arith.mulf %58, %68 : vector<8x128xf32>
    %80 = arith.addf %78, %79 : vector<8x128xf32>
    %c0_40 = arith.constant 0 : index
    %c0_41 = arith.constant 0 : index
    %81 = vector.load %arg6[%c0_40, %c0_41] : memref<8x128xf32, #tpu.memory_space<vmem>>, vector<8x128xf32>
    tpu.vector_store %arg6[%c0_40, %c0_41], %80 {strides = array<i32>} : memref<8x128xf32, #tpu.memory_space<vmem>>, vector<8x128xf32>,
    %82 = math.tanh %80 : vector<8x128xf32>
    %83 = arith.mulf %76, %82 : vector<8x128xf32>
    %c0_42 = arith.constant 0 : index
    %c0_43 = arith.constant 0 : index
    %84 = vector.load %arg5[%c0_42, %c0_43] : memref<8x128xf32, #tpu.memory_space<vmem>>, vector<8x128xf32>
    tpu.vector_store %arg5[%c0_42, %c0_43], %83 {strides = array<i32>} : memref<8x128xf32, #tpu.memory_space<vmem>>, vector<8x128xf32>,
    %c2_i32 = arith.constant 2 : i32
    %85 = arith.index_cast %c2_i32 : i32 to index
    %c0_44 = arith.constant 0 : index
    %c0_45 = arith.constant 0 : index
    %86 = vector.load %arg1[%85, %c0_44, %c0_45] : memref<8x8x512xf32, #tpu.memory_space<vmem>>, vector<1x8x512xf32>
    %87 = vector.shape_cast %86 : vector<1x8x512xf32> to vector<8x512xf32>
    %c0_46 = arith.constant 0 : index
    %c0_47 = arith.constant 0 : index
    %88 = vector.load %arg5[%c0_46, %c0_47] : memref<8x128xf32, #tpu.memory_space<vmem>>, vector<8x128xf32>
    %c0_48 = arith.constant 0 : index
    %c0_49 = arith.constant 0 : index
    %89 = vector.load %arg2[%c0_48, %c0_49] : memref<128x512xf32, #tpu.memory_space<vmem>>, vector<128x512xf32>
    %cst_50 = arith.constant dense<0.000000e+00> : vector<8x512xf32>
    %90 = tpu.matmul %88, %89, %cst_50 {dimension_numbers = #tpu.dot_dimension_numbers<[1], [0], [0], [1], [0, 0, 1, 1], [], []>} : vector<8x128xf32>, vector<128x512xf32>, vector<8x512xf32> -> vector<8x512xf32>
    %91 = arith.addf %87, %90 : vector<8x512xf32>
    %92 = vector.extract_strided_slice %91 {offsets = [0, 0], sizes = [8, 128], strides = [1, 1]} : vector<8x512xf32> to vector<8x128xf32>
    %cst_51 = arith.constant 5.000000e-01 : f32
    %93 = vector.broadcast %cst_51 : f32 to vector<8x128xf32>
    %94 = arith.mulf %93, %92 : vector<8x128xf32>
    %95 = math.tanh %94 : vector<8x128xf32>
    %cst_52 = arith.constant 1.000000e+00 : f32
    %96 = vector.broadcast %cst_52 : f32 to vector<8x128xf32>
    %97 = arith.addf %95, %96 : vector<8x128xf32>
    %cst_53 = arith.constant 5.000000e-01 : f32
    %98 = vector.broadcast %cst_53 : f32 to vector<8x128xf32>
    %99 = arith.mulf %98, %97 : vector<8x128xf32>
    %100 = vector.extract_strided_slice %91 {offsets = [0, 128], sizes = [8, 128], strides = [1, 1]} : vector<8x512xf32> to vector<8x128xf32>
    %cst_54 = arith.constant 5.000000e-01 : f32
    %101 = vector.broadcast %cst_54 : f32 to vector<8x128xf32>
    %102 = arith.mulf %101, %100 : vector<8x128xf32>
    %103 = math.tanh %102 : vector<8x128xf32>
    %cst_55 = arith.constant 1.000000e+00 : f32
    %104 = vector.broadcast %cst_55 : f32 to vector<8x128xf32>
    %105 = arith.addf %103, %104 : vector<8x128xf32>
    %cst_56 = arith.constant 5.000000e-01 : f32
    %106 = vector.broadcast %cst_56 : f32 to vector<8x128xf32>
    %107 = arith.mulf %106, %105 : vector<8x128xf32>
    %108 = vector.extract_strided_slice %91 {offsets = [0, 256], sizes = [8, 128], strides = [1, 1]} : vector<8x512xf32> to vector<8x128xf32>
    %109 = math.tanh %108 : vector<8x128xf32>
    %110 = vector.extract_strided_slice %91 {offsets = [0, 384], sizes = [8, 128], strides = [1, 1]} : vector<8x512xf32> to vector<8x128xf32>
    %cst_57 = arith.constant 5.000000e-01 : f32
    %111 = vector.broadcast %cst_57 : f32 to vector<8x128xf32>
    %112 = arith.mulf %111, %110 : vector<8x128xf32>
    %113 = math.tanh %112 : vector<8x128xf32>
    %cst_58 = arith.constant 1.000000e+00 : f32
    %114 = vector.broadcast %cst_58 : f32 to vector<8x128xf32>
    %115 = arith.addf %113, %114 : vector<8x128xf32>
    %cst_59 = arith.constant 5.000000e-01 : f32
    %116 = vector.broadcast %cst_59 : f32 to vector<8x128xf32>
    %117 = arith.mulf %116, %115 : vector<8x128xf32>
    %c0_60 = arith.constant 0 : index
    %c0_61 = arith.constant 0 : index
    %118 = vector.load %arg6[%c0_60, %c0_61] : memref<8x128xf32, #tpu.memory_space<vmem>>, vector<8x128xf32>
    %119 = arith.mulf %107, %118 : vector<8x128xf32>
    %120 = arith.mulf %99, %109 : vector<8x128xf32>
    %121 = arith.addf %119, %120 : vector<8x128xf32>
    %c0_62 = arith.constant 0 : index
    %c0_63 = arith.constant 0 : index
    %122 = vector.load %arg6[%c0_62, %c0_63] : memref<8x128xf32, #tpu.memory_space<vmem>>, vector<8x128xf32>
    tpu.vector_store %arg6[%c0_62, %c0_63], %121 {strides = array<i32>} : memref<8x128xf32, #tpu.memory_space<vmem>>, vector<8x128xf32>,
    %123 = math.tanh %121 : vector<8x128xf32>
    %124 = arith.mulf %117, %123 : vector<8x128xf32>
    %c0_64 = arith.constant 0 : index
    %c0_65 = arith.constant 0 : index
    %125 = vector.load %arg5[%c0_64, %c0_65] : memref<8x128xf32, #tpu.memory_space<vmem>>, vector<8x128xf32>
    tpu.vector_store %arg5[%c0_64, %c0_65], %124 {strides = array<i32>} : memref<8x128xf32, #tpu.memory_space<vmem>>, vector<8x128xf32>,
    %c3_i32 = arith.constant 3 : i32
    %126 = arith.index_cast %c3_i32 : i32 to index
    %c0_66 = arith.constant 0 : index
    %c0_67 = arith.constant 0 : index
    %127 = vector.load %arg1[%126, %c0_66, %c0_67] : memref<8x8x512xf32, #tpu.memory_space<vmem>>, vector<1x8x512xf32>
    %128 = vector.shape_cast %127 : vector<1x8x512xf32> to vector<8x512xf32>
    %c0_68 = arith.constant 0 : index
    %c0_69 = arith.constant 0 : index
    %129 = vector.load %arg5[%c0_68, %c0_69] : memref<8x128xf32, #tpu.memory_space<vmem>>, vector<8x128xf32>
    %c0_70 = arith.constant 0 : index
    %c0_71 = arith.constant 0 : index
    %130 = vector.load %arg2[%c0_70, %c0_71] : memref<128x512xf32, #tpu.memory_space<vmem>>, vector<128x512xf32>
    %cst_72 = arith.constant dense<0.000000e+00> : vector<8x512xf32>
    %131 = tpu.matmul %129, %130, %cst_72 {dimension_numbers = #tpu.dot_dimension_numbers<[1], [0], [0], [1], [0, 0, 1, 1], [], []>} : vector<8x128xf32>, vector<128x512xf32>, vector<8x512xf32> -> vector<8x512xf32>
    %132 = arith.addf %128, %131 : vector<8x512xf32>
    %133 = vector.extract_strided_slice %132 {offsets = [0, 0], sizes = [8, 128], strides = [1, 1]} : vector<8x512xf32> to vector<8x128xf32>
    %cst_73 = arith.constant 5.000000e-01 : f32
    %134 = vector.broadcast %cst_73 : f32 to vector<8x128xf32>
    %135 = arith.mulf %134, %133 : vector<8x128xf32>
    %136 = math.tanh %135 : vector<8x128xf32>
    %cst_74 = arith.constant 1.000000e+00 : f32
    %137 = vector.broadcast %cst_74 : f32 to vector<8x128xf32>
    %138 = arith.addf %136, %137 : vector<8x128xf32>
    %cst_75 = arith.constant 5.000000e-01 : f32
    %139 = vector.broadcast %cst_75 : f32 to vector<8x128xf32>
    %140 = arith.mulf %139, %138 : vector<8x128xf32>
    %141 = vector.extract_strided_slice %132 {offsets = [0, 128], sizes = [8, 128], strides = [1, 1]} : vector<8x512xf32> to vector<8x128xf32>
    %cst_76 = arith.constant 5.000000e-01 : f32
    %142 = vector.broadcast %cst_76 : f32 to vector<8x128xf32>
    %143 = arith.mulf %142, %141 : vector<8x128xf32>
    %144 = math.tanh %143 : vector<8x128xf32>
    %cst_77 = arith.constant 1.000000e+00 : f32
    %145 = vector.broadcast %cst_77 : f32 to vector<8x128xf32>
    %146 = arith.addf %144, %145 : vector<8x128xf32>
    %cst_78 = arith.constant 5.000000e-01 : f32
    %147 = vector.broadcast %cst_78 : f32 to vector<8x128xf32>
    %148 = arith.mulf %147, %146 : vector<8x128xf32>
    %149 = vector.extract_strided_slice %132 {offsets = [0, 256], sizes = [8, 128], strides = [1, 1]} : vector<8x512xf32> to vector<8x128xf32>
    %150 = math.tanh %149 : vector<8x128xf32>
    %151 = vector.extract_strided_slice %132 {offsets = [0, 384], sizes = [8, 128], strides = [1, 1]} : vector<8x512xf32> to vector<8x128xf32>
    %cst_79 = arith.constant 5.000000e-01 : f32
    %152 = vector.broadcast %cst_79 : f32 to vector<8x128xf32>
    %153 = arith.mulf %152, %151 : vector<8x128xf32>
    %154 = math.tanh %153 : vector<8x128xf32>
    %cst_80 = arith.constant 1.000000e+00 : f32
    %155 = vector.broadcast %cst_80 : f32 to vector<8x128xf32>
    %156 = arith.addf %154, %155 : vector<8x128xf32>
    %cst_81 = arith.constant 5.000000e-01 : f32
    %157 = vector.broadcast %cst_81 : f32 to vector<8x128xf32>
    %158 = arith.mulf %157, %156 : vector<8x128xf32>
    %c0_82 = arith.constant 0 : index
    %c0_83 = arith.constant 0 : index
    %159 = vector.load %arg6[%c0_82, %c0_83] : memref<8x128xf32, #tpu.memory_space<vmem>>, vector<8x128xf32>
    %160 = arith.mulf %148, %159 : vector<8x128xf32>
    %161 = arith.mulf %140, %150 : vector<8x128xf32>
    %162 = arith.addf %160, %161 : vector<8x128xf32>
    %c0_84 = arith.constant 0 : index
    %c0_85 = arith.constant 0 : index
    %163 = vector.load %arg6[%c0_84, %c0_85] : memref<8x128xf32, #tpu.memory_space<vmem>>, vector<8x128xf32>
    tpu.vector_store %arg6[%c0_84, %c0_85], %162 {strides = array<i32>} : memref<8x128xf32, #tpu.memory_space<vmem>>, vector<8x128xf32>,
    %164 = math.tanh %162 : vector<8x128xf32>
    %165 = arith.mulf %158, %164 : vector<8x128xf32>
    %c0_86 = arith.constant 0 : index
    %c0_87 = arith.constant 0 : index
    %166 = vector.load %arg5[%c0_86, %c0_87] : memref<8x128xf32, #tpu.memory_space<vmem>>, vector<8x128xf32>
    tpu.vector_store %arg5[%c0_86, %c0_87], %165 {strides = array<i32>} : memref<8x128xf32, #tpu.memory_space<vmem>>, vector<8x128xf32>,
    %c4_i32 = arith.constant 4 : i32
    %167 = arith.index_cast %c4_i32 : i32 to index
    %c0_88 = arith.constant 0 : index
    %c0_89 = arith.constant 0 : index
    %168 = vector.load %arg1[%167, %c0_88, %c0_89] : memref<8x8x512xf32, #tpu.memory_space<vmem>>, vector<1x8x512xf32>
    %169 = vector.shape_cast %168 : vector<1x8x512xf32> to vector<8x512xf32>
    %c0_90 = arith.constant 0 : index
    %c0_91 = arith.constant 0 : index
    %170 = vector.load %arg5[%c0_90, %c0_91] : memref<8x128xf32, #tpu.memory_space<vmem>>, vector<8x128xf32>
    %c0_92 = arith.constant 0 : index
    %c0_93 = arith.constant 0 : index
    %171 = vector.load %arg2[%c0_92, %c0_93] : memref<128x512xf32, #tpu.memory_space<vmem>>, vector<128x512xf32>
    %cst_94 = arith.constant dense<0.000000e+00> : vector<8x512xf32>
    %172 = tpu.matmul %170, %171, %cst_94 {dimension_numbers = #tpu.dot_dimension_numbers<[1], [0], [0], [1], [0, 0, 1, 1], [], []>} : vector<8x128xf32>, vector<128x512xf32>, vector<8x512xf32> -> vector<8x512xf32>
    %173 = arith.addf %169, %172 : vector<8x512xf32>
    %174 = vector.extract_strided_slice %173 {offsets = [0, 0], sizes = [8, 128], strides = [1, 1]} : vector<8x512xf32> to vector<8x128xf32>
    %cst_95 = arith.constant 5.000000e-01 : f32
    %175 = vector.broadcast %cst_95 : f32 to vector<8x128xf32>
    %176 = arith.mulf %175, %174 : vector<8x128xf32>
    %177 = math.tanh %176 : vector<8x128xf32>
    %cst_96 = arith.constant 1.000000e+00 : f32
    %178 = vector.broadcast %cst_96 : f32 to vector<8x128xf32>
    %179 = arith.addf %177, %178 : vector<8x128xf32>
    %cst_97 = arith.constant 5.000000e-01 : f32
    %180 = vector.broadcast %cst_97 : f32 to vector<8x128xf32>
    %181 = arith.mulf %180, %179 : vector<8x128xf32>
    %182 = vector.extract_strided_slice %173 {offsets = [0, 128], sizes = [8, 128], strides = [1, 1]} : vector<8x512xf32> to vector<8x128xf32>
    %cst_98 = arith.constant 5.000000e-01 : f32
    %183 = vector.broadcast %cst_98 : f32 to vector<8x128xf32>
    %184 = arith.mulf %183, %182 : vector<8x128xf32>
    %185 = math.tanh %184 : vector<8x128xf32>
    %cst_99 = arith.constant 1.000000e+00 : f32
    %186 = vector.broadcast %cst_99 : f32 to vector<8x128xf32>
    %187 = arith.addf %185, %186 : vector<8x128xf32>
    %cst_100 = arith.constant 5.000000e-01 : f32
    %188 = vector.broadcast %cst_100 : f32 to vector<8x128xf32>
    %189 = arith.mulf %188, %187 : vector<8x128xf32>
    %190 = vector.extract_strided_slice %173 {offsets = [0, 256], sizes = [8, 128], strides = [1, 1]} : vector<8x512xf32> to vector<8x128xf32>
    %191 = math.tanh %190 : vector<8x128xf32>
    %192 = vector.extract_strided_slice %173 {offsets = [0, 384], sizes = [8, 128], strides = [1, 1]} : vector<8x512xf32> to vector<8x128xf32>
    %cst_101 = arith.constant 5.000000e-01 : f32
    %193 = vector.broadcast %cst_101 : f32 to vector<8x128xf32>
    %194 = arith.mulf %193, %192 : vector<8x128xf32>
    %195 = math.tanh %194 : vector<8x128xf32>
    %cst_102 = arith.constant 1.000000e+00 : f32
    %196 = vector.broadcast %cst_102 : f32 to vector<8x128xf32>
    %197 = arith.addf %195, %196 : vector<8x128xf32>
    %cst_103 = arith.constant 5.000000e-01 : f32
    %198 = vector.broadcast %cst_103 : f32 to vector<8x128xf32>
    %199 = arith.mulf %198, %197 : vector<8x128xf32>
    %c0_104 = arith.constant 0 : index
    %c0_105 = arith.constant 0 : index
    %200 = vector.load %arg6[%c0_104, %c0_105] : memref<8x128xf32, #tpu.memory_space<vmem>>, vector<8x128xf32>
    %201 = arith.mulf %189, %200 : vector<8x128xf32>
    %202 = arith.mulf %181, %191 : vector<8x128xf32>
    %203 = arith.addf %201, %202 : vector<8x128xf32>
    %c0_106 = arith.constant 0 : index
    %c0_107 = arith.constant 0 : index
    %204 = vector.load %arg6[%c0_106, %c0_107] : memref<8x128xf32, #tpu.memory_space<vmem>>, vector<8x128xf32>
    tpu.vector_store %arg6[%c0_106, %c0_107], %203 {strides = array<i32>} : memref<8x128xf32, #tpu.memory_space<vmem>>, vector<8x128xf32>,
    %205 = math.tanh %203 : vector<8x128xf32>
    %206 = arith.mulf %199, %205 : vector<8x128xf32>
    %c0_108 = arith.constant 0 : index
    %c0_109 = arith.constant 0 : index
    %207 = vector.load %arg5[%c0_108, %c0_109] : memref<8x128xf32, #tpu.memory_space<vmem>>, vector<8x128xf32>
    tpu.vector_store %arg5[%c0_108, %c0_109], %206 {strides = array<i32>} : memref<8x128xf32, #tpu.memory_space<vmem>>, vector<8x128xf32>,
    %c5_i32 = arith.constant 5 : i32
    %208 = arith.index_cast %c5_i32 : i32 to index
    %c0_110 = arith.constant 0 : index
    %c0_111 = arith.constant 0 : index
    %209 = vector.load %arg1[%208, %c0_110, %c0_111] : memref<8x8x512xf32, #tpu.memory_space<vmem>>, vector<1x8x512xf32>
    %210 = vector.shape_cast %209 : vector<1x8x512xf32> to vector<8x512xf32>
    %c0_112 = arith.constant 0 : index
    %c0_113 = arith.constant 0 : index
    %211 = vector.load %arg5[%c0_112, %c0_113] : memref<8x128xf32, #tpu.memory_space<vmem>>, vector<8x128xf32>
    %c0_114 = arith.constant 0 : index
    %c0_115 = arith.constant 0 : index
    %212 = vector.load %arg2[%c0_114, %c0_115] : memref<128x512xf32, #tpu.memory_space<vmem>>, vector<128x512xf32>
    %cst_116 = arith.constant dense<0.000000e+00> : vector<8x512xf32>
    %213 = tpu.matmul %211, %212, %cst_116 {dimension_numbers = #tpu.dot_dimension_numbers<[1], [0], [0], [1], [0, 0, 1, 1], [], []>} : vector<8x128xf32>, vector<128x512xf32>, vector<8x512xf32> -> vector<8x512xf32>
    %214 = arith.addf %210, %213 : vector<8x512xf32>
    %215 = vector.extract_strided_slice %214 {offsets = [0, 0], sizes = [8, 128], strides = [1, 1]} : vector<8x512xf32> to vector<8x128xf32>
    %cst_117 = arith.constant 5.000000e-01 : f32
    %216 = vector.broadcast %cst_117 : f32 to vector<8x128xf32>
    %217 = arith.mulf %216, %215 : vector<8x128xf32>
    %218 = math.tanh %217 : vector<8x128xf32>
    %cst_118 = arith.constant 1.000000e+00 : f32
    %219 = vector.broadcast %cst_118 : f32 to vector<8x128xf32>
    %220 = arith.addf %218, %219 : vector<8x128xf32>
    %cst_119 = arith.constant 5.000000e-01 : f32
    %221 = vector.broadcast %cst_119 : f32 to vector<8x128xf32>
    %222 = arith.mulf %221, %220 : vector<8x128xf32>
    %223 = vector.extract_strided_slice %214 {offsets = [0, 128], sizes = [8, 128], strides = [1, 1]} : vector<8x512xf32> to vector<8x128xf32>
    %cst_120 = arith.constant 5.000000e-01 : f32
    %224 = vector.broadcast %cst_120 : f32 to vector<8x128xf32>
    %225 = arith.mulf %224, %223 : vector<8x128xf32>
    %226 = math.tanh %225 : vector<8x128xf32>
    %cst_121 = arith.constant 1.000000e+00 : f32
    %227 = vector.broadcast %cst_121 : f32 to vector<8x128xf32>
    %228 = arith.addf %226, %227 : vector<8x128xf32>
    %cst_122 = arith.constant 5.000000e-01 : f32
    %229 = vector.broadcast %cst_122 : f32 to vector<8x128xf32>
    %230 = arith.mulf %229, %228 : vector<8x128xf32>
    %231 = vector.extract_strided_slice %214 {offsets = [0, 256], sizes = [8, 128], strides = [1, 1]} : vector<8x512xf32> to vector<8x128xf32>
    %232 = math.tanh %231 : vector<8x128xf32>
    %233 = vector.extract_strided_slice %214 {offsets = [0, 384], sizes = [8, 128], strides = [1, 1]} : vector<8x512xf32> to vector<8x128xf32>
    %cst_123 = arith.constant 5.000000e-01 : f32
    %234 = vector.broadcast %cst_123 : f32 to vector<8x128xf32>
    %235 = arith.mulf %234, %233 : vector<8x128xf32>
    %236 = math.tanh %235 : vector<8x128xf32>
    %cst_124 = arith.constant 1.000000e+00 : f32
    %237 = vector.broadcast %cst_124 : f32 to vector<8x128xf32>
    %238 = arith.addf %236, %237 : vector<8x128xf32>
    %cst_125 = arith.constant 5.000000e-01 : f32
    %239 = vector.broadcast %cst_125 : f32 to vector<8x128xf32>
    %240 = arith.mulf %239, %238 : vector<8x128xf32>
    %c0_126 = arith.constant 0 : index
    %c0_127 = arith.constant 0 : index
    %241 = vector.load %arg6[%c0_126, %c0_127] : memref<8x128xf32, #tpu.memory_space<vmem>>, vector<8x128xf32>
    %242 = arith.mulf %230, %241 : vector<8x128xf32>
    %243 = arith.mulf %222, %232 : vector<8x128xf32>
    %244 = arith.addf %242, %243 : vector<8x128xf32>
    %c0_128 = arith.constant 0 : index
    %c0_129 = arith.constant 0 : index
    %245 = vector.load %arg6[%c0_128, %c0_129] : memref<8x128xf32, #tpu.memory_space<vmem>>, vector<8x128xf32>
    tpu.vector_store %arg6[%c0_128, %c0_129], %244 {strides = array<i32>} : memref<8x128xf32, #tpu.memory_space<vmem>>, vector<8x128xf32>,
    %246 = math.tanh %244 : vector<8x128xf32>
    %247 = arith.mulf %240, %246 : vector<8x128xf32>
    %c0_130 = arith.constant 0 : index
    %c0_131 = arith.constant 0 : index
    %248 = vector.load %arg5[%c0_130, %c0_131] : memref<8x128xf32, #tpu.memory_space<vmem>>, vector<8x128xf32>
    tpu.vector_store %arg5[%c0_130, %c0_131], %247 {strides = array<i32>} : memref<8x128xf32, #tpu.memory_space<vmem>>, vector<8x128xf32>,
    %c6_i32 = arith.constant 6 : i32
    %249 = arith.index_cast %c6_i32 : i32 to index
    %c0_132 = arith.constant 0 : index
    %c0_133 = arith.constant 0 : index
    %250 = vector.load %arg1[%249, %c0_132, %c0_133] : memref<8x8x512xf32, #tpu.memory_space<vmem>>, vector<1x8x512xf32>
    %251 = vector.shape_cast %250 : vector<1x8x512xf32> to vector<8x512xf32>
    %c0_134 = arith.constant 0 : index
    %c0_135 = arith.constant 0 : index
    %252 = vector.load %arg5[%c0_134, %c0_135] : memref<8x128xf32, #tpu.memory_space<vmem>>, vector<8x128xf32>
    %c0_136 = arith.constant 0 : index
    %c0_137 = arith.constant 0 : index
    %253 = vector.load %arg2[%c0_136, %c0_137] : memref<128x512xf32, #tpu.memory_space<vmem>>, vector<128x512xf32>
    %cst_138 = arith.constant dense<0.000000e+00> : vector<8x512xf32>
    %254 = tpu.matmul %252, %253, %cst_138 {dimension_numbers = #tpu.dot_dimension_numbers<[1], [0], [0], [1], [0, 0, 1, 1], [], []>} : vector<8x128xf32>, vector<128x512xf32>, vector<8x512xf32> -> vector<8x512xf32>
    %255 = arith.addf %251, %254 : vector<8x512xf32>
    %256 = vector.extract_strided_slice %255 {offsets = [0, 0], sizes = [8, 128], strides = [1, 1]} : vector<8x512xf32> to vector<8x128xf32>
    %cst_139 = arith.constant 5.000000e-01 : f32
    %257 = vector.broadcast %cst_139 : f32 to vector<8x128xf32>
    %258 = arith.mulf %257, %256 : vector<8x128xf32>
    %259 = math.tanh %258 : vector<8x128xf32>
    %cst_140 = arith.constant 1.000000e+00 : f32
    %260 = vector.broadcast %cst_140 : f32 to vector<8x128xf32>
    %261 = arith.addf %259, %260 : vector<8x128xf32>
    %cst_141 = arith.constant 5.000000e-01 : f32
    %262 = vector.broadcast %cst_141 : f32 to vector<8x128xf32>
    %263 = arith.mulf %262, %261 : vector<8x128xf32>
    %264 = vector.extract_strided_slice %255 {offsets = [0, 128], sizes = [8, 128], strides = [1, 1]} : vector<8x512xf32> to vector<8x128xf32>
    %cst_142 = arith.constant 5.000000e-01 : f32
    %265 = vector.broadcast %cst_142 : f32 to vector<8x128xf32>
    %266 = arith.mulf %265, %264 : vector<8x128xf32>
    %267 = math.tanh %266 : vector<8x128xf32>
    %cst_143 = arith.constant 1.000000e+00 : f32
    %268 = vector.broadcast %cst_143 : f32 to vector<8x128xf32>
    %269 = arith.addf %267, %268 : vector<8x128xf32>
    %cst_144 = arith.constant 5.000000e-01 : f32
    %270 = vector.broadcast %cst_144 : f32 to vector<8x128xf32>
    %271 = arith.mulf %270, %269 : vector<8x128xf32>
    %272 = vector.extract_strided_slice %255 {offsets = [0, 256], sizes = [8, 128], strides = [1, 1]} : vector<8x512xf32> to vector<8x128xf32>
    %273 = math.tanh %272 : vector<8x128xf32>
    %274 = vector.extract_strided_slice %255 {offsets = [0, 384], sizes = [8, 128], strides = [1, 1]} : vector<8x512xf32> to vector<8x128xf32>
    %cst_145 = arith.constant 5.000000e-01 : f32
    %275 = vector.broadcast %cst_145 : f32 to vector<8x128xf32>
    %276 = arith.mulf %275, %274 : vector<8x128xf32>
    %277 = math.tanh %276 : vector<8x128xf32>
    %cst_146 = arith.constant 1.000000e+00 : f32
    %278 = vector.broadcast %cst_146 : f32 to vector<8x128xf32>
    %279 = arith.addf %277, %278 : vector<8x128xf32>
    %cst_147 = arith.constant 5.000000e-01 : f32
    %280 = vector.broadcast %cst_147 : f32 to vector<8x128xf32>
    %281 = arith.mulf %280, %279 : vector<8x128xf32>
    %c0_148 = arith.constant 0 : index
    %c0_149 = arith.constant 0 : index
    %282 = vector.load %arg6[%c0_148, %c0_149] : memref<8x128xf32, #tpu.memory_space<vmem>>, vector<8x128xf32>
    %283 = arith.mulf %271, %282 : vector<8x128xf32>
    %284 = arith.mulf %263, %273 : vector<8x128xf32>
    %285 = arith.addf %283, %284 : vector<8x128xf32>
    %c0_150 = arith.constant 0 : index
    %c0_151 = arith.constant 0 : index
    %286 = vector.load %arg6[%c0_150, %c0_151] : memref<8x128xf32, #tpu.memory_space<vmem>>, vector<8x128xf32>
    tpu.vector_store %arg6[%c0_150, %c0_151], %285 {strides = array<i32>} : memref<8x128xf32, #tpu.memory_space<vmem>>, vector<8x128xf32>,
    %287 = math.tanh %285 : vector<8x128xf32>
    %288 = arith.mulf %281, %287 : vector<8x128xf32>
    %c0_152 = arith.constant 0 : index
    %c0_153 = arith.constant 0 : index
    %289 = vector.load %arg5[%c0_152, %c0_153] : memref<8x128xf32, #tpu.memory_space<vmem>>, vector<8x128xf32>
    tpu.vector_store %arg5[%c0_152, %c0_153], %288 {strides = array<i32>} : memref<8x128xf32, #tpu.memory_space<vmem>>, vector<8x128xf32>,
    %c7_i32 = arith.constant 7 : i32
    %290 = arith.index_cast %c7_i32 : i32 to index
    %c0_154 = arith.constant 0 : index
    %c0_155 = arith.constant 0 : index
    %291 = vector.load %arg1[%290, %c0_154, %c0_155] : memref<8x8x512xf32, #tpu.memory_space<vmem>>, vector<1x8x512xf32>
    %292 = vector.shape_cast %291 : vector<1x8x512xf32> to vector<8x512xf32>
    %c0_156 = arith.constant 0 : index
    %c0_157 = arith.constant 0 : index
    %293 = vector.load %arg5[%c0_156, %c0_157] : memref<8x128xf32, #tpu.memory_space<vmem>>, vector<8x128xf32>
    %c0_158 = arith.constant 0 : index
    %c0_159 = arith.constant 0 : index
    %294 = vector.load %arg2[%c0_158, %c0_159] : memref<128x512xf32, #tpu.memory_space<vmem>>, vector<128x512xf32>
    %cst_160 = arith.constant dense<0.000000e+00> : vector<8x512xf32>
    %295 = tpu.matmul %293, %294, %cst_160 {dimension_numbers = #tpu.dot_dimension_numbers<[1], [0], [0], [1], [0, 0, 1, 1], [], []>} : vector<8x128xf32>, vector<128x512xf32>, vector<8x512xf32> -> vector<8x512xf32>
    %296 = arith.addf %292, %295 : vector<8x512xf32>
    %297 = vector.extract_strided_slice %296 {offsets = [0, 0], sizes = [8, 128], strides = [1, 1]} : vector<8x512xf32> to vector<8x128xf32>
    %cst_161 = arith.constant 5.000000e-01 : f32
    %298 = vector.broadcast %cst_161 : f32 to vector<8x128xf32>
    %299 = arith.mulf %298, %297 : vector<8x128xf32>
    %300 = math.tanh %299 : vector<8x128xf32>
    %cst_162 = arith.constant 1.000000e+00 : f32
    %301 = vector.broadcast %cst_162 : f32 to vector<8x128xf32>
    %302 = arith.addf %300, %301 : vector<8x128xf32>
    %cst_163 = arith.constant 5.000000e-01 : f32
    %303 = vector.broadcast %cst_163 : f32 to vector<8x128xf32>
    %304 = arith.mulf %303, %302 : vector<8x128xf32>
    %305 = vector.extract_strided_slice %296 {offsets = [0, 128], sizes = [8, 128], strides = [1, 1]} : vector<8x512xf32> to vector<8x128xf32>
    %cst_164 = arith.constant 5.000000e-01 : f32
    %306 = vector.broadcast %cst_164 : f32 to vector<8x128xf32>
    %307 = arith.mulf %306, %305 : vector<8x128xf32>
    %308 = math.tanh %307 : vector<8x128xf32>
    %cst_165 = arith.constant 1.000000e+00 : f32
    %309 = vector.broadcast %cst_165 : f32 to vector<8x128xf32>
    %310 = arith.addf %308, %309 : vector<8x128xf32>
    %cst_166 = arith.constant 5.000000e-01 : f32
    %311 = vector.broadcast %cst_166 : f32 to vector<8x128xf32>
    %312 = arith.mulf %311, %310 : vector<8x128xf32>
    %313 = vector.extract_strided_slice %296 {offsets = [0, 256], sizes = [8, 128], strides = [1, 1]} : vector<8x512xf32> to vector<8x128xf32>
    %314 = math.tanh %313 : vector<8x128xf32>
    %315 = vector.extract_strided_slice %296 {offsets = [0, 384], sizes = [8, 128], strides = [1, 1]} : vector<8x512xf32> to vector<8x128xf32>
    %cst_167 = arith.constant 5.000000e-01 : f32
    %316 = vector.broadcast %cst_167 : f32 to vector<8x128xf32>
    %317 = arith.mulf %316, %315 : vector<8x128xf32>
    %318 = math.tanh %317 : vector<8x128xf32>
    %cst_168 = arith.constant 1.000000e+00 : f32
    %319 = vector.broadcast %cst_168 : f32 to vector<8x128xf32>
    %320 = arith.addf %318, %319 : vector<8x128xf32>
    %cst_169 = arith.constant 5.000000e-01 : f32
    %321 = vector.broadcast %cst_169 : f32 to vector<8x128xf32>
    %322 = arith.mulf %321, %320 : vector<8x128xf32>
    %c0_170 = arith.constant 0 : index
    %c0_171 = arith.constant 0 : index
    %323 = vector.load %arg6[%c0_170, %c0_171] : memref<8x128xf32, #tpu.memory_space<vmem>>, vector<8x128xf32>
    %324 = arith.mulf %312, %323 : vector<8x128xf32>
    %325 = arith.mulf %304, %314 : vector<8x128xf32>
    %326 = arith.addf %324, %325 : vector<8x128xf32>
    %c0_172 = arith.constant 0 : index
    %c0_173 = arith.constant 0 : index
    %327 = vector.load %arg6[%c0_172, %c0_173] : memref<8x128xf32, #tpu.memory_space<vmem>>, vector<8x128xf32>
    tpu.vector_store %arg6[%c0_172, %c0_173], %326 {strides = array<i32>} : memref<8x128xf32, #tpu.memory_space<vmem>>, vector<8x128xf32>,
    %328 = math.tanh %326 : vector<8x128xf32>
    %329 = arith.mulf %322, %328 : vector<8x128xf32>
    %c0_174 = arith.constant 0 : index
    %c0_175 = arith.constant 0 : index
    %330 = vector.load %arg5[%c0_174, %c0_175] : memref<8x128xf32, #tpu.memory_space<vmem>>, vector<8x128xf32>
    tpu.vector_store %arg5[%c0_174, %c0_175], %329 {strides = array<i32>} : memref<8x128xf32, #tpu.memory_space<vmem>>, vector<8x128xf32>,
    %c8_i32 = arith.constant 8 : i32
    %c0_i32_176 = arith.constant 0 : i32
    %331 = arith.cmpi eq, %arg0, %c0_i32_176 : i32
    %332 = arith.extui %331 : i1 to i32
    %c0_i32_177 = arith.constant 0 : i32
    %333 = arith.cmpi ne, %332, %c0_i32_177 : i32
    scf.if %333 {
      %c0_178 = arith.constant 0 : index
      %c0_179 = arith.constant 0 : index
      %334 = vector.load %arg5[%c0_178, %c0_179] : memref<8x128xf32, #tpu.memory_space<vmem>>, vector<8x128xf32>
      %c0_180 = arith.constant 0 : index
      %c0_181 = arith.constant 0 : index
      %335 = vector.load %arg3[%c0_180, %c0_181] : memref<8x128xf32, #tpu.memory_space<vmem>>, vector<8x128xf32>
      tpu.vector_store %arg3[%c0_180, %c0_181], %334 {strides = array<i32>} : memref<8x128xf32, #tpu.memory_space<vmem>>, vector<8x128xf32>,
      %c0_182 = arith.constant 0 : index
      %c0_183 = arith.constant 0 : index
      %336 = vector.load %arg6[%c0_182, %c0_183] : memref<8x128xf32, #tpu.memory_space<vmem>>, vector<8x128xf32>
      %c0_184 = arith.constant 0 : index
      %c0_185 = arith.constant 0 : index
      %337 = vector.load %arg4[%c0_184, %c0_185] : memref<8x128xf32, #tpu.memory_space<vmem>>, vector<8x128xf32>
      tpu.vector_store %arg4[%c0_184, %c0_185], %336 {strides = array<i32>} : memref<8x128xf32, #tpu.memory_space<vmem>>, vector<8x128xf32>,
    } else {
    }
    return
  }
  func.func @transform_0(%arg0: i32) -> (i32, i32, i32) {
    %c0_i32 = arith.constant 0 : i32
    %c0_i32_0 = arith.constant 0 : i32
    %c0_i32_1 = arith.constant 0 : i32
    return %arg0, %c0_i32, %c0_i32_0 : i32, i32, i32
  }
  func.func @transform_1(%arg0: i32) -> (i32, i32) {
    %c0_i32 = arith.constant 0 : i32
    %c0_i32_0 = arith.constant 0 : i32
    %c0_i32_1 = arith.constant 0 : i32
    return %c0_i32, %c0_i32_0 : i32, i32
  }
  func.func @transform_2(%arg0: i32) -> (i32, i32) {
    %c0_i32 = arith.constant 0 : i32
    %c0_i32_0 = arith.constant 0 : i32
    %c0_i32_1 = arith.constant 0 : i32
    return %c0_i32, %c0_i32_0 : i32, i32
  }
  func.func @transform_3(%arg0: i32) -> (i32, i32) {
    %c0_i32 = arith.constant 0 : i32
    %c0_i32_0 = arith.constant 0 : i32
    %c0_i32_1 = arith.constant 0 : i32
    return %c0_i32, %c0_i32_0 : i32, i32
  }
}

</mosaic_0001>

<llo_original>
// kernel: tpu_custom_call.1
$region0: #{tpu_custom_call.1}
  #allocation0 [shape = 'u32[]', space=smem, size = 0x4, offset = 0x4, fixed_abs, tag = 'smem constant byte address 0x4 - core index']
  #allocation1 [shape = 'u32[144,128]{1,0:T(1,128)}', space=vmem, size = 0x12000, scoped, tag = 'internal scratch']
  #allocation2 [shape = 'f32[8,128]{1,0:T(8,128)}', space=vmem, size = 0x1000, scoped, tag = 'scratch operand']
  #allocation3 [shape = 'f32[8,128]{1,0:T(8,128)}', space=vmem, size = 0x1000, scoped, tag = 'scratch operand']
  %s0 = inlined_call_operand.hbm [shape: f32[8,8,512], index: 0, kind: input, shape index: {}]
  %s1 = inlined_call_operand.hbm [shape: f32[128,512], index: 1, kind: input, shape index: {}]
  %s2 = inlined_call_operand.hbm [shape: f32[8,128], index: 2, kind: output, shape index: {0}]
  %s3 = inlined_call_operand.hbm [shape: f32[8,128], index: 3, kind: output, shape index: {1}]
  %4 = xla_tuple %s2, %s3
  %s5 = sld [smem:[#allocation0]]
  $region42: #{tpu_custom_call.1} parent=0
    _
  %s7 = ssub.s32 1, %s5
  %s8 = scalar_select 0, %s7, %s5
  $region1: #{tpu_custom_call.1} parent=0
    #allocation4 [shape = 'u8[131072]{0}', space=vmem, size = 0x20000, scoped, tag = 'input window, operand 0, single buffered']
    #allocation5 [shape = 's32[1]{0}', space=sflag, size = 0x4, scoped, tag = 'scoped memory for tpu_custom_call.1']
    #allocation6 [shape = 's32[1]{0}', space=sflag, size = 0x4, scoped, tag = 'scoped memory for tpu_custom_call.1']
    #allocation7 [shape = 'u8[262144]{0}', space=vmem, size = 0x40000, scoped, tag = 'input window, operand 1, single buffered']
    #allocation8 [shape = 's32[1]{0}', space=sflag, size = 0x4, scoped, tag = 'scoped memory for tpu_custom_call.1']
    #allocation9 [shape = 'u8[4096]{0}', space=vmem, size = 0x1000, scoped, tag = 'output window, operand 0, single buffered']
    #allocation10 [shape = 'u8[4096]{0}', space=vmem, size = 0x1000, scoped, tag = 'output window, operand 1, single buffered']
    #allocation11 [shape = 's32[1]{0}', space=sflag, size = 0x4, scoped, tag = 'scoped memory for tpu_custom_call.1']
    %9 = vsyncpa [#allocation5], 0
    %10 = vsyncpa [#allocation8], 0
    %11 = vsyncpa [#allocation6], 0
    %12 = vsyncpa [#allocation11], 0
    // Predicated region
    $region2: #{tpu_custom_call.1} parent=1 // pred_check
      _
    $region3: #{tpu_custom_call.1} parent=1 // pred_check_branch
      %14 = sbr.rel (0) target = $region5
    $region4: #{tpu_custom_call.1} parent=1 // pred_region
      %s16 = ssub.s32 4096, 4096
      %17 = vsyncadd [#allocation5], %s16
      %s18 = sshll.u32 [#allocation4], 4
      %s19 = int_to_ptr.vmem [resolvable:$true] %s18
      %24 = dma.hbm_to_vmem [thread:$0]  %s0, 4096, %s19, [#allocation5], 512, 512, 32
    $region5: #{tpu_custom_call.1} parent=1 // pred_fallthru
      _
    // Predicated region
    $region6: #{tpu_custom_call.1} parent=1 // pred_check
      _
    $region7: #{tpu_custom_call.1} parent=1 // pred_check_branch
      %26 = sbr.rel (0) target = $region9
    $region8: #{tpu_custom_call.1} parent=1 // pred_region
      %s28 = ssub.s32 8192, 8192
      %29 = vsyncadd [#allocation8], %s28
      %s30 = sshll.u32 [#allocation7], 4
      %s31 = int_to_ptr.vmem [resolvable:$true] %s30
      %36 = dma.hbm_to_vmem [thread:$0]  %s1, 8192, %s31, [#allocation8], 512, 512, 32
    $region9: #{tpu_custom_call.1} parent=1 // pred_fallthru
      _
    // Predicated region
    $region10: #{tpu_custom_call.1} parent=1 // pred_check
      _
    $region11: #{tpu_custom_call.1} parent=1 // pred_check_branch
      %38 = sbr.rel (0) target = $region13
    $region12: #{tpu_custom_call.1} parent=1 // pred_region
      %39 = dma.done [#allocation5], 4096
    $region13: #{tpu_custom_call.1} parent=1 // pred_fallthru
      _
    // Predicated region
    $region14: #{tpu_custom_call.1} parent=1 // pred_check
      _
    $region15: #{tpu_custom_call.1} parent=1 // pred_check_branch
      %41 = sbr.rel (0) target = $region17
    $region16: #{tpu_custom_call.1} parent=1 // pred_region
      %42 = dma.done [#allocation8], 8192
    $region17: #{tpu_custom_call.1} parent=1 // pred_fallthru
      _
    %p43 = scmp.eq.s32.totalorder 0, 0
    // Predicated region
    $region18: #{tpu_custom_call.1} parent=1 // pred_check
      %p44 = pneg %p43
    $region19: #{tpu_custom_call.1} parent=1 // pred_check_branch
      %46 = sbr.rel (%p44) target = $region21
    $region20: #{tpu_custom_call.1} parent=1 // pred_region
      %47 = vst [vmem:[#allocation2] sm:$0xff] 0.0
      %48 = vst [vmem:[#allocation3] sm:$0xff] 0.0
    $region21: #{tpu_custom_call.1} parent=1 // pred_fallthru
      _
    %v49 = vld [vmem:[#allocation4] sm:$0xff]
    %v50 = vld [vmem:[#allocation4 + $0x8] sm:$0xff]
    %v51 = vld [vmem:[#allocation4 + $0x10] sm:$0xff]
    %v52 = vld [vmem:[#allocation4 + $0x18] sm:$0xff]
    %v53 = vld [vmem:[#allocation2] sm:$0xff]
    %v54 = vld [vmem:[#allocation7] sm:$0xff]
    %v55 = vld [vmem:[#allocation7 + $0x8] sm:$0xff]
    %v56 = vld [vmem:[#allocation7 + $0x10] sm:$0xff]
    %v57 = vld [vmem:[#allocation7 + $0x18] sm:$0xff]
    %v58 = vld [vmem:[#allocation7 + $0x20] sm:$0xff]
    %v59 = vld [vmem:[#allocation7 + $0x28] sm:$0xff]
    %v60 = vld [vmem:[#allocation7 + $0x30] sm:$0xff]
    %v61 = vld [vmem:[#allocation7 + $0x38] sm:$0xff]
    %v62 = vld [vmem:[#allocation7 + $0x40] sm:$0xff]
    %v63 = vld [vmem:[#allocation7 + $0x48] sm:$0xff]
    %v64 = vld [vmem:[#allocation7 + $0x50] sm:$0xff]
    %v65 = vld [vmem:[#allocation7 + $0x58] sm:$0xff]
    %v66 = vld [vmem:[#allocation7 + $0x60] sm:$0xff]
    %v67 = vld [vmem:[#allocation7 + $0x68] sm:$0xff]
    %v68 = vld [vmem:[#allocation7 + $0x70] sm:$0xff]
    %v69 = vld [vmem:[#allocation7 + $0x78] sm:$0xff]
    %v70 = vld [vmem:[#allocation7 + $0x80] sm:$0xff]
    %v71 = vld [vmem:[#allocation7 + $0x88] sm:$0xff]
    %v72 = vld [vmem:[#allocation7 + $0x90] sm:$0xff]
    %v73 = vld [vmem:[#allocation7 + $0x98] sm:$0xff]
    %v74 = vld [vmem:[#allocation7 + $0xa0] sm:$0xff]
    %v75 = vld [vmem:[#allocation7 + $0xa8] sm:$0xff]
    %v76 = vld [vmem:[#allocation7 + $0xb0] sm:$0xff]
    %v77 = vld [vmem:[#allocation7 + $0xb8] sm:$0xff]
    %v78 = vld [vmem:[#allocation7 + $0xc0] sm:$0xff]
    %v79 = vld [vmem:[#allocation7 + $0xc8] sm:$0xff]
    %v80 = vld [vmem:[#allocation7 + $0xd0] sm:$0xff]
    %v81 = vld [vmem:[#allocation7 + $0xd8] sm:$0xff]
    %v82 = vld [vmem:[#allocation7 + $0xe0] sm:$0xff]
    %v83 = vld [vmem:[#allocation7 + $0xe8] sm:$0xff]
    %v84 = vld [vmem:[#allocation7 + $0xf0] sm:$0xff]
    %v85 = vld [vmem:[#allocation7 + $0xf8] sm:$0xff]
    %v86 = vld [vmem:[#allocation7 + $0x100] sm:$0xff]
    %v87 = vld [vmem:[#allocation7 + $0x108] sm:$0xff]
    %v88 = vld [vmem:[#allocation7 + $0x110] sm:$0xff]
    %v89 = vld [vmem:[#allocation7 + $0x118] sm:$0xff]
    %v90 = vld [vmem:[#allocation7 + $0x120] sm:$0xff]
    %v91 = vld [vmem:[#allocation7 + $0x128] sm:$0xff]
    %v92 = vld [vmem:[#allocation7 + $0x130] sm:$0xff]
    %v93 = vld [vmem:[#allocation7 + $0x138] sm:$0xff]
    %v94 = vld [vmem:[#allocation7 + $0x140] sm:$0xff]
    %v95 = vld [vmem:[#allocation7 + $0x148] sm:$0xff]
    %v96 = vld [vmem:[#allocation7 + $0x150] sm:$0xff]
    %v97 = vld [vmem:[#allocation7 + $0x158] sm:$0xff]
    %v98 = vld [vmem:[#allocation7 + $0x160] sm:$0xff]
    %v99 = vld [vmem:[#allocation7 + $0x168] sm:$0xff]
    %v100 = vld [vmem:[#allocation7 + $0x170] sm:$0xff]
    %v101 = vld [vmem:[#allocation7 + $0x178] sm:$0xff]
    %v102 = vld [vmem:[#allocation7 + $0x180] sm:$0xff]
    %v103 = vld [vmem:[#allocation7 + $0x188] sm:$0xff]
    %v104 = vld [vmem:[#allocation7 + $0x190] sm:$0xff]
    %v105 = vld [vmem:[#allocation7 + $0x198] sm:$0xff]
    %v106 = vld [vmem:[#allocation7 + $0x1a0] sm:$0xff]
    %v107 = vld [vmem:[#allocation7 + $0x1a8] sm:$0xff]
    %v108 = vld [vmem:[#allocation7 + $0x1b0] sm:$0xff]
    %v109 = vld [vmem:[#allocation7 + $0x1b8] sm:$0xff]
    %v110 = vld [vmem:[#allocation7 + $0x1c0] sm:$0xff]
    %v111 = vld [vmem:[#allocation7 + $0x1c8] sm:$0xff]
    %v112 = vld [vmem:[#allocation7 + $0x1d0] sm:$0xff]
    %v113 = vld [vmem:[#allocation7 + $0x1d8] sm:$0xff]
    %v114 = vld [vmem:[#allocation7 + $0x1e0] sm:$0xff]
    %v115 = vld [vmem:[#allocation7 + $0x1e8] sm:$0xff]
    %v116 = vld [vmem:[#allocation7 + $0x1f0] sm:$0xff]
    %v117 = vld [vmem:[#allocation7 + $0x1f8] sm:$0xff]
    %118 = vmatprep.subr.mxu0 %v115
    %119 = vmatpush1.msra.mxu0 %v114
    %120 = vmatprep.subr.mxu0 %v111
    %121 = vmatpush1.msra.mxu0 %v110
    %122 = vmatprep.subr.mxu0 %v107
    %123 = vmatpush1.msra.mxu0 %v106
    %124 = vmatprep.subr.mxu0 %v103
    %125 = vmatpush1.msra.mxu0 %v102
    %126 = vmatprep.subr.mxu0 %v99
    %127 = vmatpush1.msra.mxu0 %v98
    %128 = vmatprep.subr.mxu0 %v95
    %129 = vmatpush1.msra.mxu0 %v94
    %130 = vmatprep.subr.mxu0 %v91
    %131 = vmatpush1.msra.mxu0 %v90
    %132 = vmatprep.subr.mxu0 %v87
    %133 = vmatpush1.msra.mxu0 %v86
    %134 = vmatprep.subr.mxu0 %v83
    %135 = vmatpush1.msra.mxu0 %v82
    %136 = vmatprep.subr.mxu0 %v79
    %137 = vmatpush1.msra.mxu0 %v78
    %138 = vmatprep.subr.mxu0 %v75
    %139 = vmatpush1.msra.mxu0 %v74
    %140 = vmatprep.subr.mxu0 %v71
    %141 = vmatpush1.msra.mxu0 %v70
    %142 = vmatprep.subr.mxu0 %v67
    %143 = vmatpush1.msra.mxu0 %v66
    %144 = vmatprep.subr.mxu0 %v63
    %145 = vmatpush1.msra.mxu0 %v62
    %146 = vmatprep.subr.mxu0 %v59
    %147 = vmatpush1.msra.mxu0 %v58
    %148 = vmatprep.subr.mxu0 %v55
    %149 = vmatpush1.msra.mxu0 %v54
    %150 = vmatprep.subr.mxu0 0.0
    %151 = vmatpush2.msra.mxu0 0.0
    %152 = vmatprep.subr.mxu0 0.0
    %153 = vmatpush2.msra.mxu0 0.0
    %154 = vmatprep.subr.mxu0 0.0
    %155 = vmatpush2.msra.mxu0 0.0
    %156 = vmatprep.subr.mxu0 0.0
    %157 = vmatpush2.msra.mxu0 0.0
    %158 = vmatprep.subr.mxu0 0.0
    %159 = vmatpush2.msra.mxu0 0.0
    %160 = vmatprep.subr.mxu0 0.0
    %161 = vmatpush2.msra.mxu0 0.0
    %162 = vmatprep.subr.mxu0 0.0
    %163 = vmatpush2.msra.mxu0 0.0
    %164 = vmatprep.subr.mxu0 0.0
    %165 = vmatpush2.msra.mxu0 0.0
    %166 = vmatprep.subr.mxu0 0.0
    %167 = vmatpush2.msra.mxu0 0.0
    %168 = vmatprep.subr.mxu0 0.0
    %169 = vmatpush2.msra.mxu0 0.0
    %170 = vmatprep.subr.mxu0 0.0
    %171 = vmatpush2.msra.mxu0 0.0
    %172 = vmatprep.subr.mxu0 0.0
    %173 = vmatpush2.msra.mxu0 0.0
    %174 = vmatprep.subr.mxu0 0.0
    %175 = vmatpush2.msra.mxu0 0.0
    %176 = vmatprep.subr.mxu0 0.0
    %177 = vmatpush2.msra.mxu0 0.0
    %178 = vmatprep.subr.mxu0 0.0
    %179 = vmatpush2.msra.mxu0 0.0
    %180 = vmatprep.subr.mxu0 0.0
    %181 = vmatpush2.msra.mxu0 0.0
    %182 = vmatprep.mubr.f32.mxu0 0.0
    %183 = vmatmul.mubr.f32.gmra.mxu0 %v53
    %v184 = vpop.f32.mrf.mxu0
    %v185 = vadd.f32 0.0, %v184
    %v186 = vpop.f32.mrf.mxu0
    %v187 = vadd.f32 0.0, %v186
    %188 = vdwg.mxu0
    %189 = vmatprep.subr.mxu0 %v117
    %190 = vmatpush1.msra.mxu0 %v116
    %191 = vmatprep.subr.mxu0 %v113
    %192 = vmatpush1.msra.mxu0 %v112
    %193 = vmatprep.subr.mxu0 %v109
    %194 = vmatpush1.msra.mxu0 %v108
    %195 = vmatprep.subr.mxu0 %v105
    %196 = vmatpush1.msra.mxu0 %v104
    %197 = vmatprep.subr.mxu0 %v101
    %198 = vmatpush1.msra.mxu0 %v100
    %199 = vmatprep.subr.mxu0 %v97
    %200 = vmatpush1.msra.mxu0 %v96
    %201 = vmatprep.subr.mxu0 %v93
    %202 = vmatpush1.msra.mxu0 %v92
    %203 = vmatprep.subr.mxu0 %v89
    %204 = vmatpush1.msra.mxu0 %v88
    %205 = vmatprep.subr.mxu0 %v85
    %206 = vmatpush1.msra.mxu0 %v84
    %207 = vmatprep.subr.mxu0 %v81
    %208 = vmatpush1.msra.mxu0 %v80
    %209 = vmatprep.subr.mxu0 %v77
    %210 = vmatpush1.msra.mxu0 %v76
    %211 = vmatprep.subr.mxu0 %v73
    %212 = vmatpush1.msra.mxu0 %v72
    %213 = vmatprep.subr.mxu0 %v69
    %214 = vmatpush1.msra.mxu0 %v68
    %215 = vmatprep.subr.mxu0 %v65
    %216 = vmatpush1.msra.mxu0 %v64
    %217 = vmatprep.subr.mxu0 %v61
    %218 = vmatpush1.msra.mxu0 %v60
    %219 = vmatprep.subr.mxu0 %v57
    %220 = vmatpush1.msra.mxu0 %v56
    %221 = vmatprep.subr.mxu0 0.0
    %222 = vmatpush2.msra.mxu0 0.0
    %223 = vmatprep.subr.mxu0 0.0
    %224 = vmatpush2.msra.mxu0 0.0
    %225 = vmatprep.subr.mxu0 0.0
    %226 = vmatpush2.msra.mxu0 0.0
    %227 = vmatprep.subr.mxu0 0.0
    %228 = vmatpush2.msra.mxu0 0.0
    %229 = vmatprep.subr.mxu0 0.0
    %230 = vmatpush2.msra.mxu0 0.0
    %231 = vmatprep.subr.mxu0 0.0
    %232 = vmatpush2.msra.mxu0 0.0
    %233 = vmatprep.subr.mxu0 0.0
    %234 = vmatpush2.msra.mxu0 0.0
    %235 = vmatprep.subr.mxu0 0.0
    %236 = vmatpush2.msra.mxu0 0.0
    %237 = vmatprep.subr.mxu0 0.0
    %238 = vmatpush2.msra.mxu0 0.0
    %239 = vmatprep.subr.mxu0 0.0
    %240 = vmatpush2.msra.mxu0 0.0
    %241 = vmatprep.subr.mxu0 0.0
    %242 = vmatpush2.msra.mxu0 0.0
    %243 = vmatprep.subr.mxu0 0.0
    %244 = vmatpush2.msra.mxu0 0.0
    %245 = vmatprep.subr.mxu0 0.0
    %246 = vmatpush2.msra.mxu0 0.0
    %247 = vmatprep.subr.mxu0 0.0
    %248 = vmatpush2.msra.mxu0 0.0
    %249 = vmatprep.subr.mxu0 0.0
    %250 = vmatpush2.msra.mxu0 0.0
    %251 = vmatprep.subr.mxu0 0.0
    %252 = vmatpush2.msra.mxu0 0.0
    %253 = vmatprep.mubr.f32.mxu0 0.0
    %254 = vmatmul.mubr.f32.gmra.mxu0 %v53
    %v255 = vpop.f32.mrf.mxu0
    %v256 = vadd.f32 0.0, %v255
    %v257 = vpop.f32.mrf.mxu0
    %v258 = vadd.f32 0.0, %v257
    %259 = vdwg.mxu0
    %v260 = vadd.f32 %v49, %v185
    %v261 = vadd.f32 %v50, %v187
    %v262 = vadd.f32 %v51, %v256
    %v263 = vadd.f32 %v52, %v258
    %v264 = vmul.f32 %v260, 0.5
    %v265 = vtanh.pop %v264
    %v266 = vadd.f32 %v265, 1.0
    %v267 = vmul.f32 %v266, 0.5
    %v268 = vmul.f32 %v261, 0.5
    %v269 = vtanh.pop %v268
    %v270 = vadd.f32 %v269, 1.0
    %v271 = vmul.f32 %v270, 0.5
    %v272 = vtanh.pop %v262
    %v273 = vmul.f32 %v263, 0.5
    %v274 = vtanh.pop %v273
    %v275 = vadd.f32 %v274, 1.0
    %v276 = vmul.f32 %v275, 0.5
    %v277 = vld [vmem:[#allocation3] sm:$0xff]
    %v278 = vmul.f32 %v271, %v277
    %v279 = vmul.f32 %v267, %v272
    %v280 = vadd.f32 %v278, %v279
    %281 = vst [vmem:[#allocation3] sm:$0xff] %v280
    %v282 = vtanh.pop %v280
    %v283 = vmul.f32 %v276, %v282
    %284 = vst [vmem:[#allocation2] sm:$0xff] %v283
    %s285 = scalar_lea.vmem [#allocation4], 32
    %v286 = vld [vmem:[%s285] sm:$0xff]
    %v287 = vld [vmem:[%s285 + $0x8] sm:$0xff]
    %v288 = vld [vmem:[%s285 + $0x10] sm:$0xff]
    %v289 = vld [vmem:[%s285 + $0x18] sm:$0xff]
    %v290 = vld [vmem:[#allocation2] sm:$0xff]
    %v291 = vld [vmem:[#allocation7] sm:$0xff]
    %v292 = vld [vmem:[#allocation7 + $0x8] sm:$0xff]
    %v293 = vld [vmem:[#allocation7 + $0x10] sm:$0xff]
    %v294 = vld [vmem:[#allocation7 + $0x18] sm:$0xff]
    %v295 = vld [vmem:[#allocation7 + $0x20] sm:$0xff]
    %v296 = vld [vmem:[#allocation7 + $0x28] sm:$0xff]
    %v297 = vld [vmem:[#allocation7 + $0x30] sm:$0xff]
    %v298 = vld [vmem:[#allocation7 + $0x38] sm:$0xff]
    %v299 = vld [vmem:[#allocation7 + $0x40] sm:$0xff]
    %v300 = vld [vmem:[#allocation7 + $0x48] sm:$0xff]
    %v301 = vld [vmem:[#allocation7 + $0x50] sm:$0xff]
    %v302 = vld [vmem:[#allocation7 + $0x58] sm:$0xff]
    %v303 = vld [vmem:[#allocation7 + $0x60] sm:$0xff]
    %v304 = vld [vmem:[#allocation7 + $0x68] sm:$0xff]
    %v305 = vld [vmem:[#allocation7 + $0x70] sm:$0xff]
    %v306 = vld [vmem:[#allocation7 + $0x78] sm:$0xff]
    %v307 = vld [vmem:[#allocation7 + $0x80] sm:$0xff]
    %v308 = vld [vmem:[#allocation7 + $0x88] sm:$0xff]
    %v309 = vld [vmem:[#allocation7 + $0x90] sm:$0xff]
    %v310 = vld [vmem:[#allocation7 + $0x98] sm:$0xff]
    %v311 = vld [vmem:[#allocation7 + $0xa0] sm:$0xff]
    %v312 = vld [vmem:[#allocation7 + $0xa8] sm:$0xff]
    %v313 = vld [vmem:[#allocation7 + $0xb0] sm:$0xff]
    %v314 = vld [vmem:[#allocation7 + $0xb8] sm:$0xff]
    %v315 = vld [vmem:[#allocation7 + $0xc0] sm:$0xff]
    %v316 = vld [vmem:[#allocation7 + $0xc8] sm:$0xff]
    %v317 = vld [vmem:[#allocation7 + $0xd0] sm:$0xff]
    %v318 = vld [vmem:[#allocation7 + $0xd8] sm:$0xff]
    %v319 = vld [vmem:[#allocation7 + $0xe0] sm:$0xff]
    %v320 = vld [vmem:[#allocation7 + $0xe8] sm:$0xff]
    %v321 = vld [vmem:[#allocation7 + $0xf0] sm:$0xff]
    %v322 = vld [vmem:[#allocation7 + $0xf8] sm:$0xff]
    %v323 = vld [vmem:[#allocation7 + $0x100] sm:$0xff]
    %v324 = vld [vmem:[#allocation7 + $0x108] sm:$0xff]
    %v325 = vld [vmem:[#allocation7 + $0x110] sm:$0xff]
    %v326 = vld [vmem:[#allocation7 + $0x118] sm:$0xff]
    %v327 = vld [vmem:[#allocation7 + $0x120] sm:$0xff]
    %v328 = vld [vmem:[#allocation7 + $0x128] sm:$0xff]
    %v329 = vld [vmem:[#allocation7 + $0x130] sm:$0xff]
    %v330 = vld [vmem:[#allocation7 + $0x138] sm:$0xff]
    %v331 = vld [vmem:[#allocation7 + $0x140] sm:$0xff]
    %v332 = vld [vmem:[#allocation7 + $0x148] sm:$0xff]
    %v333 = vld [vmem:[#allocation7 + $0x150] sm:$0xff]
    %v334 = vld [vmem:[#allocation7 + $0x158] sm:$0xff]
    %v335 = vld [vmem:[#allocation7 + $0x160] sm:$0xff]
    %v336 = vld [vmem:[#allocation7 + $0x168] sm:$0xff]
    %v337 = vld [vmem:[#allocation7 + $0x170] sm:$0xff]
    %v338 = vld [vmem:[#allocation7 + $0x178] sm:$0xff]
    %v339 = vld [vmem:[#allocation7 + $0x180] sm:$0xff]
    %v340 = vld [vmem:[#allocation7 + $0x188] sm:$0xff]
    %v341 = vld [vmem:[#allocation7 + $0x190] sm:$0xff]
    %v342 = vld [vmem:[#allocation7 + $0x198] sm:$0xff]
    %v343 = vld [vmem:[#allocation7 + $0x1a0] sm:$0xff]
    %v344 = vld [vmem:[#allocation7 + $0x1a8] sm:$0xff]
    %v345 = vld [vmem:[#allocation7 + $0x1b0] sm:$0xff]
    %v346 = vld [vmem:[#allocation7 + $0x1b8] sm:$0xff]
    %v347 = vld [vmem:[#allocation7 + $0x1c0] sm:$0xff]
    %v348 = vld [vmem:[#allocation7 + $0x1c8] sm:$0xff]
    %v349 = vld [vmem:[#allocation7 + $0x1d0] sm:$0xff]
    %v350 = vld [vmem:[#allocation7 + $0x1d8] sm:$0xff]
    %v351 = vld [vmem:[#allocation7 + $0x1e0] sm:$0xff]
    %v352 = vld [vmem:[#allocation7 + $0x1e8] sm:$0xff]
    %v353 = vld [vmem:[#allocation7 + $0x1f0] sm:$0xff]
    %v354 = vld [vmem:[#allocation7 + $0x1f8] sm:$0xff]
    %355 = vmatprep.subr.mxu0 %v352
    %356 = vmatpush1.msra.mxu0 %v351
    %357 = vmatprep.subr.mxu0 %v348
    %358 = vmatpush1.msra.mxu0 %v347
    %359 = vmatprep.subr.mxu0 %v344
    %360 = vmatpush1.msra.mxu0 %v343
    %361 = vmatprep.subr.mxu0 %v340
    %362 = vmatpush1.msra.mxu0 %v339
    %363 = vmatprep.subr.mxu0 %v336
    %364 = vmatpush1.msra.mxu0 %v335
    %365 = vmatprep.subr.mxu0 %v332
    %366 = vmatpush1.msra.mxu0 %v331
    %367 = vmatprep.subr.mxu0 %v328
    %368 = vmatpush1.msra.mxu0 %v327
    %369 = vmatprep.subr.mxu0 %v324
    %370 = vmatpush1.msra.mxu0 %v323
    %371 = vmatprep.subr.mxu0 %v320
    %372 = vmatpush1.msra.mxu0 %v319
    %373 = vmatprep.subr.mxu0 %v316
    %374 = vmatpush1.msra.mxu0 %v315
    %375 = vmatprep.subr.mxu0 %v312
    %376 = vmatpush1.msra.mxu0 %v311
    %377 = vmatprep.subr.mxu0 %v308
    %378 = vmatpush1.msra.mxu0 %v307
    %379 = vmatprep.subr.mxu0 %v304
    %380 = vmatpush1.msra.mxu0 %v303
    %381 = vmatprep.subr.mxu0 %v300
    %382 = vmatpush1.msra.mxu0 %v299
    %383 = vmatprep.subr.mxu0 %v296
    %384 = vmatpush1.msra.mxu0 %v295
    %385 = vmatprep.subr.mxu0 %v292
    %386 = vmatpush1.msra.mxu0 %v291
    %387 = vmatprep.subr.mxu0 0.0
    %388 = vmatpush2.msra.mxu0 0.0
    %389 = vmatprep.subr.mxu0 0.0
    %390 = vmatpush2.msra.mxu0 0.0
    %391 = vmatprep.subr.mxu0 0.0
    %392 = vmatpush2.msra.mxu0 0.0
    %393 = vmatprep.subr.mxu0 0.0
    %394 = vmatpush2.msra.mxu0 0.0
    %395 = vmatprep.subr.mxu0 0.0
    %396 = vmatpush2.msra.mxu0 0.0
    %397 = vmatprep.subr.mxu0 0.0
    %398 = vmatpush2.msra.mxu0 0.0
    %399 = vmatprep.subr.mxu0 0.0
    %400 = vmatpush2.msra.mxu0 0.0
    %401 = vmatprep.subr.mxu0 0.0
    %402 = vmatpush2.msra.mxu0 0.0
    %403 = vmatprep.subr.mxu0 0.0
    %404 = vmatpush2.msra.mxu0 0.0
    %405 = vmatprep.subr.mxu0 0.0
    %406 = vmatpush2.msra.mxu0 0.0
    %407 = vmatprep.subr.mxu0 0.0
    %408 = vmatpush2.msra.mxu0 0.0
    %409 = vmatprep.subr.mxu0 0.0
    %410 = vmatpush2.msra.mxu0 0.0
    %411 = vmatprep.subr.mxu0 0.0
    %412 = vmatpush2.msra.mxu0 0.0
    %413 = vmatprep.subr.mxu0 0.0
    %414 = vmatpush2.msra.mxu0 0.0
    %415 = vmatprep.subr.mxu0 0.0
    %416 = vmatpush2.msra.mxu0 0.0
    %417 = vmatprep.subr.mxu0 0.0
    %418 = vmatpush2.msra.mxu0 0.0
    %419 = vmatprep.mubr.f32.mxu0 0.0
    %420 = vmatmul.mubr.f32.gmra.mxu0 %v290
    %v421 = vpop.f32.mrf.mxu0
    %v422 = vadd.f32 0.0, %v421
    %v423 = vpop.f32.mrf.mxu0
    %v424 = vadd.f32 0.0, %v423
    %425 = vdwg.mxu0
    %426 = vmatprep.subr.mxu0 %v354
    %427 = vmatpush1.msra.mxu0 %v353
    %428 = vmatprep.subr.mxu0 %v350
    %429 = vmatpush1.msra.mxu0 %v349
    %430 = vmatprep.subr.mxu0 %v346
    %431 = vmatpush1.msra.mxu0 %v345
    %432 = vmatprep.subr.mxu0 %v342
    %433 = vmatpush1.msra.mxu0 %v341
    %434 = vmatprep.subr.mxu0 %v338
    %435 = vmatpush1.msra.mxu0 %v337
    %436 = vmatprep.subr.mxu0 %v334
    %437 = vmatpush1.msra.mxu0 %v333
    %438 = vmatprep.subr.mxu0 %v330
    %439 = vmatpush1.msra.mxu0 %v329
    %440 = vmatprep.subr.mxu0 %v326
    %441 = vmatpush1.msra.mxu0 %v325
    %442 = vmatprep.subr.mxu0 %v322
    %443 = vmatpush1.msra.mxu0 %v321
    %444 = vmatprep.subr.mxu0 %v318
    %445 = vmatpush1.msra.mxu0 %v317
    %446 = vmatprep.subr.mxu0 %v314
    %447 = vmatpush1.msra.mxu0 %v313
    %448 = vmatprep.subr.mxu0 %v310
    %449 = vmatpush1.msra.mxu0 %v309
    %450 = vmatprep.subr.mxu0 %v306
    %451 = vmatpush1.msra.mxu0 %v305
    %452 = vmatprep.subr.mxu0 %v302
    %453 = vmatpush1.msra.mxu0 %v301
    %454 = vmatprep.subr.mxu0 %v298
    %455 = vmatpush1.msra.mxu0 %v297
    %456 = vmatprep.subr.mxu0 %v294
    %457 = vmatpush1.msra.mxu0 %v293
    %458 = vmatprep.subr.mxu0 0.0
    %459 = vmatpush2.msra.mxu0 0.0
    %460 = vmatprep.subr.mxu0 0.0
    %461 = vmatpush2.msra.mxu0 0.0
    %462 = vmatprep.subr.mxu0 0.0
    %463 = vmatpush2.msra.mxu0 0.0
    %464 = vmatprep.subr.mxu0 0.0
    %465 = vmatpush2.msra.mxu0 0.0
    %466 = vmatprep.subr.mxu0 0.0
    %467 = vmatpush2.msra.mxu0 0.0
    %468 = vmatprep.subr.mxu0 0.0
    %469 = vmatpush2.msra.mxu0 0.0
    %470 = vmatprep.subr.mxu0 0.0
    %471 = vmatpush2.msra.mxu0 0.0
    %472 = vmatprep.subr.mxu0 0.0
    %473 = vmatpush2.msra.mxu0 0.0
    %474 = vmatprep.subr.mxu0 0.0
    %475 = vmatpush2.msra.mxu0 0.0
    %476 = vmatprep.subr.mxu0 0.0
    %477 = vmatpush2.msra.mxu0 0.0
    %478 = vmatprep.subr.mxu0 0.0
    %479 = vmatpush2.msra.mxu0 0.0
    %480 = vmatprep.subr.mxu0 0.0
    %481 = vmatpush2.msra.mxu0 0.0
    %482 = vmatprep.subr.mxu0 0.0
    %483 = vmatpush2.msra.mxu0 0.0
    %484 = vmatprep.subr.mxu0 0.0
    %485 = vmatpush2.msra.mxu0 0.0
    %486 = vmatprep.subr.mxu0 0.0
    %487 = vmatpush2.msra.mxu0 0.0
    %488 = vmatprep.subr.mxu0 0.0
    %489 = vmatpush2.msra.mxu0 0.0
    %490 = vmatprep.mubr.f32.mxu0 0.0
    %491 = vmatmul.mubr.f32.gmra.mxu0 %v290
    %v492 = vpop.f32.mrf.mxu0
    %v493 = vadd.f32 0.0, %v492
    %v494 = vpop.f32.mrf.mxu0
    %v495 = vadd.f32 0.0, %v494
    %496 = vdwg.mxu0
    %v497 = vadd.f32 %v286, %v422
    %v498 = vadd.f32 %v287, %v424
    %v499 = vadd.f32 %v288, %v493
    %v500 = vadd.f32 %v289, %v495
    %v501 = vmul.f32 %v497, 0.5
    %v502 = vtanh.pop %v501
    %v503 = vadd.f32 %v502, 1.0
    %v504 = vmul.f32 %v503, 0.5
    %v505 = vmul.f32 %v498, 0.5
    %v506 = vtanh.pop %v505
    %v507 = vadd.f32 %v506, 1.0
    %v508 = vmul.f32 %v507, 0.5
    %v509 = vtanh.pop %v499
    %v510 = vmul.f32 %v500, 0.5
    %v511 = vtanh.pop %v510
    %v512 = vadd.f32 %v511, 1.0
    %v513 = vmul.f32 %v512, 0.5
    %v514 = vld [vmem:[#allocation3] sm:$0xff]
    %v515 = vmul.f32 %v508, %v514
    %v516 = vmul.f32 %v504, %v509
    %v517 = vadd.f32 %v515, %v516
    %518 = vst [vmem:[#allocation3] sm:$0xff] %v517
    %v519 = vtanh.pop %v517
    %v520 = vmul.f32 %v513, %v519
    %521 = vst [vmem:[#allocation2] sm:$0xff] %v520
    %s522 = scalar_lea.vmem [#allocation4], 64
    %v523 = vld [vmem:[%s522] sm:$0xff]
    %v524 = vld [vmem:[%s522 + $0x8] sm:$0xff]
    %v525 = vld [vmem:[%s522 + $0x10] sm:$0xff]
    %v526 = vld [vmem:[%s522 + $0x18] sm:$0xff]
    %v527 = vld [vmem:[#allocation2] sm:$0xff]
    %v528 = vld [vmem:[#allocation7] sm:$0xff]
    %v529 = vld [vmem:[#allocation7 + $0x8] sm:$0xff]
    %v530 = vld [vmem:[#allocation7 + $0x10] sm:$0xff]
    %v531 = vld [vmem:[#allocation7 + $0x18] sm:$0xff]
    %v532 = vld [vmem:[#allocation7 + $0x20] sm:$0xff]
    %v533 = vld [vmem:[#allocation7 + $0x28] sm:$0xff]
    %v534 = vld [vmem:[#allocation7 + $0x30] sm:$0xff]
    %v535 = vld [vmem:[#allocation7 + $0x38] sm:$0xff]
    %v536 = vld [vmem:[#allocation7 + $0x40] sm:$0xff]
    %v537 = vld [vmem:[#allocation7 + $0x48] sm:$0xff]
    %v538 = vld [vmem:[#allocation7 + $0x50] sm:$0xff]
    %v539 = vld [vmem:[#allocation7 + $0x58] sm:$0xff]
    %v540 = vld [vmem:[#allocation7 + $0x60] sm:$0xff]
    %v541 = vld [vmem:[#allocation7 + $0x68] sm:$0xff]
    %v542 = vld [vmem:[#allocation7 + $0x70] sm:$0xff]
    %v543 = vld [vmem:[#allocation7 + $0x78] sm:$0xff]
    %v544 = vld [vmem:[#allocation7 + $0x80] sm:$0xff]
    %v545 = vld [vmem:[#allocation7 + $0x88] sm:$0xff]
    %v546 = vld [vmem:[#allocation7 + $0x90] sm:$0xff]
    %v547 = vld [vmem:[#allocation7 + $0x98] sm:$0xff]
    %v548 = vld [vmem:[#allocation7 + $0xa0] sm:$0xff]
    %v549 = vld [vmem:[#allocation7 + $0xa8] sm:$0xff]
    %v550 = vld [vmem:[#allocation7 + $0xb0] sm:$0xff]
    %v551 = vld [vmem:[#allocation7 + $0xb8] sm:$0xff]
    %v552 = vld [vmem:[#allocation7 + $0xc0] sm:$0xff]
    %v553 = vld [vmem:[#allocation7 + $0xc8] sm:$0xff]
    %v554 = vld [vmem:[#allocation7 + $0xd0] sm:$0xff]
    %v555 = vld [vmem:[#allocation7 + $0xd8] sm:$0xff]
    %v556 = vld [vmem:[#allocation7 + $0xe0] sm:$0xff]
    %v557 = vld [vmem:[#allocation7 + $0xe8] sm:$0xff]
    %v558 = vld [vmem:[#allocation7 + $0xf0] sm:$0xff]
    %v559 = vld [vmem:[#allocation7 + $0xf8] sm:$0xff]
    %v560 = vld [vmem:[#allocation7 + $0x100] sm:$0xff]
    %v561 = vld [vmem:[#allocation7 + $0x108] sm:$0xff]
    %v562 = vld [vmem:[#allocation7 + $0x110] sm:$0xff]
    %v563 = vld [vmem:[#allocation7 + $0x118] sm:$0xff]
    %v564 = vld [vmem:[#allocation7 + $0x120] sm:$0xff]
    %v565 = vld [vmem:[#allocation7 + $0x128] sm:$0xff]
    %v566 = vld [vmem:[#allocation7 + $0x130] sm:$0xff]
    %v567 = vld [vmem:[#allocation7 + $0x138] sm:$0xff]
    %v568 = vld [vmem:[#allocation7 + $0x140] sm:$0xff]
    %v569 = vld [vmem:[#allocation7 + $0x148] sm:$0xff]
    %v570 = vld [vmem:[#allocation7 + $0x150] sm:$0xff]
    %v571 = vld [vmem:[#allocation7 + $0x158] sm:$0xff]
    %v572 = vld [vmem:[#allocation7 + $0x160] sm:$0xff]
    %v573 = vld [vmem:[#allocation7 + $0x168] sm:$0xff]
    %v574 = vld [vmem:[#allocation7 + $0x170] sm:$0xff]
    %v575 = vld [vmem:[#allocation7 + $0x178] sm:$0xff]
    %v576 = vld [vmem:[#allocation7 + $0x180] sm:$0xff]
    %v577 = vld [vmem:[#allocation7 + $0x188] sm:$0xff]
    %v578 = vld [vmem:[#allocation7 + $0x190] sm:$0xff]
    %v579 = vld [vmem:[#allocation7 + $0x198] sm:$0xff]
    %v580 = vld [vmem:[#allocation7 + $0x1a0] sm:$0xff]
    %v581 = vld [vmem:[#allocation7 + $0x1a8] sm:$0xff]
    %v582 = vld [vmem:[#allocation7 + $0x1b0] sm:$0xff]
    %v583 = vld [vmem:[#allocation7 + $0x1b8] sm:$0xff]
    %v584 = vld [vmem:[#allocation7 + $0x1c0] sm:$0xff]
    %v585 = vld [vmem:[#allocation7 + $0x1c8] sm:$0xff]
    %v586 = vld [vmem:[#allocation7 + $0x1d0] sm:$0xff]
    %v587 = vld [vmem:[#allocation7 + $0x1d8] sm:$0xff]
    %v588 = vld [vmem:[#allocation7 + $0x1e0] sm:$0xff]
    %v589 = vld [vmem:[#allocation7 + $0x1e8] sm:$0xff]
    %v590 = vld [vmem:[#allocation7 + $0x1f0] sm:$0xff]
    %v591 = vld [vmem:[#allocation7 + $0x1f8] sm:$0xff]
    %592 = vmatprep.subr.mxu0 %v589
    %593 = vmatpush1.msra.mxu0 %v588
    %594 = vmatprep.subr.mxu0 %v585
    %595 = vmatpush1.msra.mxu0 %v584
    %596 = vmatprep.subr.mxu0 %v581
    %597 = vmatpush1.msra.mxu0 %v580
    %598 = vmatprep.subr.mxu0 %v577
    %599 = vmatpush1.msra.mxu0 %v576
    %600 = vmatprep.subr.mxu0 %v573
    %601 = vmatpush1.msra.mxu0 %v572
    %602 = vmatprep.subr.mxu0 %v569
    %603 = vmatpush1.msra.mxu0 %v568
    %604 = vmatprep.subr.mxu0 %v565
    %605 = vmatpush1.msra.mxu0 %v564
    %606 = vmatprep.subr.mxu0 %v561
    %607 = vmatpush1.msra.mxu0 %v560
    %608 = vmatprep.subr.mxu0 %v557
    %609 = vmatpush1.msra.mxu0 %v556
    %610 = vmatprep.subr.mxu0 %v553
    %611 = vmatpush1.msra.mxu0 %v552
    %612 = vmatprep.subr.mxu0 %v549
    %613 = vmatpush1.msra.mxu0 %v548
    %614 = vmatprep.subr.mxu0 %v545
    %615 = vmatpush1.msra.mxu0 %v544
    %616 = vmatprep.subr.mxu0 %v541
    %617 = vmatpush1.msra.mxu0 %v540
    %618 = vmatprep.subr.mxu0 %v537
    %619 = vmatpush1.msra.mxu0 %v536
    %620 = vmatprep.subr.mxu0 %v533
    %621 = vmatpush1.msra.mxu0 %v532
    %622 = vmatprep.subr.mxu0 %v529
    %623 = vmatpush1.msra.mxu0 %v528
    %624 = vmatprep.subr.mxu0 0.0
    %625 = vmatpush2.msra.mxu0 0.0
    %626 = vmatprep.subr.mxu0 0.0
    %627 = vmatpush2.msra.mxu0 0.0
    %628 = vmatprep.subr.mxu0 0.0
    %629 = vmatpush2.msra.mxu0 0.0
    %630 = vmatprep.subr.mxu0 0.0
    %631 = vmatpush2.msra.mxu0 0.0
    %632 = vmatprep.subr.mxu0 0.0
    %633 = vmatpush2.msra.mxu0 0.0
    %634 = vmatprep.subr.mxu0 0.0
    %635 = vmatpush2.msra.mxu0 0.0
    %636 = vmatprep.subr.mxu0 0.0
    %637 = vmatpush2.msra.mxu0 0.0
    %638 = vmatprep.subr.mxu0 0.0
    %639 = vmatpush2.msra.mxu0 0.0
    %640 = vmatprep.subr.mxu0 0.0
    %641 = vmatpush2.msra.mxu0 0.0
    %642 = vmatprep.subr.mxu0 0.0
    %643 = vmatpush2.msra.mxu0 0.0
    %644 = vmatprep.subr.mxu0 0.0
    %645 = vmatpush2.msra.mxu0 0.0
    %646 = vmatprep.subr.mxu0 0.0
    %647 = vmatpush2.msra.mxu0 0.0
    %648 = vmatprep.subr.mxu0 0.0
    %649 = vmatpush2.msra.mxu0 0.0
    %650 = vmatprep.subr.mxu0 0.0
    %651 = vmatpush2.msra.mxu0 0.0
    %652 = vmatprep.subr.mxu0 0.0
    %653 = vmatpush2.msra.mxu0 0.0
    %654 = vmatprep.subr.mxu0 0.0
    %655 = vmatpush2.msra.mxu0 0.0
    %656 = vmatprep.mubr.f32.mxu0 0.0
    %657 = vmatmul.mubr.f32.gmra.mxu0 %v527
    %v658 = vpop.f32.mrf.mxu0
    %v659 = vadd.f32 0.0, %v658
    %v660 = vpop.f32.mrf.mxu0
    %v661 = vadd.f32 0.0, %v660
    %662 = vdwg.mxu0
    %663 = vmatprep.subr.mxu0 %v591
    %664 = vmatpush1.msra.mxu0 %v590
    %665 = vmatprep.subr.mxu0 %v587
    %666 = vmatpush1.msra.mxu0 %v586
    %667 = vmatprep.subr.mxu0 %v583
    %668 = vmatpush1.msra.mxu0 %v582
    %669 = vmatprep.subr.mxu0 %v579
    %670 = vmatpush1.msra.mxu0 %v578
    %671 = vmatprep.subr.mxu0 %v575
    %672 = vmatpush1.msra.mxu0 %v574
    %673 = vmatprep.subr.mxu0 %v571
    %674 = vmatpush1.msra.mxu0 %v570
    %675 = vmatprep.subr.mxu0 %v567
    %676 = vmatpush1.msra.mxu0 %v566
    %677 = vmatprep.subr.mxu0 %v563
    %678 = vmatpush1.msra.mxu0 %v562
    %679 = vmatprep.subr.mxu0 %v559
    %680 = vmatpush1.msra.mxu0 %v558
    %681 = vmatprep.subr.mxu0 %v555
    %682 = vmatpush1.msra.mxu0 %v554
    %683 = vmatprep.subr.mxu0 %v551
    %684 = vmatpush1.msra.mxu0 %v550
    %685 = vmatprep.subr.mxu0 %v547
    %686 = vmatpush1.msra.mxu0 %v546
    %687 = vmatprep.subr.mxu0 %v543
    %688 = vmatpush1.msra.mxu0 %v542
    %689 = vmatprep.subr.mxu0 %v539
    %690 = vmatpush1.msra.mxu0 %v538
    %691 = vmatprep.subr.mxu0 %v535
    %692 = vmatpush1.msra.mxu0 %v534
    %693 = vmatprep.subr.mxu0 %v531
    %694 = vmatpush1.msra.mxu0 %v530
    %695 = vmatprep.subr.mxu0 0.0
    %696 = vmatpush2.msra.mxu0 0.0
    %697 = vmatprep.subr.mxu0 0.0
    %698 = vmatpush2.msra.mxu0 0.0
    %699 = vmatprep.subr.mxu0 0.0
    %700 = vmatpush2.msra.mxu0 0.0
    %701 = vmatprep.subr.mxu0 0.0
    %702 = vmatpush2.msra.mxu0 0.0
    %703 = vmatprep.subr.mxu0 0.0
    %704 = vmatpush2.msra.mxu0 0.0
    %705 = vmatprep.subr.mxu0 0.0
    %706 = vmatpush2.msra.mxu0 0.0
    %707 = vmatprep.subr.mxu0 0.0
    %708 = vmatpush2.msra.mxu0 0.0
    %709 = vmatprep.subr.mxu0 0.0
    %710 = vmatpush2.msra.mxu0 0.0
    %711 = vmatprep.subr.mxu0 0.0
    %712 = vmatpush2.msra.mxu0 0.0
    %713 = vmatprep.subr.mxu0 0.0
    %714 = vmatpush2.msra.mxu0 0.0
    %715 = vmatprep.subr.mxu0 0.0
    %716 = vmatpush2.msra.mxu0 0.0
    %717 = vmatprep.subr.mxu0 0.0
    %718 = vmatpush2.msra.mxu0 0.0
    %719 = vmatprep.subr.mxu0 0.0
    %720 = vmatpush2.msra.mxu0 0.0
    %721 = vmatprep.subr.mxu0 0.0
    %722 = vmatpush2.msra.mxu0 0.0
    %723 = vmatprep.subr.mxu0 0.0
    %724 = vmatpush2.msra.mxu0 0.0
    %725 = vmatprep.subr.mxu0 0.0
    %726 = vmatpush2.msra.mxu0 0.0
    %727 = vmatprep.mubr.f32.mxu0 0.0
    %728 = vmatmul.mubr.f32.gmra.mxu0 %v527
    %v729 = vpop.f32.mrf.mxu0
    %v730 = vadd.f32 0.0, %v729
    %v731 = vpop.f32.mrf.mxu0
    %v732 = vadd.f32 0.0, %v731
    %733 = vdwg.mxu0
    %v734 = vadd.f32 %v523, %v659
    %v735 = vadd.f32 %v524, %v661
    %v736 = vadd.f32 %v525, %v730
    %v737 = vadd.f32 %v526, %v732
    %v738 = vmul.f32 %v734, 0.5
    %v739 = vtanh.pop %v738
    %v740 = vadd.f32 %v739, 1.0
    %v741 = vmul.f32 %v740, 0.5
    %v742 = vmul.f32 %v735, 0.5
    %v743 = vtanh.pop %v742
    %v744 = vadd.f32 %v743, 1.0
    %v745 = vmul.f32 %v744, 0.5
    %v746 = vtanh.pop %v736
    %v747 = vmul.f32 %v737, 0.5
    %v748 = vtanh.pop %v747
    %v749 = vadd.f32 %v748, 1.0
    %v750 = vmul.f32 %v749, 0.5
    %v751 = vld [vmem:[#allocation3] sm:$0xff]
    %v752 = vmul.f32 %v745, %v751
    %v753 = vmul.f32 %v741, %v746
    %v754 = vadd.f32 %v752, %v753
    %755 = vst [vmem:[#allocation3] sm:$0xff] %v754
    %v756 = vtanh.pop %v754
    %v757 = vmul.f32 %v750, %v756
    %758 = vst [vmem:[#allocation2] sm:$0xff] %v757
    %s759 = scalar_lea.vmem [#allocation4], 96
    %v760 = vld [vmem:[%s759] sm:$0xff]
    %v761 = vld [vmem:[%s759 + $0x8] sm:$0xff]
    %v762 = vld [vmem:[%s759 + $0x10] sm:$0xff]
    %v763 = vld [vmem:[%s759 + $0x18] sm:$0xff]
    %v764 = vld [vmem:[#allocation2] sm:$0xff]
    %v765 = vld [vmem:[#allocation7] sm:$0xff]
    %v766 = vld [vmem:[#allocation7 + $0x8] sm:$0xff]
    %v767 = vld [vmem:[#allocation7 + $0x10] sm:$0xff]
    %v768 = vld [vmem:[#allocation7 + $0x18] sm:$0xff]
    %v769 = vld [vmem:[#allocation7 + $0x20] sm:$0xff]
    %v770 = vld [vmem:[#allocation7 + $0x28] sm:$0xff]
    %v771 = vld [vmem:[#allocation7 + $0x30] sm:$0xff]
    %v772 = vld [vmem:[#allocation7 + $0x38] sm:$0xff]
    %v773 = vld [vmem:[#allocation7 + $0x40] sm:$0xff]
    %v774 = vld [vmem:[#allocation7 + $0x48] sm:$0xff]
    %v775 = vld [vmem:[#allocation7 + $0x50] sm:$0xff]
    %v776 = vld [vmem:[#allocation7 + $0x58] sm:$0xff]
    %v777 = vld [vmem:[#allocation7 + $0x60] sm:$0xff]
    %v778 = vld [vmem:[#allocation7 + $0x68] sm:$0xff]
    %v779 = vld [vmem:[#allocation7 + $0x70] sm:$0xff]
    %v780 = vld [vmem:[#allocation7 + $0x78] sm:$0xff]
    %v781 = vld [vmem:[#allocation7 + $0x80] sm:$0xff]
    %v782 = vld [vmem:[#allocation7 + $0x88] sm:$0xff]
    %v783 = vld [vmem:[#allocation7 + $0x90] sm:$0xff]
    %v784 = vld [vmem:[#allocation7 + $0x98] sm:$0xff]
    %v785 = vld [vmem:[#allocation7 + $0xa0] sm:$0xff]
    %v786 = vld [vmem:[#allocation7 + $0xa8] sm:$0xff]
    %v787 = vld [vmem:[#allocation7 + $0xb0] sm:$0xff]
    %v788 = vld [vmem:[#allocation7 + $0xb8] sm:$0xff]
    %v789 = vld [vmem:[#allocation7 + $0xc0] sm:$0xff]
    %v790 = vld [vmem:[#allocation7 + $0xc8] sm:$0xff]
    %v791 = vld [vmem:[#allocation7 + $0xd0] sm:$0xff]
    %v792 = vld [vmem:[#allocation7 + $0xd8] sm:$0xff]
    %v793 = vld [vmem:[#allocation7 + $0xe0] sm:$0xff]
    %v794 = vld [vmem:[#allocation7 + $0xe8] sm:$0xff]
    %v795 = vld [vmem:[#allocation7 + $0xf0] sm:$0xff]
    %v796 = vld [vmem:[#allocation7 + $0xf8] sm:$0xff]
    %v797 = vld [vmem:[#allocation7 + $0x100] sm:$0xff]
    %v798 = vld [vmem:[#allocation7 + $0x108] sm:$0xff]
    %v799 = vld [vmem:[#allocation7 + $0x110] sm:$0xff]
    %v800 = vld [vmem:[#allocation7 + $0x118] sm:$0xff]
    %v801 = vld [vmem:[#allocation7 + $0x120] sm:$0xff]
    %v802 = vld [vmem:[#allocation7 + $0x128] sm:$0xff]
    %v803 = vld [vmem:[#allocation7 + $0x130] sm:$0xff]
    %v804 = vld [vmem:[#allocation7 + $0x138] sm:$0xff]
    %v805 = vld [vmem:[#allocation7 + $0x140] sm:$0xff]
    %v806 = vld [vmem:[#allocation7 + $0x148] sm:$0xff]
    %v807 = vld [vmem:[#allocation7 + $0x150] sm:$0xff]
    %v808 = vld [vmem:[#allocation7 + $0x158] sm:$0xff]
    %v809 = vld [vmem:[#allocation7 + $0x160] sm:$0xff]
    %v810 = vld [vmem:[#allocation7 + $0x168] sm:$0xff]
    %v811 = vld [vmem:[#allocation7 + $0x170] sm:$0xff]
    %v812 = vld [vmem:[#allocation7 + $0x178] sm:$0xff]
    %v813 = vld [vmem:[#allocation7 + $0x180] sm:$0xff]
    %v814 = vld [vmem:[#allocation7 + $0x188] sm:$0xff]
    %v815 = vld [vmem:[#allocation7 + $0x190] sm:$0xff]
    %v816 = vld [vmem:[#allocation7 + $0x198] sm:$0xff]
    %v817 = vld [vmem:[#allocation7 + $0x1a0] sm:$0xff]
    %v818 = vld [vmem:[#allocation7 + $0x1a8] sm:$0xff]
    %v819 = vld [vmem:[#allocation7 + $0x1b0] sm:$0xff]
    %v820 = vld [vmem:[#allocation7 + $0x1b8] sm:$0xff]
    %v821 = vld [vmem:[#allocation7 + $0x1c0] sm:$0xff]
    %v822 = vld [vmem:[#allocation7 + $0x1c8] sm:$0xff]
    %v823 = vld [vmem:[#allocation7 + $0x1d0] sm:$0xff]
    %v824 = vld [vmem:[#allocation7 + $0x1d8] sm:$0xff]
    %v825 = vld [vmem:[#allocation7 + $0x1e0] sm:$0xff]
    %v826 = vld [vmem:[#allocation7 + $0x1e8] sm:$0xff]
    %v827 = vld [vmem:[#allocation7 + $0x1f0] sm:$0xff]
    %v828 = vld [vmem:[#allocation7 + $0x1f8] sm:$0xff]
    %829 = vmatprep.subr.mxu0 %v826
    %830 = vmatpush1.msra.mxu0 %v825
    %831 = vmatprep.subr.mxu0 %v822
    %832 = vmatpush1.msra.mxu0 %v821
    %833 = vmatprep.subr.mxu0 %v818
    %834 = vmatpush1.msra.mxu0 %v817
    %835 = vmatprep.subr.mxu0 %v814
    %836 = vmatpush1.msra.mxu0 %v813
    %837 = vmatprep.subr.mxu0 %v810
    %838 = vmatpush1.msra.mxu0 %v809
    %839 = vmatprep.subr.mxu0 %v806
    %840 = vmatpush1.msra.mxu0 %v805
    %841 = vmatprep.subr.mxu0 %v802
    %842 = vmatpush1.msra.mxu0 %v801
    %843 = vmatprep.subr.mxu0 %v798
    %844 = vmatpush1.msra.mxu0 %v797
    %845 = vmatprep.subr.mxu0 %v794
    %846 = vmatpush1.msra.mxu0 %v793
    %847 = vmatprep.subr.mxu0 %v790
    %848 = vmatpush1.msra.mxu0 %v789
    %849 = vmatprep.subr.mxu0 %v786
    %850 = vmatpush1.msra.mxu0 %v785
    %851 = vmatprep.subr.mxu0 %v782
    %852 = vmatpush1.msra.mxu0 %v781
    %853 = vmatprep.subr.mxu0 %v778
    %854 = vmatpush1.msra.mxu0 %v777
    %855 = vmatprep.subr.mxu0 %v774
    %856 = vmatpush1.msra.mxu0 %v773
    %857 = vmatprep.subr.mxu0 %v770
    %858 = vmatpush1.msra.mxu0 %v769
    %859 = vmatprep.subr.mxu0 %v766
    %860 = vmatpush1.msra.mxu0 %v765
    %861 = vmatprep.subr.mxu0 0.0
    %862 = vmatpush2.msra.mxu0 0.0
    %863 = vmatprep.subr.mxu0 0.0
    %864 = vmatpush2.msra.mxu0 0.0
    %865 = vmatprep.subr.mxu0 0.0
    %866 = vmatpush2.msra.mxu0 0.0
    %867 = vmatprep.subr.mxu0 0.0
    %868 = vmatpush2.msra.mxu0 0.0
    %869 = vmatprep.subr.mxu0 0.0
    %870 = vmatpush2.msra.mxu0 0.0
    %871 = vmatprep.subr.mxu0 0.0
    %872 = vmatpush2.msra.mxu0 0.0
    %873 = vmatprep.subr.mxu0 0.0
    %874 = vmatpush2.msra.mxu0 0.0
    %875 = vmatprep.subr.mxu0 0.0
    %876 = vmatpush2.msra.mxu0 0.0
    %877 = vmatprep.subr.mxu0 0.0
    %878 = vmatpush2.msra.mxu0 0.0
    %879 = vmatprep.subr.mxu0 0.0
    %880 = vmatpush2.msra.mxu0 0.0
    %881 = vmatprep.subr.mxu0 0.0
    %882 = vmatpush2.msra.mxu0 0.0
    %883 = vmatprep.subr.mxu0 0.0
    %884 = vmatpush2.msra.mxu0 0.0
    %885 = vmatprep.subr.mxu0 0.0
    %886 = vmatpush2.msra.mxu0 0.0
    %887 = vmatprep.subr.mxu0 0.0
    %888 = vmatpush2.msra.mxu0 0.0
    %889 = vmatprep.subr.mxu0 0.0
    %890 = vmatpush2.msra.mxu0 0.0
    %891 = vmatprep.subr.mxu0 0.0
    %892 = vmatpush2.msra.mxu0 0.0
    %893 = vmatprep.mubr.f32.mxu0 0.0
    %894 = vmatmul.mubr.f32.gmra.mxu0 %v764
    %v895 = vpop.f32.mrf.mxu0
    %v896 = vadd.f32 0.0, %v895
    %v897 = vpop.f32.mrf.mxu0
    %v898 = vadd.f32 0.0, %v897
    %899 = vdwg.mxu0
    %900 = vmatprep.subr.mxu0 %v828
    %901 = vmatpush1.msra.mxu0 %v827
    %902 = vmatprep.subr.mxu0 %v824
    %903 = vmatpush1.msra.mxu0 %v823
    %904 = vmatprep.subr.mxu0 %v820
    %905 = vmatpush1.msra.mxu0 %v819
    %906 = vmatprep.subr.mxu0 %v816
    %907 = vmatpush1.msra.mxu0 %v815
    %908 = vmatprep.subr.mxu0 %v812
    %909 = vmatpush1.msra.mxu0 %v811
    %910 = vmatprep.subr.mxu0 %v808
    %911 = vmatpush1.msra.mxu0 %v807
    %912 = vmatprep.subr.mxu0 %v804
    %913 = vmatpush1.msra.mxu0 %v803
    %914 = vmatprep.subr.mxu0 %v800
    %915 = vmatpush1.msra.mxu0 %v799
    %916 = vmatprep.subr.mxu0 %v796
    %917 = vmatpush1.msra.mxu0 %v795
    %918 = vmatprep.subr.mxu0 %v792
    %919 = vmatpush1.msra.mxu0 %v791
    %920 = vmatprep.subr.mxu0 %v788
    %921 = vmatpush1.msra.mxu0 %v787
    %922 = vmatprep.subr.mxu0 %v784
    %923 = vmatpush1.msra.mxu0 %v783
    %924 = vmatprep.subr.mxu0 %v780
    %925 = vmatpush1.msra.mxu0 %v779
    %926 = vmatprep.subr.mxu0 %v776
    %927 = vmatpush1.msra.mxu0 %v775
    %928 = vmatprep.subr.mxu0 %v772
    %929 = vmatpush1.msra.mxu0 %v771
    %930 = vmatprep.subr.mxu0 %v768
    %931 = vmatpush1.msra.mxu0 %v767
    %932 = vmatprep.subr.mxu0 0.0
    %933 = vmatpush2.msra.mxu0 0.0
    %934 = vmatprep.subr.mxu0 0.0
    %935 = vmatpush2.msra.mxu0 0.0
    %936 = vmatprep.subr.mxu0 0.0
    %937 = vmatpush2.msra.mxu0 0.0
    %938 = vmatprep.subr.mxu0 0.0
    %939 = vmatpush2.msra.mxu0 0.0
    %940 = vmatprep.subr.mxu0 0.0
    %941 = vmatpush2.msra.mxu0 0.0
    %942 = vmatprep.subr.mxu0 0.0
    %943 = vmatpush2.msra.mxu0 0.0
    %944 = vmatprep.subr.mxu0 0.0
    %945 = vmatpush2.msra.mxu0 0.0
    %946 = vmatprep.subr.mxu0 0.0
    %947 = vmatpush2.msra.mxu0 0.0
    %948 = vmatprep.subr.mxu0 0.0
    %949 = vmatpush2.msra.mxu0 0.0
    %950 = vmatprep.subr.mxu0 0.0
    %951 = vmatpush2.msra.mxu0 0.0
    %952 = vmatprep.subr.mxu0 0.0
    %953 = vmatpush2.msra.mxu0 0.0
    %954 = vmatprep.subr.mxu0 0.0
    %955 = vmatpush2.msra.mxu0 0.0
    %956 = vmatprep.subr.mxu0 0.0
    %957 = vmatpush2.msra.mxu0 0.0
    %958 = vmatprep.subr.mxu0 0.0
    %959 = vmatpush2.msra.mxu0 0.0
    %960 = vmatprep.subr.mxu0 0.0
    %961 = vmatpush2.msra.mxu0 0.0
    %962 = vmatprep.subr.mxu0 0.0
    %963 = vmatpush2.msra.mxu0 0.0
    %964 = vmatprep.mubr.f32.mxu0 0.0
    %965 = vmatmul.mubr.f32.gmra.mxu0 %v764
    %v966 = vpop.f32.mrf.mxu0
    %v967 = vadd.f32 0.0, %v966
    %v968 = vpop.f32.mrf.mxu0
    %v969 = vadd.f32 0.0, %v968
    %970 = vdwg.mxu0
    %v971 = vadd.f32 %v760, %v896
    %v972 = vadd.f32 %v761, %v898
    %v973 = vadd.f32 %v762, %v967
    %v974 = vadd.f32 %v763, %v969
    %v975 = vmul.f32 %v971, 0.5
    %v976 = vtanh.pop %v975
    %v977 = vadd.f32 %v976, 1.0
    %v978 = vmul.f32 %v977, 0.5
    %v979 = vmul.f32 %v972, 0.5
    %v980 = vtanh.pop %v979
    %v981 = vadd.f32 %v980, 1.0
    %v982 = vmul.f32 %v981, 0.5
    %v983 = vtanh.pop %v973
    %v984 = vmul.f32 %v974, 0.5
    %v985 = vtanh.pop %v984
    %v986 = vadd.f32 %v985, 1.0
    %v987 = vmul.f32 %v986, 0.5
    %v988 = vld [vmem:[#allocation3] sm:$0xff]
    %v989 = vmul.f32 %v982, %v988
    %v990 = vmul.f32 %v978, %v983
    %v991 = vadd.f32 %v989, %v990
    %992 = vst [vmem:[#allocation3] sm:$0xff] %v991
    %v993 = vtanh.pop %v991
    %v994 = vmul.f32 %v987, %v993
    %995 = vst [vmem:[#allocation2] sm:$0xff] %v994
    %s996 = scalar_lea.vmem [#allocation4], 128
    %v997 = vld [vmem:[%s996] sm:$0xff]
    %v998 = vld [vmem:[%s996 + $0x8] sm:$0xff]
    %v999 = vld [vmem:[%s996 + $0x10] sm:$0xff]
    %v1000 = vld [vmem:[%s996 + $0x18] sm:$0xff]
    %v1001 = vld [vmem:[#allocation2] sm:$0xff]
    %v1002 = vld [vmem:[#allocation7] sm:$0xff]
    %v1003 = vld [vmem:[#allocation7 + $0x8] sm:$0xff]
    %v1004 = vld [vmem:[#allocation7 + $0x10] sm:$0xff]
    %v1005 = vld [vmem:[#allocation7 + $0x18] sm:$0xff]
    %v1006 = vld [vmem:[#allocation7 + $0x20] sm:$0xff]
    %v1007 = vld [vmem:[#allocation7 + $0x28] sm:$0xff]
    %v1008 = vld [vmem:[#allocation7 + $0x30] sm:$0xff]
    %v1009 = vld [vmem:[#allocation7 + $0x38] sm:$0xff]
    %v1010 = vld [vmem:[#allocation7 + $0x40] sm:$0xff]
    %v1011 = vld [vmem:[#allocation7 + $0x48] sm:$0xff]
    %v1012 = vld [vmem:[#allocation7 + $0x50] sm:$0xff]
    %v1013 = vld [vmem:[#allocation7 + $0x58] sm:$0xff]
    %v1014 = vld [vmem:[#allocation7 + $0x60] sm:$0xff]
    %v1015 = vld [vmem:[#allocation7 + $0x68] sm:$0xff]
    %v1016 = vld [vmem:[#allocation7 + $0x70] sm:$0xff]
    %v1017 = vld [vmem:[#allocation7 + $0x78] sm:$0xff]
    %v1018 = vld [vmem:[#allocation7 + $0x80] sm:$0xff]
    %v1019 = vld [vmem:[#allocation7 + $0x88] sm:$0xff]
    %v1020 = vld [vmem:[#allocation7 + $0x90] sm:$0xff]
    %v1021 = vld [vmem:[#allocation7 + $0x98] sm:$0xff]
    %v1022 = vld [vmem:[#allocation7 + $0xa0] sm:$0xff]
    %v1023 = vld [vmem:[#allocation7 + $0xa8] sm:$0xff]
    %v1024 = vld [vmem:[#allocation7 + $0xb0] sm:$0xff]
    %v1025 = vld [vmem:[#allocation7 + $0xb8] sm:$0xff]
    %v1026 = vld [vmem:[#allocation7 + $0xc0] sm:$0xff]
    %v1027 = vld [vmem:[#allocation7 + $0xc8] sm:$0xff]
    %v1028 = vld [vmem:[#allocation7 + $0xd0] sm:$0xff]
    %v1029 = vld [vmem:[#allocation7 + $0xd8] sm:$0xff]
    %v1030 = vld [vmem:[#allocation7 + $0xe0] sm:$0xff]
    %v1031 = vld [vmem:[#allocation7 + $0xe8] sm:$0xff]
    %v1032 = vld [vmem:[#allocation7 + $0xf0] sm:$0xff]
    %v1033 = vld [vmem:[#allocation7 + $0xf8] sm:$0xff]
    %v1034 = vld [vmem:[#allocation7 + $0x100] sm:$0xff]
    %v1035 = vld [vmem:[#allocation7 + $0x108] sm:$0xff]
    %v1036 = vld [vmem:[#allocation7 + $0x110] sm:$0xff]
    %v1037 = vld [vmem:[#allocation7 + $0x118] sm:$0xff]
    %v1038 = vld [vmem:[#allocation7 + $0x120] sm:$0xff]
    %v1039 = vld [vmem:[#allocation7 + $0x128] sm:$0xff]
    %v1040 = vld [vmem:[#allocation7 + $0x130] sm:$0xff]
    %v1041 = vld [vmem:[#allocation7 + $0x138] sm:$0xff]
    %v1042 = vld [vmem:[#allocation7 + $0x140] sm:$0xff]
    %v1043 = vld [vmem:[#allocation7 + $0x148] sm:$0xff]
    %v1044 = vld [vmem:[#allocation7 + $0x150] sm:$0xff]
    %v1045 = vld [vmem:[#allocation7 + $0x158] sm:$0xff]
    %v1046 = vld [vmem:[#allocation7 + $0x160] sm:$0xff]
    %v1047 = vld [vmem:[#allocation7 + $0x168] sm:$0xff]
    %v1048 = vld [vmem:[#allocation7 + $0x170] sm:$0xff]
    %v1049 = vld [vmem:[#allocation7 + $0x178] sm:$0xff]
    %v1050 = vld [vmem:[#allocation7 + $0x180] sm:$0xff]
    %v1051 = vld [vmem:[#allocation7 + $0x188] sm:$0xff]
    %v1052 = vld [vmem:[#allocation7 + $0x190] sm:$0xff]
    %v1053 = vld [vmem:[#allocation7 + $0x198] sm:$0xff]
    %v1054 = vld [vmem:[#allocation7 + $0x1a0] sm:$0xff]
    %v1055 = vld [vmem:[#allocation7 + $0x1a8] sm:$0xff]
    %v1056 = vld [vmem:[#allocation7 + $0x1b0] sm:$0xff]
    %v1057 = vld [vmem:[#allocation7 + $0x1b8] sm:$0xff]
    %v1058 = vld [vmem:[#allocation7 + $0x1c0] sm:$0xff]
    %v1059 = vld [vmem:[#allocation7 + $0x1c8] sm:$0xff]
    %v1060 = vld [vmem:[#allocation7 + $0x1d0] sm:$0xff]
    %v1061 = vld [vmem:[#allocation7 + $0x1d8] sm:$0xff]
    %v1062 = vld [vmem:[#allocation7 + $0x1e0] sm:$0xff]
    %v1063 = vld [vmem:[#allocation7 + $0x1e8] sm:$0xff]
    %v1064 = vld [vmem:[#allocation7 + $0x1f0] sm:$0xff]
    %v1065 = vld [vmem:[#allocation7 + $0x1f8] sm:$0xff]
    %1066 = vmatprep.subr.mxu0 %v1063
    %1067 = vmatpush1.msra.mxu0 %v1062
    %1068 = vmatprep.subr.mxu0 %v1059
    %1069 = vmatpush1.msra.mxu0 %v1058
    %1070 = vmatprep.subr.mxu0 %v1055
    %1071 = vmatpush1.msra.mxu0 %v1054
    %1072 = vmatprep.subr.mxu0 %v1051
    %1073 = vmatpush1.msra.mxu0 %v1050
    %1074 = vmatprep.subr.mxu0 %v1047
    %1075 = vmatpush1.msra.mxu0 %v1046
    %1076 = vmatprep.subr.mxu0 %v1043
    %1077 = vmatpush1.msra.mxu0 %v1042
    %1078 = vmatprep.subr.mxu0 %v1039
    %1079 = vmatpush1.msra.mxu0 %v1038
    %1080 = vmatprep.subr.mxu0 %v1035
    %1081 = vmatpush1.msra.mxu0 %v1034
    %1082 = vmatprep.subr.mxu0 %v1031
    %1083 = vmatpush1.msra.mxu0 %v1030
    %1084 = vmatprep.subr.mxu0 %v1027
    %1085 = vmatpush1.msra.mxu0 %v1026
    %1086 = vmatprep.subr.mxu0 %v1023
    %1087 = vmatpush1.msra.mxu0 %v1022
    %1088 = vmatprep.subr.mxu0 %v1019
    %1089 = vmatpush1.msra.mxu0 %v1018
    %1090 = vmatprep.subr.mxu0 %v1015
    %1091 = vmatpush1.msra.mxu0 %v1014
    %1092 = vmatprep.subr.mxu0 %v1011
    %1093 = vmatpush1.msra.mxu0 %v1010
    %1094 = vmatprep.subr.mxu0 %v1007
    %1095 = vmatpush1.msra.mxu0 %v1006
    %1096 = vmatprep.subr.mxu0 %v1003
    %1097 = vmatpush1.msra.mxu0 %v1002
    %1098 = vmatprep.subr.mxu0 0.0
    %1099 = vmatpush2.msra.mxu0 0.0
    %1100 = vmatprep.subr.mxu0 0.0
    %1101 = vmatpush2.msra.mxu0 0.0
    %1102 = vmatprep.subr.mxu0 0.0
    %1103 = vmatpush2.msra.mxu0 0.0
    %1104 = vmatprep.subr.mxu0 0.0
    %1105 = vmatpush2.msra.mxu0 0.0
    %1106 = vmatprep.subr.mxu0 0.0
    %1107 = vmatpush2.msra.mxu0 0.0
    %1108 = vmatprep.subr.mxu0 0.0
    %1109 = vmatpush2.msra.mxu0 0.0
    %1110 = vmatprep.subr.mxu0 0.0
    %1111 = vmatpush2.msra.mxu0 0.0
    %1112 = vmatprep.subr.mxu0 0.0
    %1113 = vmatpush2.msra.mxu0 0.0
    %1114 = vmatprep.subr.mxu0 0.0
    %1115 = vmatpush2.msra.mxu0 0.0
    %1116 = vmatprep.subr.mxu0 0.0
    %1117 = vmatpush2.msra.mxu0 0.0
    %1118 = vmatprep.subr.mxu0 0.0
    %1119 = vmatpush2.msra.mxu0 0.0
    %1120 = vmatprep.subr.mxu0 0.0
    %1121 = vmatpush2.msra.mxu0 0.0
    %1122 = vmatprep.subr.mxu0 0.0
    %1123 = vmatpush2.msra.mxu0 0.0
    %1124 = vmatprep.subr.mxu0 0.0
    %1125 = vmatpush2.msra.mxu0 0.0
    %1126 = vmatprep.subr.mxu0 0.0
    %1127 = vmatpush2.msra.mxu0 0.0
    %1128 = vmatprep.subr.mxu0 0.0
    %1129 = vmatpush2.msra.mxu0 0.0
    %1130 = vmatprep.mubr.f32.mxu0 0.0
    %1131 = vmatmul.mubr.f32.gmra.mxu0 %v1001
    %v1132 = vpop.f32.mrf.mxu0
    %v1133 = vadd.f32 0.0, %v1132
    %v1134 = vpop.f32.mrf.mxu0
    %v1135 = vadd.f32 0.0, %v1134
    %1136 = vdwg.mxu0
    %1137 = vmatprep.subr.mxu0 %v1065
    %1138 = vmatpush1.msra.mxu0 %v1064
    %1139 = vmatprep.subr.mxu0 %v1061
    %1140 = vmatpush1.msra.mxu0 %v1060
    %1141 = vmatprep.subr.mxu0 %v1057
    %1142 = vmatpush1.msra.mxu0 %v1056
    %1143 = vmatprep.subr.mxu0 %v1053
    %1144 = vmatpush1.msra.mxu0 %v1052
    %1145 = vmatprep.subr.mxu0 %v1049
    %1146 = vmatpush1.msra.mxu0 %v1048
    %1147 = vmatprep.subr.mxu0 %v1045
    %1148 = vmatpush1.msra.mxu0 %v1044
    %1149 = vmatprep.subr.mxu0 %v1041
    %1150 = vmatpush1.msra.mxu0 %v1040
    %1151 = vmatprep.subr.mxu0 %v1037
    %1152 = vmatpush1.msra.mxu0 %v1036
    %1153 = vmatprep.subr.mxu0 %v1033
    %1154 = vmatpush1.msra.mxu0 %v1032
    %1155 = vmatprep.subr.mxu0 %v1029
    %1156 = vmatpush1.msra.mxu0 %v1028
    %1157 = vmatprep.subr.mxu0 %v1025
    %1158 = vmatpush1.msra.mxu0 %v1024
    %1159 = vmatprep.subr.mxu0 %v1021
    %1160 = vmatpush1.msra.mxu0 %v1020
    %1161 = vmatprep.subr.mxu0 %v1017
    %1162 = vmatpush1.msra.mxu0 %v1016
    %1163 = vmatprep.subr.mxu0 %v1013
    %1164 = vmatpush1.msra.mxu0 %v1012
    %1165 = vmatprep.subr.mxu0 %v1009
    %1166 = vmatpush1.msra.mxu0 %v1008
    %1167 = vmatprep.subr.mxu0 %v1005
    %1168 = vmatpush1.msra.mxu0 %v1004
    %1169 = vmatprep.subr.mxu0 0.0
    %1170 = vmatpush2.msra.mxu0 0.0
    %1171 = vmatprep.subr.mxu0 0.0
    %1172 = vmatpush2.msra.mxu0 0.0
    %1173 = vmatprep.subr.mxu0 0.0
    %1174 = vmatpush2.msra.mxu0 0.0
    %1175 = vmatprep.subr.mxu0 0.0
    %1176 = vmatpush2.msra.mxu0 0.0
    %1177 = vmatprep.subr.mxu0 0.0
    %1178 = vmatpush2.msra.mxu0 0.0
    %1179 = vmatprep.subr.mxu0 0.0
    %1180 = vmatpush2.msra.mxu0 0.0
    %1181 = vmatprep.subr.mxu0 0.0
    %1182 = vmatpush2.msra.mxu0 0.0
    %1183 = vmatprep.subr.mxu0 0.0
    %1184 = vmatpush2.msra.mxu0 0.0
    %1185 = vmatprep.subr.mxu0 0.0
    %1186 = vmatpush2.msra.mxu0 0.0
    %1187 = vmatprep.subr.mxu0 0.0
    %1188 = vmatpush2.msra.mxu0 0.0
    %1189 = vmatprep.subr.mxu0 0.0
    %1190 = vmatpush2.msra.mxu0 0.0
    %1191 = vmatprep.subr.mxu0 0.0
    %1192 = vmatpush2.msra.mxu0 0.0
    %1193 = vmatprep.subr.mxu0 0.0
    %1194 = vmatpush2.msra.mxu0 0.0
    %1195 = vmatprep.subr.mxu0 0.0
    %1196 = vmatpush2.msra.mxu0 0.0
    %1197 = vmatprep.subr.mxu0 0.0
    %1198 = vmatpush2.msra.mxu0 0.0
    %1199 = vmatprep.subr.mxu0 0.0
    %1200 = vmatpush2.msra.mxu0 0.0
    %1201 = vmatprep.mubr.f32.mxu0 0.0
    %1202 = vmatmul.mubr.f32.gmra.mxu0 %v1001
    %v1203 = vpop.f32.mrf.mxu0
    %v1204 = vadd.f32 0.0, %v1203
    %v1205 = vpop.f32.mrf.mxu0
    %v1206 = vadd.f32 0.0, %v1205
    %1207 = vdwg.mxu0
    %v1208 = vadd.f32 %v997, %v1133
    %v1209 = vadd.f32 %v998, %v1135
    %v1210 = vadd.f32 %v999, %v1204
    %v1211 = vadd.f32 %v1000, %v1206
    %v1212 = vmul.f32 %v1208, 0.5
    %v1213 = vtanh.pop %v1212
    %v1214 = vadd.f32 %v1213, 1.0
    %v1215 = vmul.f32 %v1214, 0.5
    %v1216 = vmul.f32 %v1209, 0.5
    %v1217 = vtanh.pop %v1216
    %v1218 = vadd.f32 %v1217, 1.0
    %v1219 = vmul.f32 %v1218, 0.5
    %v1220 = vtanh.pop %v1210
    %v1221 = vmul.f32 %v1211, 0.5
    %v1222 = vtanh.pop %v1221
    %v1223 = vadd.f32 %v1222, 1.0
    %v1224 = vmul.f32 %v1223, 0.5
    %v1225 = vld [vmem:[#allocation3] sm:$0xff]
    %v1226 = vmul.f32 %v1219, %v1225
    %v1227 = vmul.f32 %v1215, %v1220
    %v1228 = vadd.f32 %v1226, %v1227
    %1229 = vst [vmem:[#allocation3] sm:$0xff] %v1228
    %v1230 = vtanh.pop %v1228
    %v1231 = vmul.f32 %v1224, %v1230
    %1232 = vst [vmem:[#allocation2] sm:$0xff] %v1231
    %s1233 = scalar_lea.vmem [#allocation4], 160
    %v1234 = vld [vmem:[%s1233] sm:$0xff]
    %v1235 = vld [vmem:[%s1233 + $0x8] sm:$0xff]
    %v1236 = vld [vmem:[%s1233 + $0x10] sm:$0xff]
    %v1237 = vld [vmem:[%s1233 + $0x18] sm:$0xff]
    %v1238 = vld [vmem:[#allocation2] sm:$0xff]
    %v1239 = vld [vmem:[#allocation7] sm:$0xff]
    %v1240 = vld [vmem:[#allocation7 + $0x8] sm:$0xff]
    %v1241 = vld [vmem:[#allocation7 + $0x10] sm:$0xff]
    %v1242 = vld [vmem:[#allocation7 + $0x18] sm:$0xff]
    %v1243 = vld [vmem:[#allocation7 + $0x20] sm:$0xff]
    %v1244 = vld [vmem:[#allocation7 + $0x28] sm:$0xff]
    %v1245 = vld [vmem:[#allocation7 + $0x30] sm:$0xff]
    %v1246 = vld [vmem:[#allocation7 + $0x38] sm:$0xff]
    %v1247 = vld [vmem:[#allocation7 + $0x40] sm:$0xff]
    %v1248 = vld [vmem:[#allocation7 + $0x48] sm:$0xff]
    %v1249 = vld [vmem:[#allocation7 + $0x50] sm:$0xff]
    %v1250 = vld [vmem:[#allocation7 + $0x58] sm:$0xff]
    %v1251 = vld [vmem:[#allocation7 + $0x60] sm:$0xff]
    %v1252 = vld [vmem:[#allocation7 + $0x68] sm:$0xff]
    %v1253 = vld [vmem:[#allocation7 + $0x70] sm:$0xff]
    %v1254 = vld [vmem:[#allocation7 + $0x78] sm:$0xff]
    %v1255 = vld [vmem:[#allocation7 + $0x80] sm:$0xff]
    %v1256 = vld [vmem:[#allocation7 + $0x88] sm:$0xff]
    %v1257 = vld [vmem:[#allocation7 + $0x90] sm:$0xff]
    %v1258 = vld [vmem:[#allocation7 + $0x98] sm:$0xff]
    %v1259 = vld [vmem:[#allocation7 + $0xa0] sm:$0xff]
    %v1260 = vld [vmem:[#allocation7 + $0xa8] sm:$0xff]
    %v1261 = vld [vmem:[#allocation7 + $0xb0] sm:$0xff]
    %v1262 = vld [vmem:[#allocation7 + $0xb8] sm:$0xff]
    %v1263 = vld [vmem:[#allocation7 + $0xc0] sm:$0xff]
    %v1264 = vld [vmem:[#allocation7 + $0xc8] sm:$0xff]
    %v1265 = vld [vmem:[#allocation7 + $0xd0] sm:$0xff]
    %v1266 = vld [vmem:[#allocation7 + $0xd8] sm:$0xff]
    %v1267 = vld [vmem:[#allocation7 + $0xe0] sm:$0xff]
    %v1268 = vld [vmem:[#allocation7 + $0xe8] sm:$0xff]
    %v1269 = vld [vmem:[#allocation7 + $0xf0] sm:$0xff]
    %v1270 = vld [vmem:[#allocation7 + $0xf8] sm:$0xff]
    %v1271 = vld [vmem:[#allocation7 + $0x100] sm:$0xff]
    %v1272 = vld [vmem:[#allocation7 + $0x108] sm:$0xff]
    %v1273 = vld [vmem:[#allocation7 + $0x110] sm:$0xff]
    %v1274 = vld [vmem:[#allocation7 + $0x118] sm:$0xff]
    %v1275 = vld [vmem:[#allocation7 + $0x120] sm:$0xff]
    %v1276 = vld [vmem:[#allocation7 + $0x128] sm:$0xff]
    %v1277 = vld [vmem:[#allocation7 + $0x130] sm:$0xff]
    %v1278 = vld [vmem:[#allocation7 + $0x138] sm:$0xff]
    %v1279 = vld [vmem:[#allocation7 + $0x140] sm:$0xff]
    %v1280 = vld [vmem:[#allocation7 + $0x148] sm:$0xff]
    %v1281 = vld [vmem:[#allocation7 + $0x150] sm:$0xff]
    %v1282 = vld [vmem:[#allocation7 + $0x158] sm:$0xff]
    %v1283 = vld [vmem:[#allocation7 + $0x160] sm:$0xff]
    %v1284 = vld [vmem:[#allocation7 + $0x168] sm:$0xff]
    %v1285 = vld [vmem:[#allocation7 + $0x170] sm:$0xff]
    %v1286 = vld [vmem:[#allocation7 + $0x178] sm:$0xff]
    %v1287 = vld [vmem:[#allocation7 + $0x180] sm:$0xff]
    %v1288 = vld [vmem:[#allocation7 + $0x188] sm:$0xff]
    %v1289 = vld [vmem:[#allocation7 + $0x190] sm:$0xff]
    %v1290 = vld [vmem:[#allocation7 + $0x198] sm:$0xff]
    %v1291 = vld [vmem:[#allocation7 + $0x1a0] sm:$0xff]
    %v1292 = vld [vmem:[#allocation7 + $0x1a8] sm:$0xff]
    %v1293 = vld [vmem:[#allocation7 + $0x1b0] sm:$0xff]
    %v1294 = vld [vmem:[#allocation7 + $0x1b8] sm:$0xff]
    %v1295 = vld [vmem:[#allocation7 + $0x1c0] sm:$0xff]
    %v1296 = vld [vmem:[#allocation7 + $0x1c8] sm:$0xff]
    %v1297 = vld [vmem:[#allocation7 + $0x1d0] sm:$0xff]
    %v1298 = vld [vmem:[#allocation7 + $0x1d8] sm:$0xff]
    %v1299 = vld [vmem:[#allocation7 + $0x1e0] sm:$0xff]
    %v1300 = vld [vmem:[#allocation7 + $0x1e8] sm:$0xff]
    %v1301 = vld [vmem:[#allocation7 + $0x1f0] sm:$0xff]
    %v1302 = vld [vmem:[#allocation7 + $0x1f8] sm:$0xff]
    %1303 = vmatprep.subr.mxu0 %v1300
    %1304 = vmatpush1.msra.mxu0 %v1299
    %1305 = vmatprep.subr.mxu0 %v1296
    %1306 = vmatpush1.msra.mxu0 %v1295
    %1307 = vmatprep.subr.mxu0 %v1292
    %1308 = vmatpush1.msra.mxu0 %v1291
    %1309 = vmatprep.subr.mxu0 %v1288
    %1310 = vmatpush1.msra.mxu0 %v1287
    %1311 = vmatprep.subr.mxu0 %v1284
    %1312 = vmatpush1.msra.mxu0 %v1283
    %1313 = vmatprep.subr.mxu0 %v1280
    %1314 = vmatpush1.msra.mxu0 %v1279
    %1315 = vmatprep.subr.mxu0 %v1276
    %1316 = vmatpush1.msra.mxu0 %v1275
    %1317 = vmatprep.subr.mxu0 %v1272
    %1318 = vmatpush1.msra.mxu0 %v1271
    %1319 = vmatprep.subr.mxu0 %v1268
    %1320 = vmatpush1.msra.mxu0 %v1267
    %1321 = vmatprep.subr.mxu0 %v1264
    %1322 = vmatpush1.msra.mxu0 %v1263
    %1323 = vmatprep.subr.mxu0 %v1260
    %1324 = vmatpush1.msra.mxu0 %v1259
    %1325 = vmatprep.subr.mxu0 %v1256
    %1326 = vmatpush1.msra.mxu0 %v1255
    %1327 = vmatprep.subr.mxu0 %v1252
    %1328 = vmatpush1.msra.mxu0 %v1251
    %1329 = vmatprep.subr.mxu0 %v1248
    %1330 = vmatpush1.msra.mxu0 %v1247
    %1331 = vmatprep.subr.mxu0 %v1244
    %1332 = vmatpush1.msra.mxu0 %v1243
    %1333 = vmatprep.subr.mxu0 %v1240
    %1334 = vmatpush1.msra.mxu0 %v1239
    %1335 = vmatprep.subr.mxu0 0.0
    %1336 = vmatpush2.msra.mxu0 0.0
    %1337 = vmatprep.subr.mxu0 0.0
    %1338 = vmatpush2.msra.mxu0 0.0
    %1339 = vmatprep.subr.mxu0 0.0
    %1340 = vmatpush2.msra.mxu0 0.0
    %1341 = vmatprep.subr.mxu0 0.0
    %1342 = vmatpush2.msra.mxu0 0.0
    %1343 = vmatprep.subr.mxu0 0.0
    %1344 = vmatpush2.msra.mxu0 0.0
    %1345 = vmatprep.subr.mxu0 0.0
    %1346 = vmatpush2.msra.mxu0 0.0
    %1347 = vmatprep.subr.mxu0 0.0
    %1348 = vmatpush2.msra.mxu0 0.0
    %1349 = vmatprep.subr.mxu0 0.0
    %1350 = vmatpush2.msra.mxu0 0.0
    %1351 = vmatprep.subr.mxu0 0.0
    %1352 = vmatpush2.msra.mxu0 0.0
    %1353 = vmatprep.subr.mxu0 0.0
    %1354 = vmatpush2.msra.mxu0 0.0
    %1355 = vmatprep.subr.mxu0 0.0
    %1356 = vmatpush2.msra.mxu0 0.0
    %1357 = vmatprep.subr.mxu0 0.0
    %1358 = vmatpush2.msra.mxu0 0.0
    %1359 = vmatprep.subr.mxu0 0.0
    %1360 = vmatpush2.msra.mxu0 0.0
    %1361 = vmatprep.subr.mxu0 0.0
    %1362 = vmatpush2.msra.mxu0 0.0
    %1363 = vmatprep.subr.mxu0 0.0
    %1364 = vmatpush2.msra.mxu0 0.0
    %1365 = vmatprep.subr.mxu0 0.0
    %1366 = vmatpush2.msra.mxu0 0.0
    %1367 = vmatprep.mubr.f32.mxu0 0.0
    %1368 = vmatmul.mubr.f32.gmra.mxu0 %v1238
    %v1369 = vpop.f32.mrf.mxu0
    %v1370 = vadd.f32 0.0, %v1369
    %v1371 = vpop.f32.mrf.mxu0
    %v1372 = vadd.f32 0.0, %v1371
    %1373 = vdwg.mxu0
    %1374 = vmatprep.subr.mxu0 %v1302
    %1375 = vmatpush1.msra.mxu0 %v1301
    %1376 = vmatprep.subr.mxu0 %v1298
    %1377 = vmatpush1.msra.mxu0 %v1297
    %1378 = vmatprep.subr.mxu0 %v1294
    %1379 = vmatpush1.msra.mxu0 %v1293
    %1380 = vmatprep.subr.mxu0 %v1290
    %1381 = vmatpush1.msra.mxu0 %v1289
    %1382 = vmatprep.subr.mxu0 %v1286
    %1383 = vmatpush1.msra.mxu0 %v1285
    %1384 = vmatprep.subr.mxu0 %v1282
    %1385 = vmatpush1.msra.mxu0 %v1281
    %1386 = vmatprep.subr.mxu0 %v1278
    %1387 = vmatpush1.msra.mxu0 %v1277
    %1388 = vmatprep.subr.mxu0 %v1274
    %1389 = vmatpush1.msra.mxu0 %v1273
    %1390 = vmatprep.subr.mxu0 %v1270
    %1391 = vmatpush1.msra.mxu0 %v1269
    %1392 = vmatprep.subr.mxu0 %v1266
    %1393 = vmatpush1.msra.mxu0 %v1265
    %1394 = vmatprep.subr.mxu0 %v1262
    %1395 = vmatpush1.msra.mxu0 %v1261
    %1396 = vmatprep.subr.mxu0 %v1258
    %1397 = vmatpush1.msra.mxu0 %v1257
    %1398 = vmatprep.subr.mxu0 %v1254
    %1399 = vmatpush1.msra.mxu0 %v1253
    %1400 = vmatprep.subr.mxu0 %v1250
    %1401 = vmatpush1.msra.mxu0 %v1249
    %1402 = vmatprep.subr.mxu0 %v1246
    %1403 = vmatpush1.msra.mxu0 %v1245
    %1404 = vmatprep.subr.mxu0 %v1242
    %1405 = vmatpush1.msra.mxu0 %v1241
    %1406 = vmatprep.subr.mxu0 0.0
    %1407 = vmatpush2.msra.mxu0 0.0
    %1408 = vmatprep.subr.mxu0 0.0
    %1409 = vmatpush2.msra.mxu0 0.0
    %1410 = vmatprep.subr.mxu0 0.0
    %1411 = vmatpush2.msra.mxu0 0.0
    %1412 = vmatprep.subr.mxu0 0.0
    %1413 = vmatpush2.msra.mxu0 0.0
    %1414 = vmatprep.subr.mxu0 0.0
    %1415 = vmatpush2.msra.mxu0 0.0
    %1416 = vmatprep.subr.mxu0 0.0
    %1417 = vmatpush2.msra.mxu0 0.0
    %1418 = vmatprep.subr.mxu0 0.0
    %1419 = vmatpush2.msra.mxu0 0.0
    %1420 = vmatprep.subr.mxu0 0.0
    %1421 = vmatpush2.msra.mxu0 0.0
    %1422 = vmatprep.subr.mxu0 0.0
    %1423 = vmatpush2.msra.mxu0 0.0
    %1424 = vmatprep.subr.mxu0 0.0
    %1425 = vmatpush2.msra.mxu0 0.0
    %1426 = vmatprep.subr.mxu0 0.0
    %1427 = vmatpush2.msra.mxu0 0.0
    %1428 = vmatprep.subr.mxu0 0.0
    %1429 = vmatpush2.msra.mxu0 0.0
    %1430 = vmatprep.subr.mxu0 0.0
    %1431 = vmatpush2.msra.mxu0 0.0
    %1432 = vmatprep.subr.mxu0 0.0
    %1433 = vmatpush2.msra.mxu0 0.0
    %1434 = vmatprep.subr.mxu0 0.0
    %1435 = vmatpush2.msra.mxu0 0.0
    %1436 = vmatprep.subr.mxu0 0.0
    %1437 = vmatpush2.msra.mxu0 0.0
    %1438 = vmatprep.mubr.f32.mxu0 0.0
    %1439 = vmatmul.mubr.f32.gmra.mxu0 %v1238
    %v1440 = vpop.f32.mrf.mxu0
    %v1441 = vadd.f32 0.0, %v1440
    %v1442 = vpop.f32.mrf.mxu0
    %v1443 = vadd.f32 0.0, %v1442
    %1444 = vdwg.mxu0
    %v1445 = vadd.f32 %v1234, %v1370
    %v1446 = vadd.f32 %v1235, %v1372
    %v1447 = vadd.f32 %v1236, %v1441
    %v1448 = vadd.f32 %v1237, %v1443
    %v1449 = vmul.f32 %v1445, 0.5
    %v1450 = vtanh.pop %v1449
    %v1451 = vadd.f32 %v1450, 1.0
    %v1452 = vmul.f32 %v1451, 0.5
    %v1453 = vmul.f32 %v1446, 0.5
    %v1454 = vtanh.pop %v1453
    %v1455 = vadd.f32 %v1454, 1.0
    %v1456 = vmul.f32 %v1455, 0.5
    %v1457 = vtanh.pop %v1447
    %v1458 = vmul.f32 %v1448, 0.5
    %v1459 = vtanh.pop %v1458
    %v1460 = vadd.f32 %v1459, 1.0
    %v1461 = vmul.f32 %v1460, 0.5
    %v1462 = vld [vmem:[#allocation3] sm:$0xff]
    %v1463 = vmul.f32 %v1456, %v1462
    %v1464 = vmul.f32 %v1452, %v1457
    %v1465 = vadd.f32 %v1463, %v1464
    %1466 = vst [vmem:[#allocation3] sm:$0xff] %v1465
    %v1467 = vtanh.pop %v1465
    %v1468 = vmul.f32 %v1461, %v1467
    %1469 = vst [vmem:[#allocation2] sm:$0xff] %v1468
    %s1470 = scalar_lea.vmem [#allocation4], 192
    %v1471 = vld [vmem:[%s1470] sm:$0xff]
    %v1472 = vld [vmem:[%s1470 + $0x8] sm:$0xff]
    %v1473 = vld [vmem:[%s1470 + $0x10] sm:$0xff]
    %v1474 = vld [vmem:[%s1470 + $0x18] sm:$0xff]
    %v1475 = vld [vmem:[#allocation2] sm:$0xff]
    %v1476 = vld [vmem:[#allocation7] sm:$0xff]
    %v1477 = vld [vmem:[#allocation7 + $0x8] sm:$0xff]
    %v1478 = vld [vmem:[#allocation7 + $0x10] sm:$0xff]
    %v1479 = vld [vmem:[#allocation7 + $0x18] sm:$0xff]
    %v1480 = vld [vmem:[#allocation7 + $0x20] sm:$0xff]
    %v1481 = vld [vmem:[#allocation7 + $0x28] sm:$0xff]
    %v1482 = vld [vmem:[#allocation7 + $0x30] sm:$0xff]
    %v1483 = vld [vmem:[#allocation7 + $0x38] sm:$0xff]
    %v1484 = vld [vmem:[#allocation7 + $0x40] sm:$0xff]
    %v1485 = vld [vmem:[#allocation7 + $0x48] sm:$0xff]
    %v1486 = vld [vmem:[#allocation7 + $0x50] sm:$0xff]
    %v1487 = vld [vmem:[#allocation7 + $0x58] sm:$0xff]
    %v1488 = vld [vmem:[#allocation7 + $0x60] sm:$0xff]
    %v1489 = vld [vmem:[#allocation7 + $0x68] sm:$0xff]
    %v1490 = vld [vmem:[#allocation7 + $0x70] sm:$0xff]
    %v1491 = vld [vmem:[#allocation7 + $0x78] sm:$0xff]
    %v1492 = vld [vmem:[#allocation7 + $0x80] sm:$0xff]
    %v1493 = vld [vmem:[#allocation7 + $0x88] sm:$0xff]
    %v1494 = vld [vmem:[#allocation7 + $0x90] sm:$0xff]
    %v1495 = vld [vmem:[#allocation7 + $0x98] sm:$0xff]
    %v1496 = vld [vmem:[#allocation7 + $0xa0] sm:$0xff]
    %v1497 = vld [vmem:[#allocation7 + $0xa8] sm:$0xff]
    %v1498 = vld [vmem:[#allocation7 + $0xb0] sm:$0xff]
    %v1499 = vld [vmem:[#allocation7 + $0xb8] sm:$0xff]
    %v1500 = vld [vmem:[#allocation7 + $0xc0] sm:$0xff]
    %v1501 = vld [vmem:[#allocation7 + $0xc8] sm:$0xff]
    %v1502 = vld [vmem:[#allocation7 + $0xd0] sm:$0xff]
    %v1503 = vld [vmem:[#allocation7 + $0xd8] sm:$0xff]
    %v1504 = vld [vmem:[#allocation7 + $0xe0] sm:$0xff]
    %v1505 = vld [vmem:[#allocation7 + $0xe8] sm:$0xff]
    %v1506 = vld [vmem:[#allocation7 + $0xf0] sm:$0xff]
    %v1507 = vld [vmem:[#allocation7 + $0xf8] sm:$0xff]
    %v1508 = vld [vmem:[#allocation7 + $0x100] sm:$0xff]
    %v1509 = vld [vmem:[#allocation7 + $0x108] sm:$0xff]
    %v1510 = vld [vmem:[#allocation7 + $0x110] sm:$0xff]
    %v1511 = vld [vmem:[#allocation7 + $0x118] sm:$0xff]
    %v1512 = vld [vmem:[#allocation7 + $0x120] sm:$0xff]
    %v1513 = vld [vmem:[#allocation7 + $0x128] sm:$0xff]
    %v1514 = vld [vmem:[#allocation7 + $0x130] sm:$0xff]
    %v1515 = vld [vmem:[#allocation7 + $0x138] sm:$0xff]
    %v1516 = vld [vmem:[#allocation7 + $0x140] sm:$0xff]
    %v1517 = vld [vmem:[#allocation7 + $0x148] sm:$0xff]
    %v1518 = vld [vmem:[#allocation7 + $0x150] sm:$0xff]
    %v1519 = vld [vmem:[#allocation7 + $0x158] sm:$0xff]
    %v1520 = vld [vmem:[#allocation7 + $0x160] sm:$0xff]
    %v1521 = vld [vmem:[#allocation7 + $0x168] sm:$0xff]
    %v1522 = vld [vmem:[#allocation7 + $0x170] sm:$0xff]
    %v1523 = vld [vmem:[#allocation7 + $0x178] sm:$0xff]
    %v1524 = vld [vmem:[#allocation7 + $0x180] sm:$0xff]
    %v1525 = vld [vmem:[#allocation7 + $0x188] sm:$0xff]
    %v1526 = vld [vmem:[#allocation7 + $0x190] sm:$0xff]
    %v1527 = vld [vmem:[#allocation7 + $0x198] sm:$0xff]
    %v1528 = vld [vmem:[#allocation7 + $0x1a0] sm:$0xff]
    %v1529 = vld [vmem:[#allocation7 + $0x1a8] sm:$0xff]
    %v1530 = vld [vmem:[#allocation7 + $0x1b0] sm:$0xff]
    %v1531 = vld [vmem:[#allocation7 + $0x1b8] sm:$0xff]
    %v1532 = vld [vmem:[#allocation7 + $0x1c0] sm:$0xff]
    %v1533 = vld [vmem:[#allocation7 + $0x1c8] sm:$0xff]
    %v1534 = vld [vmem:[#allocation7 + $0x1d0] sm:$0xff]
    %v1535 = vld [vmem:[#allocation7 + $0x1d8] sm:$0xff]
    %v1536 = vld [vmem:[#allocation7 + $0x1e0] sm:$0xff]
    %v1537 = vld [vmem:[#allocation7 + $0x1e8] sm:$0xff]
    %v1538 = vld [vmem:[#allocation7 + $0x1f0] sm:$0xff]
    %v1539 = vld [vmem:[#allocation7 + $0x1f8] sm:$0xff]
    %1540 = vmatprep.subr.mxu0 %v1537
    %1541 = vmatpush1.msra.mxu0 %v1536
    %1542 = vmatprep.subr.mxu0 %v1533
    %1543 = vmatpush1.msra.mxu0 %v1532
    %1544 = vmatprep.subr.mxu0 %v1529
    %1545 = vmatpush1.msra.mxu0 %v1528
    %1546 = vmatprep.subr.mxu0 %v1525
    %1547 = vmatpush1.msra.mxu0 %v1524
    %1548 = vmatprep.subr.mxu0 %v1521
    %1549 = vmatpush1.msra.mxu0 %v1520
    %1550 = vmatprep.subr.mxu0 %v1517
    %1551 = vmatpush1.msra.mxu0 %v1516
    %1552 = vmatprep.subr.mxu0 %v1513
    %1553 = vmatpush1.msra.mxu0 %v1512
    %1554 = vmatprep.subr.mxu0 %v1509
    %1555 = vmatpush1.msra.mxu0 %v1508
    %1556 = vmatprep.subr.mxu0 %v1505
    %1557 = vmatpush1.msra.mxu0 %v1504
    %1558 = vmatprep.subr.mxu0 %v1501
    %1559 = vmatpush1.msra.mxu0 %v1500
    %1560 = vmatprep.subr.mxu0 %v1497
    %1561 = vmatpush1.msra.mxu0 %v1496
    %1562 = vmatprep.subr.mxu0 %v1493
    %1563 = vmatpush1.msra.mxu0 %v1492
    %1564 = vmatprep.subr.mxu0 %v1489
    %1565 = vmatpush1.msra.mxu0 %v1488
    %1566 = vmatprep.subr.mxu0 %v1485
    %1567 = vmatpush1.msra.mxu0 %v1484
    %1568 = vmatprep.subr.mxu0 %v1481
    %1569 = vmatpush1.msra.mxu0 %v1480
    %1570 = vmatprep.subr.mxu0 %v1477
    %1571 = vmatpush1.msra.mxu0 %v1476
    %1572 = vmatprep.subr.mxu0 0.0
    %1573 = vmatpush2.msra.mxu0 0.0
    %1574 = vmatprep.subr.mxu0 0.0
    %1575 = vmatpush2.msra.mxu0 0.0
    %1576 = vmatprep.subr.mxu0 0.0
    %1577 = vmatpush2.msra.mxu0 0.0
    %1578 = vmatprep.subr.mxu0 0.0
    %1579 = vmatpush2.msra.mxu0 0.0
    %1580 = vmatprep.subr.mxu0 0.0
    %1581 = vmatpush2.msra.mxu0 0.0
    %1582 = vmatprep.subr.mxu0 0.0
    %1583 = vmatpush2.msra.mxu0 0.0
    %1584 = vmatprep.subr.mxu0 0.0
    %1585 = vmatpush2.msra.mxu0 0.0
    %1586 = vmatprep.subr.mxu0 0.0
    %1587 = vmatpush2.msra.mxu0 0.0
    %1588 = vmatprep.subr.mxu0 0.0
    %1589 = vmatpush2.msra.mxu0 0.0
    %1590 = vmatprep.subr.mxu0 0.0
    %1591 = vmatpush2.msra.mxu0 0.0
    %1592 = vmatprep.subr.mxu0 0.0
    %1593 = vmatpush2.msra.mxu0 0.0
    %1594 = vmatprep.subr.mxu0 0.0
    %1595 = vmatpush2.msra.mxu0 0.0
    %1596 = vmatprep.subr.mxu0 0.0
    %1597 = vmatpush2.msra.mxu0 0.0
    %1598 = vmatprep.subr.mxu0 0.0
    %1599 = vmatpush2.msra.mxu0 0.0
    %1600 = vmatprep.subr.mxu0 0.0
    %1601 = vmatpush2.msra.mxu0 0.0
    %1602 = vmatprep.subr.mxu0 0.0
    %1603 = vmatpush2.msra.mxu0 0.0
    %1604 = vmatprep.mubr.f32.mxu0 0.0
    %1605 = vmatmul.mubr.f32.gmra.mxu0 %v1475
    %v1606 = vpop.f32.mrf.mxu0
    %v1607 = vadd.f32 0.0, %v1606
    %v1608 = vpop.f32.mrf.mxu0
    %v1609 = vadd.f32 0.0, %v1608
    %1610 = vdwg.mxu0
    %1611 = vmatprep.subr.mxu0 %v1539
    %1612 = vmatpush1.msra.mxu0 %v1538
    %1613 = vmatprep.subr.mxu0 %v1535
    %1614 = vmatpush1.msra.mxu0 %v1534
    %1615 = vmatprep.subr.mxu0 %v1531
    %1616 = vmatpush1.msra.mxu0 %v1530
    %1617 = vmatprep.subr.mxu0 %v1527
    %1618 = vmatpush1.msra.mxu0 %v1526
    %1619 = vmatprep.subr.mxu0 %v1523
    %1620 = vmatpush1.msra.mxu0 %v1522
    %1621 = vmatprep.subr.mxu0 %v1519
    %1622 = vmatpush1.msra.mxu0 %v1518
    %1623 = vmatprep.subr.mxu0 %v1515
    %1624 = vmatpush1.msra.mxu0 %v1514
    %1625 = vmatprep.subr.mxu0 %v1511
    %1626 = vmatpush1.msra.mxu0 %v1510
    %1627 = vmatprep.subr.mxu0 %v1507
    %1628 = vmatpush1.msra.mxu0 %v1506
    %1629 = vmatprep.subr.mxu0 %v1503
    %1630 = vmatpush1.msra.mxu0 %v1502
    %1631 = vmatprep.subr.mxu0 %v1499
    %1632 = vmatpush1.msra.mxu0 %v1498
    %1633 = vmatprep.subr.mxu0 %v1495
    %1634 = vmatpush1.msra.mxu0 %v1494
    %1635 = vmatprep.subr.mxu0 %v1491
    %1636 = vmatpush1.msra.mxu0 %v1490
    %1637 = vmatprep.subr.mxu0 %v1487
    %1638 = vmatpush1.msra.mxu0 %v1486
    %1639 = vmatprep.subr.mxu0 %v1483
    %1640 = vmatpush1.msra.mxu0 %v1482
    %1641 = vmatprep.subr.mxu0 %v1479
    %1642 = vmatpush1.msra.mxu0 %v1478
    %1643 = vmatprep.subr.mxu0 0.0
    %1644 = vmatpush2.msra.mxu0 0.0
    %1645 = vmatprep.subr.mxu0 0.0
    %1646 = vmatpush2.msra.mxu0 0.0
    %1647 = vmatprep.subr.mxu0 0.0
    %1648 = vmatpush2.msra.mxu0 0.0
    %1649 = vmatprep.subr.mxu0 0.0
    %1650 = vmatpush2.msra.mxu0 0.0
    %1651 = vmatprep.subr.mxu0 0.0
    %1652 = vmatpush2.msra.mxu0 0.0
    %1653 = vmatprep.subr.mxu0 0.0
    %1654 = vmatpush2.msra.mxu0 0.0
    %1655 = vmatprep.subr.mxu0 0.0
    %1656 = vmatpush2.msra.mxu0 0.0
    %1657 = vmatprep.subr.mxu0 0.0
    %1658 = vmatpush2.msra.mxu0 0.0
    %1659 = vmatprep.subr.mxu0 0.0
    %1660 = vmatpush2.msra.mxu0 0.0
    %1661 = vmatprep.subr.mxu0 0.0
    %1662 = vmatpush2.msra.mxu0 0.0
    %1663 = vmatprep.subr.mxu0 0.0
    %1664 = vmatpush2.msra.mxu0 0.0
    %1665 = vmatprep.subr.mxu0 0.0
    %1666 = vmatpush2.msra.mxu0 0.0
    %1667 = vmatprep.subr.mxu0 0.0
    %1668 = vmatpush2.msra.mxu0 0.0
    %1669 = vmatprep.subr.mxu0 0.0
    %1670 = vmatpush2.msra.mxu0 0.0
    %1671 = vmatprep.subr.mxu0 0.0
    %1672 = vmatpush2.msra.mxu0 0.0
    %1673 = vmatprep.subr.mxu0 0.0
    %1674 = vmatpush2.msra.mxu0 0.0
    %1675 = vmatprep.mubr.f32.mxu0 0.0
    %1676 = vmatmul.mubr.f32.gmra.mxu0 %v1475
    %v1677 = vpop.f32.mrf.mxu0
    %v1678 = vadd.f32 0.0, %v1677
    %v1679 = vpop.f32.mrf.mxu0
    %v1680 = vadd.f32 0.0, %v1679
    %1681 = vdwg.mxu0
    %v1682 = vadd.f32 %v1471, %v1607
    %v1683 = vadd.f32 %v1472, %v1609
    %v1684 = vadd.f32 %v1473, %v1678
    %v1685 = vadd.f32 %v1474, %v1680
    %v1686 = vmul.f32 %v1682, 0.5
    %v1687 = vtanh.pop %v1686
    %v1688 = vadd.f32 %v1687, 1.0
    %v1689 = vmul.f32 %v1688, 0.5
    %v1690 = vmul.f32 %v1683, 0.5
    %v1691 = vtanh.pop %v1690
    %v1692 = vadd.f32 %v1691, 1.0
    %v1693 = vmul.f32 %v1692, 0.5
    %v1694 = vtanh.pop %v1684
    %v1695 = vmul.f32 %v1685, 0.5
    %v1696 = vtanh.pop %v1695
    %v1697 = vadd.f32 %v1696, 1.0
    %v1698 = vmul.f32 %v1697, 0.5
    %v1699 = vld [vmem:[#allocation3] sm:$0xff]
    %v1700 = vmul.f32 %v1693, %v1699
    %v1701 = vmul.f32 %v1689, %v1694
    %v1702 = vadd.f32 %v1700, %v1701
    %1703 = vst [vmem:[#allocation3] sm:$0xff] %v1702
    %v1704 = vtanh.pop %v1702
    %v1705 = vmul.f32 %v1698, %v1704
    %1706 = vst [vmem:[#allocation2] sm:$0xff] %v1705
    %s1707 = scalar_lea.vmem [#allocation4], 224
    %v1708 = vld [vmem:[%s1707] sm:$0xff]
    %v1709 = vld [vmem:[%s1707 + $0x8] sm:$0xff]
    %v1710 = vld [vmem:[%s1707 + $0x10] sm:$0xff]
    %v1711 = vld [vmem:[%s1707 + $0x18] sm:$0xff]
    %v1712 = vld [vmem:[#allocation2] sm:$0xff]
    %v1713 = vld [vmem:[#allocation7] sm:$0xff]
    %v1714 = vld [vmem:[#allocation7 + $0x8] sm:$0xff]
    %v1715 = vld [vmem:[#allocation7 + $0x10] sm:$0xff]
    %v1716 = vld [vmem:[#allocation7 + $0x18] sm:$0xff]
    %v1717 = vld [vmem:[#allocation7 + $0x20] sm:$0xff]
    %v1718 = vld [vmem:[#allocation7 + $0x28] sm:$0xff]
    %v1719 = vld [vmem:[#allocation7 + $0x30] sm:$0xff]
    %v1720 = vld [vmem:[#allocation7 + $0x38] sm:$0xff]
    %v1721 = vld [vmem:[#allocation7 + $0x40] sm:$0xff]
    %v1722 = vld [vmem:[#allocation7 + $0x48] sm:$0xff]
    %v1723 = vld [vmem:[#allocation7 + $0x50] sm:$0xff]
    %v1724 = vld [vmem:[#allocation7 + $0x58] sm:$0xff]
    %v1725 = vld [vmem:[#allocation7 + $0x60] sm:$0xff]
    %v1726 = vld [vmem:[#allocation7 + $0x68] sm:$0xff]
    %v1727 = vld [vmem:[#allocation7 + $0x70] sm:$0xff]
    %v1728 = vld [vmem:[#allocation7 + $0x78] sm:$0xff]
    %v1729 = vld [vmem:[#allocation7 + $0x80] sm:$0xff]
    %v1730 = vld [vmem:[#allocation7 + $0x88] sm:$0xff]
    %v1731 = vld [vmem:[#allocation7 + $0x90] sm:$0xff]
    %v1732 = vld [vmem:[#allocation7 + $0x98] sm:$0xff]
    %v1733 = vld [vmem:[#allocation7 + $0xa0] sm:$0xff]
    %v1734 = vld [vmem:[#allocation7 + $0xa8] sm:$0xff]
    %v1735 = vld [vmem:[#allocation7 + $0xb0] sm:$0xff]
    %v1736 = vld [vmem:[#allocation7 + $0xb8] sm:$0xff]
    %v1737 = vld [vmem:[#allocation7 + $0xc0] sm:$0xff]
    %v1738 = vld [vmem:[#allocation7 + $0xc8] sm:$0xff]
    %v1739 = vld [vmem:[#allocation7 + $0xd0] sm:$0xff]
    %v1740 = vld [vmem:[#allocation7 + $0xd8] sm:$0xff]
    %v1741 = vld [vmem:[#allocation7 + $0xe0] sm:$0xff]
    %v1742 = vld [vmem:[#allocation7 + $0xe8] sm:$0xff]
    %v1743 = vld [vmem:[#allocation7 + $0xf0] sm:$0xff]
    %v1744 = vld [vmem:[#allocation7 + $0xf8] sm:$0xff]
    %v1745 = vld [vmem:[#allocation7 + $0x100] sm:$0xff]
    %v1746 = vld [vmem:[#allocation7 + $0x108] sm:$0xff]
    %v1747 = vld [vmem:[#allocation7 + $0x110] sm:$0xff]
    %v1748 = vld [vmem:[#allocation7 + $0x118] sm:$0xff]
    %v1749 = vld [vmem:[#allocation7 + $0x120] sm:$0xff]
    %v1750 = vld [vmem:[#allocation7 + $0x128] sm:$0xff]
    %v1751 = vld [vmem:[#allocation7 + $0x130] sm:$0xff]
    %v1752 = vld [vmem:[#allocation7 + $0x138] sm:$0xff]
    %v1753 = vld [vmem:[#allocation7 + $0x140] sm:$0xff]
    %v1754 = vld [vmem:[#allocation7 + $0x148] sm:$0xff]
    %v1755 = vld [vmem:[#allocation7 + $0x150] sm:$0xff]
    %v1756 = vld [vmem:[#allocation7 + $0x158] sm:$0xff]
    %v1757 = vld [vmem:[#allocation7 + $0x160] sm:$0xff]
    %v1758 = vld [vmem:[#allocation7 + $0x168] sm:$0xff]
    %v1759 = vld [vmem:[#allocation7 + $0x170] sm:$0xff]
    %v1760 = vld [vmem:[#allocation7 + $0x178] sm:$0xff]
    %v1761 = vld [vmem:[#allocation7 + $0x180] sm:$0xff]
    %v1762 = vld [vmem:[#allocation7 + $0x188] sm:$0xff]
    %v1763 = vld [vmem:[#allocation7 + $0x190] sm:$0xff]
    %v1764 = vld [vmem:[#allocation7 + $0x198] sm:$0xff]
    %v1765 = vld [vmem:[#allocation7 + $0x1a0] sm:$0xff]
    %v1766 = vld [vmem:[#allocation7 + $0x1a8] sm:$0xff]
    %v1767 = vld [vmem:[#allocation7 + $0x1b0] sm:$0xff]
    %v1768 = vld [vmem:[#allocation7 + $0x1b8] sm:$0xff]
    %v1769 = vld [vmem:[#allocation7 + $0x1c0] sm:$0xff]
    %v1770 = vld [vmem:[#allocation7 + $0x1c8] sm:$0xff]
    %v1771 = vld [vmem:[#allocation7 + $0x1d0] sm:$0xff]
    %v1772 = vld [vmem:[#allocation7 + $0x1d8] sm:$0xff]
    %v1773 = vld [vmem:[#allocation7 + $0x1e0] sm:$0xff]
    %v1774 = vld [vmem:[#allocation7 + $0x1e8] sm:$0xff]
    %v1775 = vld [vmem:[#allocation7 + $0x1f0] sm:$0xff]
    %v1776 = vld [vmem:[#allocation7 + $0x1f8] sm:$0xff]
    %1777 = vmatprep.subr.mxu0 %v1774
    %1778 = vmatpush1.msra.mxu0 %v1773
    %1779 = vmatprep.subr.mxu0 %v1770
    %1780 = vmatpush1.msra.mxu0 %v1769
    %1781 = vmatprep.subr.mxu0 %v1766
    %1782 = vmatpush1.msra.mxu0 %v1765
    %1783 = vmatprep.subr.mxu0 %v1762
    %1784 = vmatpush1.msra.mxu0 %v1761
    %1785 = vmatprep.subr.mxu0 %v1758
    %1786 = vmatpush1.msra.mxu0 %v1757
    %1787 = vmatprep.subr.mxu0 %v1754
    %1788 = vmatpush1.msra.mxu0 %v1753
    %1789 = vmatprep.subr.mxu0 %v1750
    %1790 = vmatpush1.msra.mxu0 %v1749
    %1791 = vmatprep.subr.mxu0 %v1746
    %1792 = vmatpush1.msra.mxu0 %v1745
    %1793 = vmatprep.subr.mxu0 %v1742
    %1794 = vmatpush1.msra.mxu0 %v1741
    %1795 = vmatprep.subr.mxu0 %v1738
    %1796 = vmatpush1.msra.mxu0 %v1737
    %1797 = vmatprep.subr.mxu0 %v1734
    %1798 = vmatpush1.msra.mxu0 %v1733
    %1799 = vmatprep.subr.mxu0 %v1730
    %1800 = vmatpush1.msra.mxu0 %v1729
    %1801 = vmatprep.subr.mxu0 %v1726
    %1802 = vmatpush1.msra.mxu0 %v1725
    %1803 = vmatprep.subr.mxu0 %v1722
    %1804 = vmatpush1.msra.mxu0 %v1721
    %1805 = vmatprep.subr.mxu0 %v1718
    %1806 = vmatpush1.msra.mxu0 %v1717
    %1807 = vmatprep.subr.mxu0 %v1714
    %1808 = vmatpush1.msra.mxu0 %v1713
    %1809 = vmatprep.subr.mxu0 0.0
    %1810 = vmatpush2.msra.mxu0 0.0
    %1811 = vmatprep.subr.mxu0 0.0
    %1812 = vmatpush2.msra.mxu0 0.0
    %1813 = vmatprep.subr.mxu0 0.0
    %1814 = vmatpush2.msra.mxu0 0.0
    %1815 = vmatprep.subr.mxu0 0.0
    %1816 = vmatpush2.msra.mxu0 0.0
    %1817 = vmatprep.subr.mxu0 0.0
    %1818 = vmatpush2.msra.mxu0 0.0
    %1819 = vmatprep.subr.mxu0 0.0
    %1820 = vmatpush2.msra.mxu0 0.0
    %1821 = vmatprep.subr.mxu0 0.0
    %1822 = vmatpush2.msra.mxu0 0.0
    %1823 = vmatprep.subr.mxu0 0.0
    %1824 = vmatpush2.msra.mxu0 0.0
    %1825 = vmatprep.subr.mxu0 0.0
    %1826 = vmatpush2.msra.mxu0 0.0
    %1827 = vmatprep.subr.mxu0 0.0
    %1828 = vmatpush2.msra.mxu0 0.0
    %1829 = vmatprep.subr.mxu0 0.0
    %1830 = vmatpush2.msra.mxu0 0.0
    %1831 = vmatprep.subr.mxu0 0.0
    %1832 = vmatpush2.msra.mxu0 0.0
    %1833 = vmatprep.subr.mxu0 0.0
    %1834 = vmatpush2.msra.mxu0 0.0
    %1835 = vmatprep.subr.mxu0 0.0
    %1836 = vmatpush2.msra.mxu0 0.0
    %1837 = vmatprep.subr.mxu0 0.0
    %1838 = vmatpush2.msra.mxu0 0.0
    %1839 = vmatprep.subr.mxu0 0.0
    %1840 = vmatpush2.msra.mxu0 0.0
    %1841 = vmatprep.mubr.f32.mxu0 0.0
    %1842 = vmatmul.mubr.f32.gmra.mxu0 %v1712
    %v1843 = vpop.f32.mrf.mxu0
    %v1844 = vadd.f32 0.0, %v1843
    %v1845 = vpop.f32.mrf.mxu0
    %v1846 = vadd.f32 0.0, %v1845
    %1847 = vdwg.mxu0
    %1848 = vmatprep.subr.mxu0 %v1776
    %1849 = vmatpush1.msra.mxu0 %v1775
    %1850 = vmatprep.subr.mxu0 %v1772
    %1851 = vmatpush1.msra.mxu0 %v1771
    %1852 = vmatprep.subr.mxu0 %v1768
    %1853 = vmatpush1.msra.mxu0 %v1767
    %1854 = vmatprep.subr.mxu0 %v1764
    %1855 = vmatpush1.msra.mxu0 %v1763
    %1856 = vmatprep.subr.mxu0 %v1760
    %1857 = vmatpush1.msra.mxu0 %v1759
    %1858 = vmatprep.subr.mxu0 %v1756
    %1859 = vmatpush1.msra.mxu0 %v1755
    %1860 = vmatprep.subr.mxu0 %v1752
    %1861 = vmatpush1.msra.mxu0 %v1751
    %1862 = vmatprep.subr.mxu0 %v1748
    %1863 = vmatpush1.msra.mxu0 %v1747
    %1864 = vmatprep.subr.mxu0 %v1744
    %1865 = vmatpush1.msra.mxu0 %v1743
    %1866 = vmatprep.subr.mxu0 %v1740
    %1867 = vmatpush1.msra.mxu0 %v1739
    %1868 = vmatprep.subr.mxu0 %v1736
    %1869 = vmatpush1.msra.mxu0 %v1735
    %1870 = vmatprep.subr.mxu0 %v1732
    %1871 = vmatpush1.msra.mxu0 %v1731
    %1872 = vmatprep.subr.mxu0 %v1728
    %1873 = vmatpush1.msra.mxu0 %v1727
    %1874 = vmatprep.subr.mxu0 %v1724
    %1875 = vmatpush1.msra.mxu0 %v1723
    %1876 = vmatprep.subr.mxu0 %v1720
    %1877 = vmatpush1.msra.mxu0 %v1719
    %1878 = vmatprep.subr.mxu0 %v1716
    %1879 = vmatpush1.msra.mxu0 %v1715
    %1880 = vmatprep.subr.mxu0 0.0
    %1881 = vmatpush2.msra.mxu0 0.0
    %1882 = vmatprep.subr.mxu0 0.0
    %1883 = vmatpush2.msra.mxu0 0.0
    %1884 = vmatprep.subr.mxu0 0.0
    %1885 = vmatpush2.msra.mxu0 0.0
    %1886 = vmatprep.subr.mxu0 0.0
    %1887 = vmatpush2.msra.mxu0 0.0
    %1888 = vmatprep.subr.mxu0 0.0
    %1889 = vmatpush2.msra.mxu0 0.0
    %1890 = vmatprep.subr.mxu0 0.0
    %1891 = vmatpush2.msra.mxu0 0.0
    %1892 = vmatprep.subr.mxu0 0.0
    %1893 = vmatpush2.msra.mxu0 0.0
    %1894 = vmatprep.subr.mxu0 0.0
    %1895 = vmatpush2.msra.mxu0 0.0
    %1896 = vmatprep.subr.mxu0 0.0
    %1897 = vmatpush2.msra.mxu0 0.0
    %1898 = vmatprep.subr.mxu0 0.0
    %1899 = vmatpush2.msra.mxu0 0.0
    %1900 = vmatprep.subr.mxu0 0.0
    %1901 = vmatpush2.msra.mxu0 0.0
    %1902 = vmatprep.subr.mxu0 0.0
    %1903 = vmatpush2.msra.mxu0 0.0
    %1904 = vmatprep.subr.mxu0 0.0
    %1905 = vmatpush2.msra.mxu0 0.0
    %1906 = vmatprep.subr.mxu0 0.0
    %1907 = vmatpush2.msra.mxu0 0.0
    %1908 = vmatprep.subr.mxu0 0.0
    %1909 = vmatpush2.msra.mxu0 0.0
    %1910 = vmatprep.subr.mxu0 0.0
    %1911 = vmatpush2.msra.mxu0 0.0
    %1912 = vmatprep.mubr.f32.mxu0 0.0
    %1913 = vmatmul.mubr.f32.gmra.mxu0 %v1712
    %v1914 = vpop.f32.mrf.mxu0
    %v1915 = vadd.f32 0.0, %v1914
    %v1916 = vpop.f32.mrf.mxu0
    %v1917 = vadd.f32 0.0, %v1916
    %1918 = vdwg.mxu0
    %v1919 = vadd.f32 %v1708, %v1844
    %v1920 = vadd.f32 %v1709, %v1846
    %v1921 = vadd.f32 %v1710, %v1915
    %v1922 = vadd.f32 %v1711, %v1917
    %v1923 = vmul.f32 %v1919, 0.5
    %v1924 = vtanh.pop %v1923
    %v1925 = vadd.f32 %v1924, 1.0
    %v1926 = vmul.f32 %v1925, 0.5
    %v1927 = vmul.f32 %v1920, 0.5
    %v1928 = vtanh.pop %v1927
    %v1929 = vadd.f32 %v1928, 1.0
    %v1930 = vmul.f32 %v1929, 0.5
    %v1931 = vtanh.pop %v1921
    %v1932 = vmul.f32 %v1922, 0.5
    %v1933 = vtanh.pop %v1932
    %v1934 = vadd.f32 %v1933, 1.0
    %v1935 = vmul.f32 %v1934, 0.5
    %v1936 = vld [vmem:[#allocation3] sm:$0xff]
    %v1937 = vmul.f32 %v1930, %v1936
    %v1938 = vmul.f32 %v1926, %v1931
    %v1939 = vadd.f32 %v1937, %v1938
    %1940 = vst [vmem:[#allocation3] sm:$0xff] %v1939
    %v1941 = vtanh.pop %v1939
    %v1942 = vmul.f32 %v1935, %v1941
    %1943 = vst [vmem:[#allocation2] sm:$0xff] %v1942
    // Predicated region
    $region22: #{tpu_custom_call.1} parent=1 // pred_check
      %p1944 = pneg %p43
    $region23: #{tpu_custom_call.1} parent=1 // pred_check_branch
      %1946 = sbr.rel (%p1944) target = $region25
    $region24: #{tpu_custom_call.1} parent=1 // pred_region
      %v1947 = vld [vmem:[#allocation2] sm:$0xff]
      %1948 = vst [vmem:[#allocation9] sm:$0xff] %v1947
      %v1949 = vld [vmem:[#allocation3] sm:$0xff]
      %1950 = vst [vmem:[#allocation10] sm:$0xff] %v1949
    $region25: #{tpu_custom_call.1} parent=1 // pred_fallthru
      _
    // Predicated region
    $region26: #{tpu_custom_call.1} parent=1 // pred_check
      _
    $region27: #{tpu_custom_call.1} parent=1 // pred_check_branch
      %1952 = sbr.rel (0) target = $region29
    $region28: #{tpu_custom_call.1} parent=1 // pred_region
      %s1954 = ssub.s32 128, 128
      %1955 = vsyncadd [#allocation6], %s1954
      %s1957 = sshll.u32 [#allocation9], 4
      %s1958 = int_to_ptr.vmem [resolvable:$true] %s1957
      %1960 = dma.vmem_to_hbm [thread:$0]  %s1958, 128, %s2, [#allocation6]
    $region29: #{tpu_custom_call.1} parent=1 // pred_fallthru
      _
    // Predicated region
    $region30: #{tpu_custom_call.1} parent=1 // pred_check
      _
    $region31: #{tpu_custom_call.1} parent=1 // pred_check_branch
      %1962 = sbr.rel (0) target = $region33
    $region32: #{tpu_custom_call.1} parent=1 // pred_region
      %s1964 = ssub.s32 128, 128
      %1965 = vsyncadd [#allocation11], %s1964
      %s1967 = sshll.u32 [#allocation10], 4
      %s1968 = int_to_ptr.vmem [resolvable:$true] %s1967
      %1970 = dma.vmem_to_hbm [thread:$0]  %s1968, 128, %s3, [#allocation11]
    $region33: #{tpu_custom_call.1} parent=1 // pred_fallthru
      _
    // Predicated region
    $region34: #{tpu_custom_call.1} parent=1 // pred_check
      _
    $region35: #{tpu_custom_call.1} parent=1 // pred_check_branch
      %1972 = sbr.rel (0) target = $region37
    $region36: #{tpu_custom_call.1} parent=1 // pred_region
      %1973 = dma.done [#allocation6], 128
    $region37: #{tpu_custom_call.1} parent=1 // pred_fallthru
      _
    // Predicated region
    $region38: #{tpu_custom_call.1} parent=1 // pred_check
      _
    $region39: #{tpu_custom_call.1} parent=1 // pred_check_branch
      %1975 = sbr.rel (0) target = $region41
    $region40: #{tpu_custom_call.1} parent=1 // pred_region
      %1976 = dma.done [#allocation11], 128
    $region41: #{tpu_custom_call.1} parent=1 // pred_fallthru
      _
    %1977 = vsyncpa [#allocation5], 1
    %1978 = vsyncpa [#allocation8], 1
    %1979 = vsyncpa [#allocation6], 1
    %1980 = vsyncpa [#allocation11], 1

</llo_original>
